<compile_context>
chip_gen: v6e
topology: v6e:2x2x1
jax: 0.10.0
libtpu: 0.0.40
codegen_flags: <defaults>
</compile_context>

<pallas_src>
import jax
import jax.numpy as jnp
from jax import lax
from jax.experimental import pallas as pl
from jax.experimental.pallas import tpu as pltpu


def _round_up(x, m):
    return (x + m - 1) // m * m


# ------------------------------ Pallas kernel ------------------------------ #

def _down_kernel(x4_ref, w1_ref, b1_ref, w2_ref, b2_ref, w3_ref, b3_ref,
                 o_ref, y1p_ref, y2p_ref):
    Ho = y1p_ref.shape[0] - 2
    Wo = y1p_ref.shape[1] - 2
    Cp = y1p_ref.shape[2]
    M = Ho * Wo

    # ---------------- conv1 (3x3, stride 2) + folded BN/bias + ReLU ----------
    # x4[p, i, j, c] = x_padded[2*i + p//2, 2*j + p%2, c]  (parity planes), so the
    # stride-2 tap (dy, dx) is a *plain* (Ho, Wo) window of one parity plane.
    x4 = x4_ref[0]                                   # (4, Hh, Wh, Cin_p) bf16
    acc = jnp.zeros((M, Cp), jnp.float32)
    for dy in range(3):
        for dx in range(3):
            plane = 2 * (dy % 2) + (dx % 2)
            r0, c0 = dy // 2, dx // 2
            tap = x4[plane, r0:r0 + Ho, c0:c0 + Wo, :].reshape(M, -1)
            acc += jnp.dot(tap, w1_ref[3 * dy + dx],
                           preferred_element_type=jnp.float32)
    y1 = jnp.maximum(acc + b1_ref[...], 0.0)         # (M, Cp) f32 — residual, kept f32

    # Stage y1 (bf16) into a zero-padded VMEM slab for the stride-1 convs.
    y1p_ref[...] = jnp.zeros_like(y1p_ref)
    y1p_ref[1:Ho + 1, 1:Wo + 1, :] = y1.reshape(Ho, Wo, Cp).astype(y1p_ref.dtype)

    # ---------------- conv2a (3x3, stride 1) + folded BN/bias + ReLU ---------
    acc = jnp.zeros((M, Cp), jnp.float32)
    for dy in range(3):
        for dx in range(3):
            tap = y1p_ref[dy:dy + Ho, dx:dx + Wo, :].reshape(M, Cp)
            acc += jnp.dot(tap, w2_ref[3 * dy + dx],
                           preferred_element_type=jnp.float32)
    y2 = jnp.maximum(acc + b2_ref[...], 0.0)

    y2p_ref[...] = jnp.zeros_like(y2p_ref)
    y2p_ref[1:Ho + 1, 1:Wo + 1, :] = y2.reshape(Ho, Wo, Cp).astype(y2p_ref.dtype)

    # ---------------- conv2b + folded BN/bias + residual + ReLU --------------
    acc = jnp.zeros((M, Cp), jnp.float32)
    for dy in range(3):
        for dx in range(3):
            tap = y2p_ref[dy:dy + Ho, dx:dx + Wo, :].reshape(M, Cp)
            acc += jnp.dot(tap, w3_ref[3 * dy + dx],
                           preferred_element_type=jnp.float32)
    o_ref[0] = jnp.maximum(acc + b3_ref[...] + y1, 0.0)


# ------------------------------ JAX-side glue ------------------------------ #

def fold_params(cw1, cb1, bn1, cw2, cb2, bn2, cw3, cb3, bn3, eps=1e-5):
    """Fold eval-mode BN (and conv bias) into per-tap weight matrices / bias rows.

    Weights: (Cout, Cin, 3, 3) torch layout -> (9, Cin_pad, Cpad) bf16 (scale folded).
    Bias:    (1, Cpad) f32.
    """
    out_ch, in_ch = cw1.shape[0], cw1.shape[1]
    Cp = _round_up(out_ch, 128)        # lane-dense output / MXU-friendly K for conv2
    Cin_p = _round_up(in_ch, 8)

    def fold(cw, cb, bn, cin_pad):
        gamma, beta, mean, var = bn
        scale = gamma / jnp.sqrt(var + eps)                    # (Cout,)
        bias = beta + (cb - mean) * scale                      # conv bias folded in
        cout, cin = cw.shape[0], cw.shape[1]
        w = jnp.transpose(cw, (2, 3, 1, 0)) * scale            # (3, 3, Cin, Cout) * scale
        w = w.reshape(9, cin, cout)
        w = jnp.pad(w, ((0, 0), (0, cin_pad - cin), (0, Cp - cout)))
        b = jnp.pad(bias, (0, Cp - cout)).reshape(1, Cp)
        return w.astype(jnp.bfloat16), b.astype(jnp.float32)

    w1, b1 = fold(cw1, cb1, bn1, Cin_p)
    w2, b2 = fold(cw2, cb2, bn2, Cp)
    w3, b3 = fold(cw3, cb3, bn3, Cp)
    return dict(w1=w1, b1=b1, w2=w2, b2=b2, w3=w3, b3=b3)


def down_forward(x_nchw, params, out_ch):
    N, Cin, H, W = x_nchw.shape
    assert H % 2 == 0 and W % 2 == 0, "stride-2 down block expects even H, W"
    Cin_p = params["w1"].shape[1]
    Cp = params["w1"].shape[2]
    Ho, Wo = H // 2, W // 2
    Hh, Wh = (H + 2) // 2, (W + 2) // 2
    M = Ho * Wo

    # NHWC, zero-pad spatially (p=1) and channel-pad, then space-to-depth into the
    # 4 stride-2 parity planes (no data duplication, unlike im2col).
    x = jnp.transpose(x_nchw, (0, 2, 3, 1)).astype(jnp.float32)
    x = jnp.pad(x, ((0, 0), (1, 1), (1, 1), (0, Cin_p - Cin)))
    x4 = x.reshape(N, Hh, 2, Wh, 2, Cin_p).transpose(0, 2, 4, 1, 3, 5)
    x4 = x4.reshape(N, 4, Hh, Wh, Cin_p).astype(jnp.bfloat16)

    out_flat = pl.pallas_call(
        _down_kernel,
        out_shape=jax.ShapeDtypeStruct((N, M, Cp), jnp.float32),
        grid_spec=pltpu.PrefetchScalarGridSpec(
            num_scalar_prefetch=0,
            grid=(N,),
            in_specs=[
                pl.BlockSpec((1, 4, Hh, Wh, Cin_p), lambda n: (n, 0, 0, 0, 0)),
                pl.BlockSpec((9, Cin_p, Cp), lambda n: (0, 0, 0)),   # w1 (resident)
                pl.BlockSpec((1, Cp), lambda n: (0, 0)),             # b1
                pl.BlockSpec((9, Cp, Cp), lambda n: (0, 0, 0)),      # w2
                pl.BlockSpec((1, Cp), lambda n: (0, 0)),             # b2
                pl.BlockSpec((9, Cp, Cp), lambda n: (0, 0, 0)),      # w3
                pl.BlockSpec((1, Cp), lambda n: (0, 0)),             # b3
            ],
            out_specs=pl.BlockSpec((1, M, Cp), lambda n: (n, 0, 0)),
            scratch_shapes=[
                pltpu.VMEM((Ho + 2, Wo + 2, Cp), jnp.bfloat16),      # padded y1
                pltpu.VMEM((Ho + 2, Wo + 2, Cp), jnp.bfloat16),      # padded y2
            ],
        ),
        compiler_params=pltpu.CompilerParams(
            dimension_semantics=("parallel",)),
    )(x4, params["w1"], params["b1"], params["w2"], params["b2"],
      params["w3"], params["b3"])

    out = out_flat.reshape(N, Ho, Wo, Cp)[..., :out_ch]
    return jnp.transpose(out, (0, 3, 1, 2))                         # back to NCHW


# ----------------------------- JAX references ------------------------------ #

def _conv_nhwc(x, w_hwio, stride):
    return lax.conv_general_dilated(
        x, w_hwio, (stride, stride), [(1, 1), (1, 1)],
        dimension_numbers=("NHWC", "HWIO", "NHWC"),
        preferred_element_type=jnp.float32)


def down_ref_f32(x_nchw, raw, eps=1e-5):
    """Exact f32 reference (un-folded eval-mode BN)."""
    x = jnp.transpose(x_nchw, (0, 2, 3, 1)).astype(jnp.float32)

    def conv_bn(inp, cw, cb, bn, stride):
        gamma, beta, mean, var = bn
        y = _conv_nhwc(inp, jnp.transpose(cw, (2, 3, 1, 0)), stride) + cb
        return (y - mean) / jnp.sqrt(var + eps) * gamma + beta

    y1 = jax.nn.relu(conv_bn(x, raw["cw1"], raw["cb1"], raw["bn1"], 2))
    y2 = jax.nn.relu(conv_bn(y1, raw["cw2"], raw["cb2"], raw["bn2"], 1))
    y3 = conv_bn(y2, raw["cw3"], raw["cb3"], raw["bn3"], 1)
    return jnp.transpose(jax.nn.relu(y3 + y1), (0, 3, 1, 2))


def down_ref_bf16(x_nchw, raw, eps=1e-5):
    """Reference that mirrors the kernel's bf16 operand quantization (scale folded
    into bf16 weights, bf16 activations into each conv, f32 accumulation) so the
    comparison against the Pallas kernel can be tight."""
    x = jnp.transpose(x_nchw, (0, 2, 3, 1)).astype(jnp.float32)

    def folded(cw, cb, bn):
        gamma, beta, mean, var = bn
        scale = gamma / jnp.sqrt(var + eps)
        w = (jnp.transpose(cw, (2, 3, 1, 0)) * scale).astype(jnp.bfloat16)
        b = beta + (cb - mean) * scale
        return w, b

    def conv(inp_f32, w_bf16, b, stride):
        return _conv_nhwc(inp_f32.astype(jnp.bfloat16), w_bf16, stride) + b

    w1, b1 = folded(raw["cw1"], raw["cb1"], raw["bn1"])
    w2, b2 = folded(raw["cw2"], raw["cb2"], raw["bn2"])
    w3, b3 = folded(raw["cw3"], raw["cb3"], raw["bn3"])
    y1 = jax.nn.relu(conv(x, w1, b1, 2))
    y2 = jax.nn.relu(conv(y1, w2, b2, 1))
    y3 = conv(y2, w3, b3, 1)
    return jnp.transpose(jax.nn.relu(y3 + y1), (0, 3, 1, 2))


# ---------------------------------- main ------------------------------------ #

if __name__ == "__main__":
    key = jax.random.PRNGKey(0)
    N, in_ch, out_ch, H, W = 2, 4, 16, 16, 16

    keys = jax.random.split(key, 10)
    x = jax.random.normal(keys[0], (N, in_ch, H, W), jnp.float32)

    # Conv weights/biases, PyTorch layout (Cout, Cin, 3, 3) — Conv2d bias folded in.
    cw1 = 0.1 * jax.random.normal(keys[1], (out_ch, in_ch, 3, 3), jnp.float32)
    cw2 = 0.1 * jax.random.normal(keys[2], (out_ch, out_ch, 3, 3), jnp.float32)
    cw3 = 0.1 * jax.random.normal(keys[3], (out_ch, out_ch, 3, 3), jnp.float32)
    cb1 = 0.05 * jax.random.normal(keys[4], (out_ch,), jnp.float32)
    cb2 = 0.05 * jax.random.normal(keys[5], (out_ch,), jnp.float32)
    cb3 = 0.05 * jax.random.normal(keys[6], (out_ch,), jnp.float32)

    def bn_params(k):
        k1, k2, k3, k4 = jax.random.split(k, 4)
        gamma = 1.0 + 0.1 * jax.random.normal(k1, (out_ch,), jnp.float32)
        beta = 0.1 * jax.random.normal(k2, (out_ch,), jnp.float32)
        mean = 0.1 * jax.random.normal(k3, (out_ch,), jnp.float32)
        var = jax.random.uniform(k4, (out_ch,), jnp.float32, minval=0.5, maxval=1.5)
        return gamma, beta, mean, var

    bn1, bn2, bn3 = bn_params(keys[7]), bn_params(keys[8]), bn_params(keys[9])

    params = fold_params(cw1, cb1, bn1, cw2, cb2, bn2, cw3, cb3, bn3)
    raw = dict(cw1=cw1, cb1=cb1, bn1=bn1, cw2=cw2, cb2=cb2, bn2=bn2,
               cw3=cw3, cb3=cb3, bn3=bn3)

    fwd = jax.jit(down_forward, static_argnames="out_ch")
    out = jax.block_until_ready(fwd(x, params, out_ch=out_ch))
    assert out.shape == (N, out_ch, H // 2, W // 2), out.shape

    # Tight check vs a reference using the same bf16 operand quantization.
    ref_t = jax.block_until_ready(down_ref_bf16(x, raw))
    err_t = float(jnp.max(jnp.abs(out - ref_t)))
    assert jnp.allclose(out, ref_t, atol=5e-3, rtol=5e-3), err_t

    # Sanity check vs the exact f32 (un-folded BN) reference, bf16-level tolerance.
    ref_f = jax.block_until_ready(down_ref_f32(x, raw))
    err_f = float(jnp.max(jnp.abs(out - ref_f)))
    assert jnp.allclose(out, ref_f, atol=6e-2, rtol=6e-2), err_f

    print("KERNEL_OK")
</pallas_src>

<mosaic_0001>
module attributes {stable_mosaic.version = 11 : i64} {
  func.func @_down_kernel(%arg0: i32, %arg1: memref<1x4x9x9x8xbf16, #tpu.memory_space<vmem>>, %arg2: memref<9x8x128xbf16, #tpu.memory_space<vmem>>, %arg3: memref<1x128xf32, #tpu.memory_space<vmem>>, %arg4: memref<9x128x128xbf16, #tpu.memory_space<vmem>>, %arg5: memref<1x128xf32, #tpu.memory_space<vmem>>, %arg6: memref<9x128x128xbf16, #tpu.memory_space<vmem>>, %arg7: memref<1x128xf32, #tpu.memory_space<vmem>>, %arg8: memref<1x64x128xf32, #tpu.memory_space<vmem>>, %arg9: memref<10x10x128xbf16, #tpu.memory_space<vmem>>, %arg10: memref<10x10x128xbf16, #tpu.memory_space<vmem>>) attributes {dimension_semantics = [#tpu.dimension_semantics<parallel>], iteration_bounds = array<i64: 2>, scalar_prefetch = 0 : i64, scratch_operands = 2 : i64, tpu.core_type = #tpu.core_type<tc>, window_params = [{transform_indices = @transform_0, window_bounds = array<i64: 1, 4, 9, 9, 8>}, {pipeline_mode = #tpu.pipeline_mode<synchronous>, transform_indices = @transform_1, window_bounds = array<i64: 9, 8, 128>}, {pipeline_mode = #tpu.pipeline_mode<synchronous>, transform_indices = @transform_2, window_bounds = array<i64: 1, 128>}, {pipeline_mode = #tpu.pipeline_mode<synchronous>, transform_indices = @transform_3, window_bounds = array<i64: 9, 128, 128>}, {pipeline_mode = #tpu.pipeline_mode<synchronous>, transform_indices = @transform_4, window_bounds = array<i64: 1, 128>}, {pipeline_mode = #tpu.pipeline_mode<synchronous>, transform_indices = @transform_5, window_bounds = array<i64: 9, 128, 128>}, {pipeline_mode = #tpu.pipeline_mode<synchronous>, transform_indices = @transform_6, window_bounds = array<i64: 1, 128>}, {transform_indices = @transform_7, window_bounds = array<i64: 1, 64, 128>}]} {
    %c0 = arith.constant 0 : index
    %c0_0 = arith.constant 0 : index
    %c0_1 = arith.constant 0 : index
    %c0_2 = arith.constant 0 : index
    %c0_3 = arith.constant 0 : index
    %0 = vector.load %arg1[%c0, %c0_0, %c0_1, %c0_2, %c0_3] : memref<1x4x9x9x8xbf16, #tpu.memory_space<vmem>>, vector<1x4x9x9x8xbf16>
    %1 = vector.shape_cast %0 : vector<1x4x9x9x8xbf16> to vector<4x9x9x8xbf16>
    %cst = arith.constant 0.000000e+00 : f32
    %2 = vector.broadcast %cst : f32 to vector<64x128xf32>
    %3 = vector.extract_strided_slice %1 {offsets = [0, 0, 0, 0], sizes = [1, 8, 8, 8], strides = [1, 1, 1, 1]} : vector<4x9x9x8xbf16> to vector<1x8x8x8xbf16>
    %4 = vector.shape_cast %3 : vector<1x8x8x8xbf16> to vector<8x8x8xbf16>
    %5 = vector.shape_cast %4 : vector<8x8x8xbf16> to vector<64x8xbf16>
    %c0_4 = arith.constant 0 : index
    %c0_5 = arith.constant 0 : index
    %c0_6 = arith.constant 0 : index
    %6 = vector.load %arg2[%c0_4, %c0_5, %c0_6] : memref<9x8x128xbf16, #tpu.memory_space<vmem>>, vector<1x8x128xbf16>
    %7 = vector.shape_cast %6 : vector<1x8x128xbf16> to vector<8x128xbf16>
    %cst_7 = arith.constant dense<0.000000e+00> : vector<64x128xf32>
    %8 = tpu.matmul %5, %7, %cst_7 {dimension_numbers = #tpu.dot_dimension_numbers<[1], [0], [0], [1], [0, 0, 1, 1], [], []>} : vector<64x8xbf16>, vector<8x128xbf16>, vector<64x128xf32> -> vector<64x128xf32>
    %9 = arith.addf %2, %8 : vector<64x128xf32>
    %10 = vector.extract_strided_slice %1 {offsets = [1, 0, 0, 0], sizes = [1, 8, 8, 8], strides = [1, 1, 1, 1]} : vector<4x9x9x8xbf16> to vector<1x8x8x8xbf16>
    %11 = vector.shape_cast %10 : vector<1x8x8x8xbf16> to vector<8x8x8xbf16>
    %12 = vector.shape_cast %11 : vector<8x8x8xbf16> to vector<64x8xbf16>
    %c1 = arith.constant 1 : index
    %c0_8 = arith.constant 0 : index
    %c0_9 = arith.constant 0 : index
    %13 = vector.load %arg2[%c1, %c0_8, %c0_9] : memref<9x8x128xbf16, #tpu.memory_space<vmem>>, vector<1x8x128xbf16>
    %14 = vector.shape_cast %13 : vector<1x8x128xbf16> to vector<8x128xbf16>
    %cst_10 = arith.constant dense<0.000000e+00> : vector<64x128xf32>
    %15 = tpu.matmul %12, %14, %cst_10 {dimension_numbers = #tpu.dot_dimension_numbers<[1], [0], [0], [1], [0, 0, 1, 1], [], []>} : vector<64x8xbf16>, vector<8x128xbf16>, vector<64x128xf32> -> vector<64x128xf32>
    %16 = arith.addf %9, %15 : vector<64x128xf32>
    %17 = vector.extract_strided_slice %1 {offsets = [0, 0, 1, 0], sizes = [1, 8, 8, 8], strides = [1, 1, 1, 1]} : vector<4x9x9x8xbf16> to vector<1x8x8x8xbf16>
    %18 = vector.shape_cast %17 : vector<1x8x8x8xbf16> to vector<8x8x8xbf16>
    %19 = vector.shape_cast %18 : vector<8x8x8xbf16> to vector<64x8xbf16>
    %c2 = arith.constant 2 : index
    %c0_11 = arith.constant 0 : index
    %c0_12 = arith.constant 0 : index
    %20 = vector.load %arg2[%c2, %c0_11, %c0_12] : memref<9x8x128xbf16, #tpu.memory_space<vmem>>, vector<1x8x128xbf16>
    %21 = vector.shape_cast %20 : vector<1x8x128xbf16> to vector<8x128xbf16>
    %cst_13 = arith.constant dense<0.000000e+00> : vector<64x128xf32>
    %22 = tpu.matmul %19, %21, %cst_13 {dimension_numbers = #tpu.dot_dimension_numbers<[1], [0], [0], [1], [0, 0, 1, 1], [], []>} : vector<64x8xbf16>, vector<8x128xbf16>, vector<64x128xf32> -> vector<64x128xf32>
    %23 = arith.addf %16, %22 : vector<64x128xf32>
    %24 = vector.extract_strided_slice %1 {offsets = [2, 0, 0, 0], sizes = [1, 8, 8, 8], strides = [1, 1, 1, 1]} : vector<4x9x9x8xbf16> to vector<1x8x8x8xbf16>
    %25 = vector.shape_cast %24 : vector<1x8x8x8xbf16> to vector<8x8x8xbf16>
    %26 = vector.shape_cast %25 : vector<8x8x8xbf16> to vector<64x8xbf16>
    %c3 = arith.constant 3 : index
    %c0_14 = arith.constant 0 : index
    %c0_15 = arith.constant 0 : index
    %27 = vector.load %arg2[%c3, %c0_14, %c0_15] : memref<9x8x128xbf16, #tpu.memory_space<vmem>>, vector<1x8x128xbf16>
    %28 = vector.shape_cast %27 : vector<1x8x128xbf16> to vector<8x128xbf16>
    %cst_16 = arith.constant dense<0.000000e+00> : vector<64x128xf32>
    %29 = tpu.matmul %26, %28, %cst_16 {dimension_numbers = #tpu.dot_dimension_numbers<[1], [0], [0], [1], [0, 0, 1, 1], [], []>} : vector<64x8xbf16>, vector<8x128xbf16>, vector<64x128xf32> -> vector<64x128xf32>
    %30 = arith.addf %23, %29 : vector<64x128xf32>
    %31 = vector.extract_strided_slice %1 {offsets = [3, 0, 0, 0], sizes = [1, 8, 8, 8], strides = [1, 1, 1, 1]} : vector<4x9x9x8xbf16> to vector<1x8x8x8xbf16>
    %32 = vector.shape_cast %31 : vector<1x8x8x8xbf16> to vector<8x8x8xbf16>
    %33 = vector.shape_cast %32 : vector<8x8x8xbf16> to vector<64x8xbf16>
    %c4 = arith.constant 4 : index
    %c0_17 = arith.constant 0 : index
    %c0_18 = arith.constant 0 : index
    %34 = vector.load %arg2[%c4, %c0_17, %c0_18] : memref<9x8x128xbf16, #tpu.memory_space<vmem>>, vector<1x8x128xbf16>
    %35 = vector.shape_cast %34 : vector<1x8x128xbf16> to vector<8x128xbf16>
    %cst_19 = arith.constant dense<0.000000e+00> : vector<64x128xf32>
    %36 = tpu.matmul %33, %35, %cst_19 {dimension_numbers = #tpu.dot_dimension_numbers<[1], [0], [0], [1], [0, 0, 1, 1], [], []>} : vector<64x8xbf16>, vector<8x128xbf16>, vector<64x128xf32> -> vector<64x128xf32>
    %37 = arith.addf %30, %36 : vector<64x128xf32>
    %38 = vector.extract_strided_slice %1 {offsets = [2, 0, 1, 0], sizes = [1, 8, 8, 8], strides = [1, 1, 1, 1]} : vector<4x9x9x8xbf16> to vector<1x8x8x8xbf16>
    %39 = vector.shape_cast %38 : vector<1x8x8x8xbf16> to vector<8x8x8xbf16>
    %40 = vector.shape_cast %39 : vector<8x8x8xbf16> to vector<64x8xbf16>
    %c5 = arith.constant 5 : index
    %c0_20 = arith.constant 0 : index
    %c0_21 = arith.constant 0 : index
    %41 = vector.load %arg2[%c5, %c0_20, %c0_21] : memref<9x8x128xbf16, #tpu.memory_space<vmem>>, vector<1x8x128xbf16>
    %42 = vector.shape_cast %41 : vector<1x8x128xbf16> to vector<8x128xbf16>
    %cst_22 = arith.constant dense<0.000000e+00> : vector<64x128xf32>
    %43 = tpu.matmul %40, %42, %cst_22 {dimension_numbers = #tpu.dot_dimension_numbers<[1], [0], [0], [1], [0, 0, 1, 1], [], []>} : vector<64x8xbf16>, vector<8x128xbf16>, vector<64x128xf32> -> vector<64x128xf32>
    %44 = arith.addf %37, %43 : vector<64x128xf32>
    %45 = vector.extract_strided_slice %1 {offsets = [0, 1, 0, 0], sizes = [1, 8, 8, 8], strides = [1, 1, 1, 1]} : vector<4x9x9x8xbf16> to vector<1x8x8x8xbf16>
    %46 = vector.shape_cast %45 : vector<1x8x8x8xbf16> to vector<8x8x8xbf16>
    %47 = vector.shape_cast %46 : vector<8x8x8xbf16> to vector<64x8xbf16>
    %c6 = arith.constant 6 : index
    %c0_23 = arith.constant 0 : index
    %c0_24 = arith.constant 0 : index
    %48 = vector.load %arg2[%c6, %c0_23, %c0_24] : memref<9x8x128xbf16, #tpu.memory_space<vmem>>, vector<1x8x128xbf16>
    %49 = vector.shape_cast %48 : vector<1x8x128xbf16> to vector<8x128xbf16>
    %cst_25 = arith.constant dense<0.000000e+00> : vector<64x128xf32>
    %50 = tpu.matmul %47, %49, %cst_25 {dimension_numbers = #tpu.dot_dimension_numbers<[1], [0], [0], [1], [0, 0, 1, 1], [], []>} : vector<64x8xbf16>, vector<8x128xbf16>, vector<64x128xf32> -> vector<64x128xf32>
    %51 = arith.addf %44, %50 : vector<64x128xf32>
    %52 = vector.extract_strided_slice %1 {offsets = [1, 1, 0, 0], sizes = [1, 8, 8, 8], strides = [1, 1, 1, 1]} : vector<4x9x9x8xbf16> to vector<1x8x8x8xbf16>
    %53 = vector.shape_cast %52 : vector<1x8x8x8xbf16> to vector<8x8x8xbf16>
    %54 = vector.shape_cast %53 : vector<8x8x8xbf16> to vector<64x8xbf16>
    %c7 = arith.constant 7 : index
    %c0_26 = arith.constant 0 : index
    %c0_27 = arith.constant 0 : index
    %55 = vector.load %arg2[%c7, %c0_26, %c0_27] : memref<9x8x128xbf16, #tpu.memory_space<vmem>>, vector<1x8x128xbf16>
    %56 = vector.shape_cast %55 : vector<1x8x128xbf16> to vector<8x128xbf16>
    %cst_28 = arith.constant dense<0.000000e+00> : vector<64x128xf32>
    %57 = tpu.matmul %54, %56, %cst_28 {dimension_numbers = #tpu.dot_dimension_numbers<[1], [0], [0], [1], [0, 0, 1, 1], [], []>} : vector<64x8xbf16>, vector<8x128xbf16>, vector<64x128xf32> -> vector<64x128xf32>
    %58 = arith.addf %51, %57 : vector<64x128xf32>
    %59 = vector.extract_strided_slice %1 {offsets = [0, 1, 1, 0], sizes = [1, 8, 8, 8], strides = [1, 1, 1, 1]} : vector<4x9x9x8xbf16> to vector<1x8x8x8xbf16>
    %60 = vector.shape_cast %59 : vector<1x8x8x8xbf16> to vector<8x8x8xbf16>
    %61 = vector.shape_cast %60 : vector<8x8x8xbf16> to vector<64x8xbf16>
    %c8 = arith.constant 8 : index
    %c0_29 = arith.constant 0 : index
    %c0_30 = arith.constant 0 : index
    %62 = vector.load %arg2[%c8, %c0_29, %c0_30] : memref<9x8x128xbf16, #tpu.memory_space<vmem>>, vector<1x8x128xbf16>
    %63 = vector.shape_cast %62 : vector<1x8x128xbf16> to vector<8x128xbf16>
    %cst_31 = arith.constant dense<0.000000e+00> : vector<64x128xf32>
    %64 = tpu.matmul %61, %63, %cst_31 {dimension_numbers = #tpu.dot_dimension_numbers<[1], [0], [0], [1], [0, 0, 1, 1], [], []>} : vector<64x8xbf16>, vector<8x128xbf16>, vector<64x128xf32> -> vector<64x128xf32>
    %65 = arith.addf %58, %64 : vector<64x128xf32>
    %c0_32 = arith.constant 0 : index
    %c0_33 = arith.constant 0 : index
    %66 = vector.load %arg3[%c0_32, %c0_33] : memref<1x128xf32, #tpu.memory_space<vmem>>, vector<1x128xf32>
    %67 = vector.broadcast %66 : vector<1x128xf32> to vector<64x128xf32>
    %68 = arith.addf %65, %67 : vector<64x128xf32>
    %cst_34 = arith.constant 0.000000e+00 : f32
    %69 = vector.broadcast %cst_34 : f32 to vector<64x128xf32>
    %70 = arith.maximumf %68, %69 : vector<64x128xf32>
    %cst_35 = arith.constant 0.000000e+00 : bf16
    %71 = vector.broadcast %cst_35 : bf16 to vector<10x10x128xbf16>
    %c0_36 = arith.constant 0 : index
    %c0_37 = arith.constant 0 : index
    %c0_38 = arith.constant 0 : index
    %72 = vector.load %arg9[%c0_36, %c0_37, %c0_38] : memref<10x10x128xbf16, #tpu.memory_space<vmem>>, vector<10x10x128xbf16>
    tpu.vector_store %arg9[%c0_36, %c0_37, %c0_38], %71 {strides = array<i32>} : memref<10x10x128xbf16, #tpu.memory_space<vmem>>, vector<10x10x128xbf16>,
    %73 = vector.shape_cast %70 : vector<64x128xf32> to vector<8x8x128xf32>
    %74 = arith.truncf %73 : vector<8x8x128xf32> to vector<8x8x128xbf16>
    %c1_39 = arith.constant 1 : index
    %c1_40 = arith.constant 1 : index
    %c0_41 = arith.constant 0 : index
    %75 = vector.load %arg9[%c1_39, %c1_40, %c0_41] : memref<10x10x128xbf16, #tpu.memory_space<vmem>>, vector<8x8x128xbf16>
    tpu.vector_store %arg9[%c1_39, %c1_40, %c0_41], %74 {strides = array<i32>} : memref<10x10x128xbf16, #tpu.memory_space<vmem>>, vector<8x8x128xbf16>,
    %cst_42 = arith.constant 0.000000e+00 : f32
    %76 = vector.broadcast %cst_42 : f32 to vector<64x128xf32>
    %c0_43 = arith.constant 0 : index
    %c0_44 = arith.constant 0 : index
    %c0_45 = arith.constant 0 : index
    %77 = vector.load %arg9[%c0_43, %c0_44, %c0_45] : memref<10x10x128xbf16, #tpu.memory_space<vmem>>, vector<8x8x128xbf16>
    %78 = vector.shape_cast %77 : vector<8x8x128xbf16> to vector<64x128xbf16>
    %c0_46 = arith.constant 0 : index
    %c0_47 = arith.constant 0 : index
    %c0_48 = arith.constant 0 : index
    %79 = vector.load %arg4[%c0_46, %c0_47, %c0_48] : memref<9x128x128xbf16, #tpu.memory_space<vmem>>, vector<1x128x128xbf16>
    %80 = vector.shape_cast %79 : vector<1x128x128xbf16> to vector<128x128xbf16>
    %cst_49 = arith.constant dense<0.000000e+00> : vector<64x128xf32>
    %81 = tpu.matmul %78, %80, %cst_49 {dimension_numbers = #tpu.dot_dimension_numbers<[1], [0], [0], [1], [0, 0, 1, 1], [], []>} : vector<64x128xbf16>, vector<128x128xbf16>, vector<64x128xf32> -> vector<64x128xf32>
    %82 = arith.addf %76, %81 : vector<64x128xf32>
    %c0_50 = arith.constant 0 : index
    %c1_51 = arith.constant 1 : index
    %c0_52 = arith.constant 0 : index
    %83 = vector.load %arg9[%c0_50, %c1_51, %c0_52] : memref<10x10x128xbf16, #tpu.memory_space<vmem>>, vector<8x8x128xbf16>
    %84 = vector.shape_cast %83 : vector<8x8x128xbf16> to vector<64x128xbf16>
    %c1_53 = arith.constant 1 : index
    %c0_54 = arith.constant 0 : index
    %c0_55 = arith.constant 0 : index
    %85 = vector.load %arg4[%c1_53, %c0_54, %c0_55] : memref<9x128x128xbf16, #tpu.memory_space<vmem>>, vector<1x128x128xbf16>
    %86 = vector.shape_cast %85 : vector<1x128x128xbf16> to vector<128x128xbf16>
    %cst_56 = arith.constant dense<0.000000e+00> : vector<64x128xf32>
    %87 = tpu.matmul %84, %86, %cst_56 {dimension_numbers = #tpu.dot_dimension_numbers<[1], [0], [0], [1], [0, 0, 1, 1], [], []>} : vector<64x128xbf16>, vector<128x128xbf16>, vector<64x128xf32> -> vector<64x128xf32>
    %88 = arith.addf %82, %87 : vector<64x128xf32>
    %c0_57 = arith.constant 0 : index
    %c2_58 = arith.constant 2 : index
    %c0_59 = arith.constant 0 : index
    %89 = vector.load %arg9[%c0_57, %c2_58, %c0_59] : memref<10x10x128xbf16, #tpu.memory_space<vmem>>, vector<8x8x128xbf16>
    %90 = vector.shape_cast %89 : vector<8x8x128xbf16> to vector<64x128xbf16>
    %c2_60 = arith.constant 2 : index
    %c0_61 = arith.constant 0 : index
    %c0_62 = arith.constant 0 : index
    %91 = vector.load %arg4[%c2_60, %c0_61, %c0_62] : memref<9x128x128xbf16, #tpu.memory_space<vmem>>, vector<1x128x128xbf16>
    %92 = vector.shape_cast %91 : vector<1x128x128xbf16> to vector<128x128xbf16>
    %cst_63 = arith.constant dense<0.000000e+00> : vector<64x128xf32>
    %93 = tpu.matmul %90, %92, %cst_63 {dimension_numbers = #tpu.dot_dimension_numbers<[1], [0], [0], [1], [0, 0, 1, 1], [], []>} : vector<64x128xbf16>, vector<128x128xbf16>, vector<64x128xf32> -> vector<64x128xf32>
    %94 = arith.addf %88, %93 : vector<64x128xf32>
    %c1_64 = arith.constant 1 : index
    %c0_65 = arith.constant 0 : index
    %c0_66 = arith.constant 0 : index
    %95 = vector.load %arg9[%c1_64, %c0_65, %c0_66] : memref<10x10x128xbf16, #tpu.memory_space<vmem>>, vector<8x8x128xbf16>
    %96 = vector.shape_cast %95 : vector<8x8x128xbf16> to vector<64x128xbf16>
    %c3_67 = arith.constant 3 : index
    %c0_68 = arith.constant 0 : index
    %c0_69 = arith.constant 0 : index
    %97 = vector.load %arg4[%c3_67, %c0_68, %c0_69] : memref<9x128x128xbf16, #tpu.memory_space<vmem>>, vector<1x128x128xbf16>
    %98 = vector.shape_cast %97 : vector<1x128x128xbf16> to vector<128x128xbf16>
    %cst_70 = arith.constant dense<0.000000e+00> : vector<64x128xf32>
    %99 = tpu.matmul %96, %98, %cst_70 {dimension_numbers = #tpu.dot_dimension_numbers<[1], [0], [0], [1], [0, 0, 1, 1], [], []>} : vector<64x128xbf16>, vector<128x128xbf16>, vector<64x128xf32> -> vector<64x128xf32>
    %100 = arith.addf %94, %99 : vector<64x128xf32>
    %c1_71 = arith.constant 1 : index
    %c1_72 = arith.constant 1 : index
    %c0_73 = arith.constant 0 : index
    %101 = vector.load %arg9[%c1_71, %c1_72, %c0_73] : memref<10x10x128xbf16, #tpu.memory_space<vmem>>, vector<8x8x128xbf16>
    %102 = vector.shape_cast %101 : vector<8x8x128xbf16> to vector<64x128xbf16>
    %c4_74 = arith.constant 4 : index
    %c0_75 = arith.constant 0 : index
    %c0_76 = arith.constant 0 : index
    %103 = vector.load %arg4[%c4_74, %c0_75, %c0_76] : memref<9x128x128xbf16, #tpu.memory_space<vmem>>, vector<1x128x128xbf16>
    %104 = vector.shape_cast %103 : vector<1x128x128xbf16> to vector<128x128xbf16>
    %cst_77 = arith.constant dense<0.000000e+00> : vector<64x128xf32>
    %105 = tpu.matmul %102, %104, %cst_77 {dimension_numbers = #tpu.dot_dimension_numbers<[1], [0], [0], [1], [0, 0, 1, 1], [], []>} : vector<64x128xbf16>, vector<128x128xbf16>, vector<64x128xf32> -> vector<64x128xf32>
    %106 = arith.addf %100, %105 : vector<64x128xf32>
    %c1_78 = arith.constant 1 : index
    %c2_79 = arith.constant 2 : index
    %c0_80 = arith.constant 0 : index
    %107 = vector.load %arg9[%c1_78, %c2_79, %c0_80] : memref<10x10x128xbf16, #tpu.memory_space<vmem>>, vector<8x8x128xbf16>
    %108 = vector.shape_cast %107 : vector<8x8x128xbf16> to vector<64x128xbf16>
    %c5_81 = arith.constant 5 : index
    %c0_82 = arith.constant 0 : index
    %c0_83 = arith.constant 0 : index
    %109 = vector.load %arg4[%c5_81, %c0_82, %c0_83] : memref<9x128x128xbf16, #tpu.memory_space<vmem>>, vector<1x128x128xbf16>
    %110 = vector.shape_cast %109 : vector<1x128x128xbf16> to vector<128x128xbf16>
    %cst_84 = arith.constant dense<0.000000e+00> : vector<64x128xf32>
    %111 = tpu.matmul %108, %110, %cst_84 {dimension_numbers = #tpu.dot_dimension_numbers<[1], [0], [0], [1], [0, 0, 1, 1], [], []>} : vector<64x128xbf16>, vector<128x128xbf16>, vector<64x128xf32> -> vector<64x128xf32>
    %112 = arith.addf %106, %111 : vector<64x128xf32>
    %c2_85 = arith.constant 2 : index
    %c0_86 = arith.constant 0 : index
    %c0_87 = arith.constant 0 : index
    %113 = vector.load %arg9[%c2_85, %c0_86, %c0_87] : memref<10x10x128xbf16, #tpu.memory_space<vmem>>, vector<8x8x128xbf16>
    %114 = vector.shape_cast %113 : vector<8x8x128xbf16> to vector<64x128xbf16>
    %c6_88 = arith.constant 6 : index
    %c0_89 = arith.constant 0 : index
    %c0_90 = arith.constant 0 : index
    %115 = vector.load %arg4[%c6_88, %c0_89, %c0_90] : memref<9x128x128xbf16, #tpu.memory_space<vmem>>, vector<1x128x128xbf16>
    %116 = vector.shape_cast %115 : vector<1x128x128xbf16> to vector<128x128xbf16>
    %cst_91 = arith.constant dense<0.000000e+00> : vector<64x128xf32>
    %117 = tpu.matmul %114, %116, %cst_91 {dimension_numbers = #tpu.dot_dimension_numbers<[1], [0], [0], [1], [0, 0, 1, 1], [], []>} : vector<64x128xbf16>, vector<128x128xbf16>, vector<64x128xf32> -> vector<64x128xf32>
    %118 = arith.addf %112, %117 : vector<64x128xf32>
    %c2_92 = arith.constant 2 : index
    %c1_93 = arith.constant 1 : index
    %c0_94 = arith.constant 0 : index
    %119 = vector.load %arg9[%c2_92, %c1_93, %c0_94] : memref<10x10x128xbf16, #tpu.memory_space<vmem>>, vector<8x8x128xbf16>
    %120 = vector.shape_cast %119 : vector<8x8x128xbf16> to vector<64x128xbf16>
    %c7_95 = arith.constant 7 : index
    %c0_96 = arith.constant 0 : index
    %c0_97 = arith.constant 0 : index
    %121 = vector.load %arg4[%c7_95, %c0_96, %c0_97] : memref<9x128x128xbf16, #tpu.memory_space<vmem>>, vector<1x128x128xbf16>
    %122 = vector.shape_cast %121 : vector<1x128x128xbf16> to vector<128x128xbf16>
    %cst_98 = arith.constant dense<0.000000e+00> : vector<64x128xf32>
    %123 = tpu.matmul %120, %122, %cst_98 {dimension_numbers = #tpu.dot_dimension_numbers<[1], [0], [0], [1], [0, 0, 1, 1], [], []>} : vector<64x128xbf16>, vector<128x128xbf16>, vector<64x128xf32> -> vector<64x128xf32>
    %124 = arith.addf %118, %123 : vector<64x128xf32>
    %c2_99 = arith.constant 2 : index
    %c2_100 = arith.constant 2 : index
    %c0_101 = arith.constant 0 : index
    %125 = vector.load %arg9[%c2_99, %c2_100, %c0_101] : memref<10x10x128xbf16, #tpu.memory_space<vmem>>, vector<8x8x128xbf16>
    %126 = vector.shape_cast %125 : vector<8x8x128xbf16> to vector<64x128xbf16>
    %c8_102 = arith.constant 8 : index
    %c0_103 = arith.constant 0 : index
    %c0_104 = arith.constant 0 : index
    %127 = vector.load %arg4[%c8_102, %c0_103, %c0_104] : memref<9x128x128xbf16, #tpu.memory_space<vmem>>, vector<1x128x128xbf16>
    %128 = vector.shape_cast %127 : vector<1x128x128xbf16> to vector<128x128xbf16>
    %cst_105 = arith.constant dense<0.000000e+00> : vector<64x128xf32>
    %129 = tpu.matmul %126, %128, %cst_105 {dimension_numbers = #tpu.dot_dimension_numbers<[1], [0], [0], [1], [0, 0, 1, 1], [], []>} : vector<64x128xbf16>, vector<128x128xbf16>, vector<64x128xf32> -> vector<64x128xf32>
    %130 = arith.addf %124, %129 : vector<64x128xf32>
    %c0_106 = arith.constant 0 : index
    %c0_107 = arith.constant 0 : index
    %131 = vector.load %arg5[%c0_106, %c0_107] : memref<1x128xf32, #tpu.memory_space<vmem>>, vector<1x128xf32>
    %132 = vector.broadcast %131 : vector<1x128xf32> to vector<64x128xf32>
    %133 = arith.addf %130, %132 : vector<64x128xf32>
    %cst_108 = arith.constant 0.000000e+00 : f32
    %134 = vector.broadcast %cst_108 : f32 to vector<64x128xf32>
    %135 = arith.maximumf %133, %134 : vector<64x128xf32>
    %cst_109 = arith.constant 0.000000e+00 : bf16
    %136 = vector.broadcast %cst_109 : bf16 to vector<10x10x128xbf16>
    %c0_110 = arith.constant 0 : index
    %c0_111 = arith.constant 0 : index
    %c0_112 = arith.constant 0 : index
    %137 = vector.load %arg10[%c0_110, %c0_111, %c0_112] : memref<10x10x128xbf16, #tpu.memory_space<vmem>>, vector<10x10x128xbf16>
    tpu.vector_store %arg10[%c0_110, %c0_111, %c0_112], %136 {strides = array<i32>} : memref<10x10x128xbf16, #tpu.memory_space<vmem>>, vector<10x10x128xbf16>,
    %138 = vector.shape_cast %135 : vector<64x128xf32> to vector<8x8x128xf32>
    %139 = arith.truncf %138 : vector<8x8x128xf32> to vector<8x8x128xbf16>
    %c1_113 = arith.constant 1 : index
    %c1_114 = arith.constant 1 : index
    %c0_115 = arith.constant 0 : index
    %140 = vector.load %arg10[%c1_113, %c1_114, %c0_115] : memref<10x10x128xbf16, #tpu.memory_space<vmem>>, vector<8x8x128xbf16>
    tpu.vector_store %arg10[%c1_113, %c1_114, %c0_115], %139 {strides = array<i32>} : memref<10x10x128xbf16, #tpu.memory_space<vmem>>, vector<8x8x128xbf16>,
    %cst_116 = arith.constant 0.000000e+00 : f32
    %141 = vector.broadcast %cst_116 : f32 to vector<64x128xf32>
    %c0_117 = arith.constant 0 : index
    %c0_118 = arith.constant 0 : index
    %c0_119 = arith.constant 0 : index
    %142 = vector.load %arg10[%c0_117, %c0_118, %c0_119] : memref<10x10x128xbf16, #tpu.memory_space<vmem>>, vector<8x8x128xbf16>
    %143 = vector.shape_cast %142 : vector<8x8x128xbf16> to vector<64x128xbf16>
    %c0_120 = arith.constant 0 : index
    %c0_121 = arith.constant 0 : index
    %c0_122 = arith.constant 0 : index
    %144 = vector.load %arg6[%c0_120, %c0_121, %c0_122] : memref<9x128x128xbf16, #tpu.memory_space<vmem>>, vector<1x128x128xbf16>
    %145 = vector.shape_cast %144 : vector<1x128x128xbf16> to vector<128x128xbf16>
    %cst_123 = arith.constant dense<0.000000e+00> : vector<64x128xf32>
    %146 = tpu.matmul %143, %145, %cst_123 {dimension_numbers = #tpu.dot_dimension_numbers<[1], [0], [0], [1], [0, 0, 1, 1], [], []>} : vector<64x128xbf16>, vector<128x128xbf16>, vector<64x128xf32> -> vector<64x128xf32>
    %147 = arith.addf %141, %146 : vector<64x128xf32>
    %c0_124 = arith.constant 0 : index
    %c1_125 = arith.constant 1 : index
    %c0_126 = arith.constant 0 : index
    %148 = vector.load %arg10[%c0_124, %c1_125, %c0_126] : memref<10x10x128xbf16, #tpu.memory_space<vmem>>, vector<8x8x128xbf16>
    %149 = vector.shape_cast %148 : vector<8x8x128xbf16> to vector<64x128xbf16>
    %c1_127 = arith.constant 1 : index
    %c0_128 = arith.constant 0 : index
    %c0_129 = arith.constant 0 : index
    %150 = vector.load %arg6[%c1_127, %c0_128, %c0_129] : memref<9x128x128xbf16, #tpu.memory_space<vmem>>, vector<1x128x128xbf16>
    %151 = vector.shape_cast %150 : vector<1x128x128xbf16> to vector<128x128xbf16>
    %cst_130 = arith.constant dense<0.000000e+00> : vector<64x128xf32>
    %152 = tpu.matmul %149, %151, %cst_130 {dimension_numbers = #tpu.dot_dimension_numbers<[1], [0], [0], [1], [0, 0, 1, 1], [], []>} : vector<64x128xbf16>, vector<128x128xbf16>, vector<64x128xf32> -> vector<64x128xf32>
    %153 = arith.addf %147, %152 : vector<64x128xf32>
    %c0_131 = arith.constant 0 : index
    %c2_132 = arith.constant 2 : index
    %c0_133 = arith.constant 0 : index
    %154 = vector.load %arg10[%c0_131, %c2_132, %c0_133] : memref<10x10x128xbf16, #tpu.memory_space<vmem>>, vector<8x8x128xbf16>
    %155 = vector.shape_cast %154 : vector<8x8x128xbf16> to vector<64x128xbf16>
    %c2_134 = arith.constant 2 : index
    %c0_135 = arith.constant 0 : index
    %c0_136 = arith.constant 0 : index
    %156 = vector.load %arg6[%c2_134, %c0_135, %c0_136] : memref<9x128x128xbf16, #tpu.memory_space<vmem>>, vector<1x128x128xbf16>
    %157 = vector.shape_cast %156 : vector<1x128x128xbf16> to vector<128x128xbf16>
    %cst_137 = arith.constant dense<0.000000e+00> : vector<64x128xf32>
    %158 = tpu.matmul %155, %157, %cst_137 {dimension_numbers = #tpu.dot_dimension_numbers<[1], [0], [0], [1], [0, 0, 1, 1], [], []>} : vector<64x128xbf16>, vector<128x128xbf16>, vector<64x128xf32> -> vector<64x128xf32>
    %159 = arith.addf %153, %158 : vector<64x128xf32>
    %c1_138 = arith.constant 1 : index
    %c0_139 = arith.constant 0 : index
    %c0_140 = arith.constant 0 : index
    %160 = vector.load %arg10[%c1_138, %c0_139, %c0_140] : memref<10x10x128xbf16, #tpu.memory_space<vmem>>, vector<8x8x128xbf16>
    %161 = vector.shape_cast %160 : vector<8x8x128xbf16> to vector<64x128xbf16>
    %c3_141 = arith.constant 3 : index
    %c0_142 = arith.constant 0 : index
    %c0_143 = arith.constant 0 : index
    %162 = vector.load %arg6[%c3_141, %c0_142, %c0_143] : memref<9x128x128xbf16, #tpu.memory_space<vmem>>, vector<1x128x128xbf16>
    %163 = vector.shape_cast %162 : vector<1x128x128xbf16> to vector<128x128xbf16>
    %cst_144 = arith.constant dense<0.000000e+00> : vector<64x128xf32>
    %164 = tpu.matmul %161, %163, %cst_144 {dimension_numbers = #tpu.dot_dimension_numbers<[1], [0], [0], [1], [0, 0, 1, 1], [], []>} : vector<64x128xbf16>, vector<128x128xbf16>, vector<64x128xf32> -> vector<64x128xf32>
    %165 = arith.addf %159, %164 : vector<64x128xf32>
    %c1_145 = arith.constant 1 : index
    %c1_146 = arith.constant 1 : index
    %c0_147 = arith.constant 0 : index
    %166 = vector.load %arg10[%c1_145, %c1_146, %c0_147] : memref<10x10x128xbf16, #tpu.memory_space<vmem>>, vector<8x8x128xbf16>
    %167 = vector.shape_cast %166 : vector<8x8x128xbf16> to vector<64x128xbf16>
    %c4_148 = arith.constant 4 : index
    %c0_149 = arith.constant 0 : index
    %c0_150 = arith.constant 0 : index
    %168 = vector.load %arg6[%c4_148, %c0_149, %c0_150] : memref<9x128x128xbf16, #tpu.memory_space<vmem>>, vector<1x128x128xbf16>
    %169 = vector.shape_cast %168 : vector<1x128x128xbf16> to vector<128x128xbf16>
    %cst_151 = arith.constant dense<0.000000e+00> : vector<64x128xf32>
    %170 = tpu.matmul %167, %169, %cst_151 {dimension_numbers = #tpu.dot_dimension_numbers<[1], [0], [0], [1], [0, 0, 1, 1], [], []>} : vector<64x128xbf16>, vector<128x128xbf16>, vector<64x128xf32> -> vector<64x128xf32>
    %171 = arith.addf %165, %170 : vector<64x128xf32>
    %c1_152 = arith.constant 1 : index
    %c2_153 = arith.constant 2 : index
    %c0_154 = arith.constant 0 : index
    %172 = vector.load %arg10[%c1_152, %c2_153, %c0_154] : memref<10x10x128xbf16, #tpu.memory_space<vmem>>, vector<8x8x128xbf16>
    %173 = vector.shape_cast %172 : vector<8x8x128xbf16> to vector<64x128xbf16>
    %c5_155 = arith.constant 5 : index
    %c0_156 = arith.constant 0 : index
    %c0_157 = arith.constant 0 : index
    %174 = vector.load %arg6[%c5_155, %c0_156, %c0_157] : memref<9x128x128xbf16, #tpu.memory_space<vmem>>, vector<1x128x128xbf16>
    %175 = vector.shape_cast %174 : vector<1x128x128xbf16> to vector<128x128xbf16>
    %cst_158 = arith.constant dense<0.000000e+00> : vector<64x128xf32>
    %176 = tpu.matmul %173, %175, %cst_158 {dimension_numbers = #tpu.dot_dimension_numbers<[1], [0], [0], [1], [0, 0, 1, 1], [], []>} : vector<64x128xbf16>, vector<128x128xbf16>, vector<64x128xf32> -> vector<64x128xf32>
    %177 = arith.addf %171, %176 : vector<64x128xf32>
    %c2_159 = arith.constant 2 : index
    %c0_160 = arith.constant 0 : index
    %c0_161 = arith.constant 0 : index
    %178 = vector.load %arg10[%c2_159, %c0_160, %c0_161] : memref<10x10x128xbf16, #tpu.memory_space<vmem>>, vector<8x8x128xbf16>
    %179 = vector.shape_cast %178 : vector<8x8x128xbf16> to vector<64x128xbf16>
    %c6_162 = arith.constant 6 : index
    %c0_163 = arith.constant 0 : index
    %c0_164 = arith.constant 0 : index
    %180 = vector.load %arg6[%c6_162, %c0_163, %c0_164] : memref<9x128x128xbf16, #tpu.memory_space<vmem>>, vector<1x128x128xbf16>
    %181 = vector.shape_cast %180 : vector<1x128x128xbf16> to vector<128x128xbf16>
    %cst_165 = arith.constant dense<0.000000e+00> : vector<64x128xf32>
    %182 = tpu.matmul %179, %181, %cst_165 {dimension_numbers = #tpu.dot_dimension_numbers<[1], [0], [0], [1], [0, 0, 1, 1], [], []>} : vector<64x128xbf16>, vector<128x128xbf16>, vector<64x128xf32> -> vector<64x128xf32>
    %183 = arith.addf %177, %182 : vector<64x128xf32>
    %c2_166 = arith.constant 2 : index
    %c1_167 = arith.constant 1 : index
    %c0_168 = arith.constant 0 : index
    %184 = vector.load %arg10[%c2_166, %c1_167, %c0_168] : memref<10x10x128xbf16, #tpu.memory_space<vmem>>, vector<8x8x128xbf16>
    %185 = vector.shape_cast %184 : vector<8x8x128xbf16> to vector<64x128xbf16>
    %c7_169 = arith.constant 7 : index
    %c0_170 = arith.constant 0 : index
    %c0_171 = arith.constant 0 : index
    %186 = vector.load %arg6[%c7_169, %c0_170, %c0_171] : memref<9x128x128xbf16, #tpu.memory_space<vmem>>, vector<1x128x128xbf16>
    %187 = vector.shape_cast %186 : vector<1x128x128xbf16> to vector<128x128xbf16>
    %cst_172 = arith.constant dense<0.000000e+00> : vector<64x128xf32>
    %188 = tpu.matmul %185, %187, %cst_172 {dimension_numbers = #tpu.dot_dimension_numbers<[1], [0], [0], [1], [0, 0, 1, 1], [], []>} : vector<64x128xbf16>, vector<128x128xbf16>, vector<64x128xf32> -> vector<64x128xf32>
    %189 = arith.addf %183, %188 : vector<64x128xf32>
    %c2_173 = arith.constant 2 : index
    %c2_174 = arith.constant 2 : index
    %c0_175 = arith.constant 0 : index
    %190 = vector.load %arg10[%c2_173, %c2_174, %c0_175] : memref<10x10x128xbf16, #tpu.memory_space<vmem>>, vector<8x8x128xbf16>
    %191 = vector.shape_cast %190 : vector<8x8x128xbf16> to vector<64x128xbf16>
    %c8_176 = arith.constant 8 : index
    %c0_177 = arith.constant 0 : index
    %c0_178 = arith.constant 0 : index
    %192 = vector.load %arg6[%c8_176, %c0_177, %c0_178] : memref<9x128x128xbf16, #tpu.memory_space<vmem>>, vector<1x128x128xbf16>
    %193 = vector.shape_cast %192 : vector<1x128x128xbf16> to vector<128x128xbf16>
    %cst_179 = arith.constant dense<0.000000e+00> : vector<64x128xf32>
    %194 = tpu.matmul %191, %193, %cst_179 {dimension_numbers = #tpu.dot_dimension_numbers<[1], [0], [0], [1], [0, 0, 1, 1], [], []>} : vector<64x128xbf16>, vector<128x128xbf16>, vector<64x128xf32> -> vector<64x128xf32>
    %195 = arith.addf %189, %194 : vector<64x128xf32>
    %c0_180 = arith.constant 0 : index
    %c0_181 = arith.constant 0 : index
    %196 = vector.load %arg7[%c0_180, %c0_181] : memref<1x128xf32, #tpu.memory_space<vmem>>, vector<1x128xf32>
    %197 = vector.broadcast %196 : vector<1x128xf32> to vector<64x128xf32>
    %198 = arith.addf %195, %197 : vector<64x128xf32>
    %199 = arith.addf %198, %70 : vector<64x128xf32>
    %cst_182 = arith.constant 0.000000e+00 : f32
    %200 = vector.broadcast %cst_182 : f32 to vector<64x128xf32>
    %201 = arith.maximumf %199, %200 : vector<64x128xf32>
    %c0_183 = arith.constant 0 : index
    %c0_184 = arith.constant 0 : index
    %c0_185 = arith.constant 0 : index
    %202 = vector.load %arg8[%c0_183, %c0_184, %c0_185] : memref<1x64x128xf32, #tpu.memory_space<vmem>>, vector<1x64x128xf32>
    %203 = vector.shape_cast %202 : vector<1x64x128xf32> to vector<64x128xf32>
    %204 = vector.shape_cast %201 : vector<64x128xf32> to vector<1x64x128xf32>
    tpu.vector_store %arg8[%c0_183, %c0_184, %c0_185], %204 {strides = array<i32>} : memref<1x64x128xf32, #tpu.memory_space<vmem>>, vector<1x64x128xf32>,
    return
  }
  func.func @transform_0(%arg0: i32) -> (i32, i32, i32, i32, i32) {
    %c0_i32 = arith.constant 0 : i32
    %c0_i32_0 = arith.constant 0 : i32
    %c0_i32_1 = arith.constant 0 : i32
    %c0_i32_2 = arith.constant 0 : i32
    %c0_i32_3 = arith.constant 0 : i32
    return %arg0, %c0_i32, %c0_i32_0, %c0_i32_1, %c0_i32_2 : i32, i32, i32, i32, i32
  }
  func.func @transform_1(%arg0: i32) -> (i32, i32, i32) {
    %c0_i32 = arith.constant 0 : i32
    %c0_i32_0 = arith.constant 0 : i32
    %c0_i32_1 = arith.constant 0 : i32
    %c0_i32_2 = arith.constant 0 : i32
    return %c0_i32, %c0_i32_0, %c0_i32_1 : i32, i32, i32
  }
  func.func @transform_2(%arg0: i32) -> (i32, i32) {
    %c0_i32 = arith.constant 0 : i32
    %c0_i32_0 = arith.constant 0 : i32
    %c0_i32_1 = arith.constant 0 : i32
    return %c0_i32, %c0_i32_0 : i32, i32
  }
  func.func @transform_3(%arg0: i32) -> (i32, i32, i32) {
    %c0_i32 = arith.constant 0 : i32
    %c0_i32_0 = arith.constant 0 : i32
    %c0_i32_1 = arith.constant 0 : i32
    %c0_i32_2 = arith.constant 0 : i32
    return %c0_i32, %c0_i32_0, %c0_i32_1 : i32, i32, i32
  }
  func.func @transform_4(%arg0: i32) -> (i32, i32) {
    %c0_i32 = arith.constant 0 : i32
    %c0_i32_0 = arith.constant 0 : i32
    %c0_i32_1 = arith.constant 0 : i32
    return %c0_i32, %c0_i32_0 : i32, i32
  }
  func.func @transform_5(%arg0: i32) -> (i32, i32, i32) {
    %c0_i32 = arith.constant 0 : i32
    %c0_i32_0 = arith.constant 0 : i32
    %c0_i32_1 = arith.constant 0 : i32
    %c0_i32_2 = arith.constant 0 : i32
    return %c0_i32, %c0_i32_0, %c0_i32_1 : i32, i32, i32
  }
  func.func @transform_6(%arg0: i32) -> (i32, i32) {
    %c0_i32 = arith.constant 0 : i32
    %c0_i32_0 = arith.constant 0 : i32
    %c0_i32_1 = arith.constant 0 : i32
    return %c0_i32, %c0_i32_0 : i32, i32
  }
  func.func @transform_7(%arg0: i32) -> (i32, i32, i32) {
    %c0_i32 = arith.constant 0 : i32
    %c0_i32_0 = arith.constant 0 : i32
    %c0_i32_1 = arith.constant 0 : i32
    return %arg0, %c0_i32, %c0_i32_0 : i32, i32, i32
  }
}

</mosaic_0001>

<llo_original>
// kernel: down_forward.1
$region0: #{down_forward.1}
  #allocation0 [shape = 'u32[]', space=smem, size = 0x4, offset = 0x4, fixed_abs, tag = 'smem constant byte address 0x4 - core index']
  #allocation1 [shape = 'u32[144,128]{1,0:T(1,128)}', space=vmem, size = 0x12000, scoped, tag = 'internal scratch']
  #allocation2 [shape = 'bf16[10,10,128]{2,1,0:T(8,128)(2,1)}', space=vmem, size = 0xa000, scoped, tag = 'scratch operand']
  #allocation3 [shape = 'bf16[10,10,128]{2,1,0:T(8,128)(2,1)}', space=vmem, size = 0xa000, scoped, tag = 'scratch operand']
  %s0 = inlined_call_operand.vmem [shape: bf16[2,4,9,9,8], index: 0, kind: input, shape index: {}]
  %s1 = inlined_call_operand.vmem [shape: bf16[9,8,128], index: 1, kind: input, shape index: {}]
  %s2 = inlined_call_operand.vmem [shape: f32[1,128], index: 2, kind: input, shape index: {}]
  %s3 = inlined_call_operand.vmem [shape: bf16[9,128,128], index: 3, kind: input, shape index: {}]
  %s4 = inlined_call_operand.vmem [shape: f32[1,128], index: 4, kind: input, shape index: {}]
  %s5 = inlined_call_operand.vmem [shape: bf16[9,128,128], index: 5, kind: input, shape index: {}]
  %s6 = inlined_call_operand.vmem [shape: f32[1,128], index: 6, kind: input, shape index: {}]
  %s7 = inlined_call_operand.vmem [shape: f32[2,64,128], index: 7, kind: output, shape index: {}]
  %s8 = sld [smem:[#allocation0]]
  $region61: #{down_forward.1} parent=0
    _
  %s10 = ssub.s32 1, %s8
  %s11 = scalar_select 0, %s10, %s8
  loop: start=0, step=1, limit=4
  $region2: #{down_forward.1} parent=0 // loop_pre_header
    _
  $region3: #{down_forward.1} parent=0 // loop_header
    %s13 = sphi 0, %s17
    %p14 = scmp.ge.s32.totalorder %s13, 4
    %s23 = sphi 0, %s25
    %s26 = sphi 0, %s23
    %s27 = sphi 0, %s26
    %s43 = sphi 0, %s27
    %s47 = sphi 0, %s47
    %s49 = sphi 0, %s47
    %s50 = sphi 0, %s49
    %s64 = sphi 0, %s50
    %s68 = sphi 0, %s68
    %s70 = sphi 0, %s68
    %s71 = sphi 0, %s70
    %s85 = sphi 0, %s71
    %s89 = sphi 0, %s89
    %s91 = sphi 0, %s89
    %s92 = sphi 0, %s91
    %s106 = sphi 0, %s92
    %s110 = sphi 0, %s110
    %s112 = sphi 0, %s110
    %s113 = sphi 0, %s112
    %s127 = sphi 0, %s113
    %s131 = sphi 0, %s131
    %s133 = sphi 0, %s131
    %s134 = sphi 0, %s133
    %s148 = sphi 0, %s134
    %s152 = sphi 0, %s152
    %s154 = sphi 0, %s152
    %s155 = sphi 0, %s154
    %s169 = sphi 0, %s155
    %s175 = sphi 0, %s177
    %s178 = sphi 0, %s175
    %s179 = sphi 0, %s178
    %s195 = sphi 0, %s179
  $region4: #{down_forward.1} parent=0 // loop_header_branch
    %16 = sbr.rel (%p14) target = $region8
  $region5: #{down_forward.1} parent=0 // loop_body
    %s18 = ssub.s32 %s13, 1
    %s19 = ssub.s32 %s13, 2
    %s20 = sadd.s32 %s13, 1
    %s21 = ssub.s32 %s13, %s20
    %p22 = scmp.eq.s32.totalorder %s21, 0
    %s24 = sadd.s32 %s23, 1
    %s25 = scalar_select %p22, %s23, %s24
    %p28 = pneg %p22
    %p29 = scmp.eq.s32.totalorder %s13, 1
    %p30 = por %p28, %p29
    %p31 = scmp.ne.s32.totalorder %s23, %s26
    %p32 = scmp.eq.s32.totalorder %s13, 0
    %p33 = por %p31, %p32
    %p34 = scmp.ne.s32.totalorder %s23, %s26
    %p35 = scmp.eq.s32.totalorder %s18, 1
    %p36 = por %p34, %p35
    %p37 = scmp.ne.s32.totalorder %s26, %s27
    %p38 = scmp.eq.s32.totalorder %s18, 0
    %p39 = por %p37, %p38
    %p40 = scmp.ne.s32.totalorder %s26, %s27
    %p41 = scmp.eq.s32.totalorder %s19, 1
    %p42 = por %p40, %p41
    %p44 = scmp.ne.s32.totalorder %s27, %s43
    %p45 = scmp.eq.s32.totalorder %s19, 0
    %p46 = por %p44, %p45
    %s48 = sadd.s32 %s47, 1
    %p51 = scmp.eq.s32.totalorder %s13, 1
    %p52 = scmp.ne.s32.totalorder %s47, %s49
    %p53 = scmp.eq.s32.totalorder %s13, 0
    %p54 = por %p52, %p53
    %p55 = scmp.ne.s32.totalorder %s47, %s49
    %p56 = scmp.eq.s32.totalorder %s18, 1
    %p57 = por %p55, %p56
    %p58 = scmp.ne.s32.totalorder %s49, %s50
    %p59 = scmp.eq.s32.totalorder %s18, 0
    %p60 = por %p58, %p59
    %p61 = scmp.ne.s32.totalorder %s49, %s50
    %p62 = scmp.eq.s32.totalorder %s19, 1
    %p63 = por %p61, %p62
    %p65 = scmp.ne.s32.totalorder %s50, %s64
    %p66 = scmp.eq.s32.totalorder %s19, 0
    %p67 = por %p65, %p66
    %s69 = sadd.s32 %s68, 1
    %p72 = scmp.eq.s32.totalorder %s13, 1
    %p73 = scmp.ne.s32.totalorder %s68, %s70
    %p74 = scmp.eq.s32.totalorder %s13, 0
    %p75 = por %p73, %p74
    %p76 = scmp.ne.s32.totalorder %s68, %s70
    %p77 = scmp.eq.s32.totalorder %s18, 1
    %p78 = por %p76, %p77
    %p79 = scmp.ne.s32.totalorder %s70, %s71
    %p80 = scmp.eq.s32.totalorder %s18, 0
    %p81 = por %p79, %p80
    %p82 = scmp.ne.s32.totalorder %s70, %s71
    %p83 = scmp.eq.s32.totalorder %s19, 1
    %p84 = por %p82, %p83
    %p86 = scmp.ne.s32.totalorder %s71, %s85
    %p87 = scmp.eq.s32.totalorder %s19, 0
    %p88 = por %p86, %p87
    %s90 = sadd.s32 %s89, 1
    %p93 = scmp.eq.s32.totalorder %s13, 1
    %p94 = scmp.ne.s32.totalorder %s89, %s91
    %p95 = scmp.eq.s32.totalorder %s13, 0
    %p96 = por %p94, %p95
    %p97 = scmp.ne.s32.totalorder %s89, %s91
    %p98 = scmp.eq.s32.totalorder %s18, 1
    %p99 = por %p97, %p98
    %p100 = scmp.ne.s32.totalorder %s91, %s92
    %p101 = scmp.eq.s32.totalorder %s18, 0
    %p102 = por %p100, %p101
    %p103 = scmp.ne.s32.totalorder %s91, %s92
    %p104 = scmp.eq.s32.totalorder %s19, 1
    %p105 = por %p103, %p104
    %p107 = scmp.ne.s32.totalorder %s92, %s106
    %p108 = scmp.eq.s32.totalorder %s19, 0
    %p109 = por %p107, %p108
    %s111 = sadd.s32 %s110, 1
    %p114 = scmp.eq.s32.totalorder %s13, 1
    %p115 = scmp.ne.s32.totalorder %s110, %s112
    %p116 = scmp.eq.s32.totalorder %s13, 0
    %p117 = por %p115, %p116
    %p118 = scmp.ne.s32.totalorder %s110, %s112
    %p119 = scmp.eq.s32.totalorder %s18, 1
    %p120 = por %p118, %p119
    %p121 = scmp.ne.s32.totalorder %s112, %s113
    %p122 = scmp.eq.s32.totalorder %s18, 0
    %p123 = por %p121, %p122
    %p124 = scmp.ne.s32.totalorder %s112, %s113
    %p125 = scmp.eq.s32.totalorder %s19, 1
    %p126 = por %p124, %p125
    %p128 = scmp.ne.s32.totalorder %s113, %s127
    %p129 = scmp.eq.s32.totalorder %s19, 0
    %p130 = por %p128, %p129
    %s132 = sadd.s32 %s131, 1
    %p135 = scmp.eq.s32.totalorder %s13, 1
    %p136 = scmp.ne.s32.totalorder %s131, %s133
    %p137 = scmp.eq.s32.totalorder %s13, 0
    %p138 = por %p136, %p137
    %p139 = scmp.ne.s32.totalorder %s131, %s133
    %p140 = scmp.eq.s32.totalorder %s18, 1
    %p141 = por %p139, %p140
    %p142 = scmp.ne.s32.totalorder %s133, %s134
    %p143 = scmp.eq.s32.totalorder %s18, 0
    %p144 = por %p142, %p143
    %p145 = scmp.ne.s32.totalorder %s133, %s134
    %p146 = scmp.eq.s32.totalorder %s19, 1
    %p147 = por %p145, %p146
    %p149 = scmp.ne.s32.totalorder %s134, %s148
    %p150 = scmp.eq.s32.totalorder %s19, 0
    %p151 = por %p149, %p150
    %s153 = sadd.s32 %s152, 1
    %p156 = scmp.eq.s32.totalorder %s13, 1
    %p157 = scmp.ne.s32.totalorder %s152, %s154
    %p158 = scmp.eq.s32.totalorder %s13, 0
    %p159 = por %p157, %p158
    %p160 = scmp.ne.s32.totalorder %s152, %s154
    %p161 = scmp.eq.s32.totalorder %s18, 1
    %p162 = por %p160, %p161
    %p163 = scmp.ne.s32.totalorder %s154, %s155
    %p164 = scmp.eq.s32.totalorder %s18, 0
    %p165 = por %p163, %p164
    %p166 = scmp.ne.s32.totalorder %s154, %s155
    %p167 = scmp.eq.s32.totalorder %s19, 1
    %p168 = por %p166, %p167
    %p170 = scmp.ne.s32.totalorder %s155, %s169
    %p171 = scmp.eq.s32.totalorder %s19, 0
    %p172 = por %p170, %p171
    %s173 = ssub.s32 %s13, %s20
    %p174 = scmp.eq.s32.totalorder %s173, 0
    %s176 = sadd.s32 %s175, 1
    %s177 = scalar_select %p174, %s175, %s176
    %p180 = pneg %p174
    %p181 = scmp.eq.s32.totalorder %s13, 1
    %p182 = por %p180, %p181
    %p183 = scmp.ne.s32.totalorder %s175, %s178
    %p184 = scmp.eq.s32.totalorder %s13, 0
    %p185 = por %p183, %p184
    %p186 = scmp.ne.s32.totalorder %s175, %s178
    %p187 = scmp.eq.s32.totalorder %s18, 1
    %p188 = por %p186, %p187
    %p189 = scmp.ne.s32.totalorder %s178, %s179
    %p190 = scmp.eq.s32.totalorder %s18, 0
    %p191 = por %p189, %p190
    %p192 = scmp.ne.s32.totalorder %s178, %s179
    %p193 = scmp.eq.s32.totalorder %s19, 1
    %p194 = por %p192, %p193
    %p196 = scmp.ne.s32.totalorder %s179, %s195
    %p197 = scmp.eq.s32.totalorder %s19, 0
    %p198 = por %p196, %p197
    %p199 = scmp.le.s32.totalorder 1, %s13
    %p200 = scmp.lt.s32.totalorder %s13, 3
    %p201 = pnand %p199, %p200
    %p202 = pneg %p201
    // Predicated region
    $region9: #{down_forward.1} parent=5 // pred_check
      _
    $region10: #{down_forward.1} parent=5 // pred_check_branch
      %204 = sbr.rel (%p201) target = $region12
    $region11: #{down_forward.1} parent=5 // pred_region
      %s205 = ssub.s32 %s13, 1
      // Predicated region
      $region13: #{down_forward.1} parent=11 // pred_check
        %p206 = pneg %p60
      $region14: #{down_forward.1} parent=11 // pred_check_branch
        %208 = sbr.rel (%p206) target = $region16
      $region15: #{down_forward.1} parent=11 // pred_region
        _
      $region16: #{down_forward.1} parent=11 // pred_fallthru
        _
      // Predicated region
      $region17: #{down_forward.1} parent=11 // pred_check
        %p209 = pneg %p81
      $region18: #{down_forward.1} parent=11 // pred_check_branch
        %211 = sbr.rel (%p209) target = $region20
      $region19: #{down_forward.1} parent=11 // pred_region
        _
      $region20: #{down_forward.1} parent=11 // pred_fallthru
        _
      // Predicated region
      $region21: #{down_forward.1} parent=11 // pred_check
        %p212 = pneg %p102
      $region22: #{down_forward.1} parent=11 // pred_check_branch
        %214 = sbr.rel (%p212) target = $region24
      $region23: #{down_forward.1} parent=11 // pred_region
        _
      $region24: #{down_forward.1} parent=11 // pred_fallthru
        _
      // Predicated region
      $region25: #{down_forward.1} parent=11 // pred_check
        %p215 = pneg %p123
      $region26: #{down_forward.1} parent=11 // pred_check_branch
        %217 = sbr.rel (%p215) target = $region28
      $region27: #{down_forward.1} parent=11 // pred_region
        _
      $region28: #{down_forward.1} parent=11 // pred_fallthru
        _
      // Predicated region
      $region29: #{down_forward.1} parent=11 // pred_check
        %p218 = pneg %p144
      $region30: #{down_forward.1} parent=11 // pred_check_branch
        %220 = sbr.rel (%p218) target = $region32
      $region31: #{down_forward.1} parent=11 // pred_region
        _
      $region32: #{down_forward.1} parent=11 // pred_fallthru
        _
      // Predicated region
      $region33: #{down_forward.1} parent=11 // pred_check
        %p221 = pneg %p165
      $region34: #{down_forward.1} parent=11 // pred_check_branch
        %223 = sbr.rel (%p221) target = $region36
      $region35: #{down_forward.1} parent=11 // pred_region
        _
      $region36: #{down_forward.1} parent=11 // pred_fallthru
        _
    $region12: #{down_forward.1} parent=5 // pred_fallthru
      _
    %p224 = scmp.lt.s32.totalorder %s13, 2
    // Predicated region
    $region37: #{down_forward.1} parent=5 // pred_check
      %p225 = pneg %p224
    $region38: #{down_forward.1} parent=5 // pred_check_branch
      %227 = sbr.rel (%p225) target = $region40
    $region39: #{down_forward.1} parent=5 // pred_region
      // Predicated region
      $region41: #{down_forward.1} parent=39 // pred_check
        %p228 = pneg %p33
      $region42: #{down_forward.1} parent=39 // pred_check_branch
        %230 = sbr.rel (%p228) target = $region44
      $region43: #{down_forward.1} parent=39 // pred_region
        %p231 = scmp.lt.s32.totalorder %s13, 1
        %s232 = scalar_select %p231, %s13, 1
        %s233 = smul.addr %s232, 72
        %s234 = smul.addr %s233, 4
        %s235 = scalar_lea.vmem %s0, %s234
      $region44: #{down_forward.1} parent=39 // pred_fallthru
        _
    $region40: #{down_forward.1} parent=5 // pred_fallthru
      _
    %p236 = scmp.le.s32.totalorder 1, %s13
    %p237 = scmp.lt.s32.totalorder %s13, 3
    %p238 = pnand %p236, %p237
    %p239 = pneg %p238
    // Predicated region
    $region45: #{down_forward.1} parent=5 // pred_check
      _
    $region46: #{down_forward.1} parent=5 // pred_check_branch
      %241 = sbr.rel (%p238) target = $region48
    $region47: #{down_forward.1} parent=5 // pred_region
      %s242 = ssub.s32 %s13, 1
      %p243 = scmp.lt.s32.totalorder %s18, 1
      %s244 = scalar_select %p243, %s18, 1
      %s245 = smul.addr %s244, 72
      %s246 = smul.addr %s245, 4
      %s247 = scalar_lea.vmem %s0, %s246
      %p248 = pneg %p39
      %p249 = pneg %p36
      %p250 = pneg %p60
      %p251 = pneg %p57
      %p252 = pneg %p81
      %p253 = pneg %p78
      %p254 = pneg %p102
      %p255 = pneg %p99
      %p256 = pneg %p123
      %p257 = pneg %p120
      %p258 = pneg %p144
      %p259 = pneg %p141
      %p260 = pneg %p165
      %p261 = pneg %p162
      %p262 = pneg %p191
      %p263 = pneg %p188
      %p264 = scmp.lt.s32.totalorder %s18, 1
      %s265 = scalar_select %p264, %s18, 1
      %s266 = smul.addr %s265, 8
      %s267 = smul.addr %s266, 8
      %s268 = scalar_lea.vmem %s7, %s267
      %p269 = scmp.lt.s32.totalorder %s18, 1
      %s270 = scalar_select %p269, %s18, 1
      %s271 = smul.addr %s270, 72
      %s272 = smul.addr %s271, 4
      %s273 = scalar_lea.vmem %s0, %s272
      %p274 = scmp.lt.s32.totalorder %s18, 1
      %s275 = scalar_select %p274, %s18, 1
      %s276 = smul.addr %s275, 8
      %s277 = smul.addr %s276, 8
      %s278 = scalar_lea.vmem %s7, %s277
      %v280 = vld [vmem:[%s273] sm:$0xf]
      %v281 = vld [vmem:[%s273 + $0x4] sm:$0x1]
      %v282 = vld [vmem:[%s273 + $0x8] sm:$0xf]
      %v283 = vld [vmem:[%s273 + $0xc] sm:$0x1]
      %v284 = vld [vmem:[%s273 + $0x10] sm:$0xf]
      %v285 = vld [vmem:[%s273 + $0x14] sm:$0x1]
      %v286 = vld [vmem:[%s273 + $0x18] sm:$0xf]
      %v287 = vld [vmem:[%s273 + $0x1c] sm:$0x1]
      %v288 = vld [vmem:[%s273 + $0x20] sm:$0xf]
      %v289 = vld [vmem:[%s273 + $0x24] sm:$0x1]
      %v290 = vld [vmem:[%s273 + $0x28] sm:$0xf]
      %v291 = vld [vmem:[%s273 + $0x2c] sm:$0x1]
      %v292 = vld [vmem:[%s273 + $0x30] sm:$0xf]
      %v293 = vld [vmem:[%s273 + $0x34] sm:$0x1]
      %v294 = vld [vmem:[%s273 + $0x38] sm:$0xf]
      %v295 = vld [vmem:[%s273 + $0x3c] sm:$0x1]
      %v296 = vld [vmem:[%s273 + $0x40] sm:$0xf]
      %v297 = vld [vmem:[%s273 + $0x44] sm:$0x1]
      %v298 = vld [vmem:[%s273 + $0x48] sm:$0xf]
      %v299 = vld [vmem:[%s273 + $0x50] sm:$0xf]
      %v300 = vld [vmem:[%s273 + $0x58] sm:$0xf]
      %v301 = vld [vmem:[%s273 + $0x60] sm:$0xf]
      %v302 = vld [vmem:[%s273 + $0x68] sm:$0xf]
      %v303 = vld [vmem:[%s273 + $0x70] sm:$0xf]
      %v304 = vld [vmem:[%s273 + $0x78] sm:$0xf]
      %v305 = vld [vmem:[%s273 + $0x80] sm:$0xf]
      %v306 = vld [vmem:[%s273 + $0x88] sm:$0xf]
      %v307 = vld [vmem:[%s273 + $0x90] sm:$0xf]
      %v308 = vld [vmem:[%s273 + $0x94] sm:$0x1]
      %v309 = vld [vmem:[%s273 + $0x98] sm:$0xf]
      %v310 = vld [vmem:[%s273 + $0x9c] sm:$0x1]
      %v311 = vld [vmem:[%s273 + $0xa0] sm:$0xf]
      %v312 = vld [vmem:[%s273 + $0xa4] sm:$0x1]
      %v313 = vld [vmem:[%s273 + $0xa8] sm:$0xf]
      %v314 = vld [vmem:[%s273 + $0xac] sm:$0x1]
      %v315 = vld [vmem:[%s273 + $0xb0] sm:$0xf]
      %v316 = vld [vmem:[%s273 + $0xb4] sm:$0x1]
      %v317 = vld [vmem:[%s273 + $0xb8] sm:$0xf]
      %v318 = vld [vmem:[%s273 + $0xbc] sm:$0x1]
      %v319 = vld [vmem:[%s273 + $0xc0] sm:$0xf]
      %v320 = vld [vmem:[%s273 + $0xc4] sm:$0x1]
      %v321 = vld [vmem:[%s273 + $0xc8] sm:$0xf]
      %v322 = vld [vmem:[%s273 + $0xcc] sm:$0x1]
      %v323 = vld [vmem:[%s273 + $0xd8] sm:$0xf]
      %v324 = vld [vmem:[%s273 + $0xe0] sm:$0xf]
      %v325 = vld [vmem:[%s273 + $0xe8] sm:$0xf]
      %v326 = vld [vmem:[%s273 + $0xf0] sm:$0xf]
      %v327 = vld [vmem:[%s273 + $0xf8] sm:$0xf]
      %v328 = vld [vmem:[%s273 + $0x100] sm:$0xf]
      %v329 = vld [vmem:[%s273 + $0x108] sm:$0xf]
      %v330 = vld [vmem:[%s273 + $0x110] sm:$0xf]
      %v331 = vld [vmem:[%s1] sm:$0xf]
      %s332 = scalar_lea.vmem %s1, 4
      %v333 = vld [vmem:[%s332] sm:$0xf]
      %v342 = vunpack.c.l.b16 %v298
      %v343 = vunpack.c.l.b16 %v299
      %v344 = vunpack.c.l.b16 %v300
      %v345 = vunpack.c.l.b16 %v301
      %v346 = vunpack.c.l.b16 %v302
      %v347 = vunpack.c.l.b16 %v303
      %v348 = vunpack.c.l.b16 %v304
      %v349 = vunpack.c.l.b16 %v305
      %v350 = vpack.c.b16 %v343, %v342
      %v351 = vpack.c.b16 %v345, %v344
      %v352 = vpack.c.b16 %v347, %v346
      %v353 = vpack.c.b16 %v349, %v348
      %vm354 = vcmask 64512
      %v356 = vsel %vm354, %v350, 0
      %v359 = vsel %vm354, %v351, 0
      %v362 = vsel %vm354, %v352, 0
      %v365 = vsel %vm354, %v353, 0
      %vm367 = vcmask 1043456
      %v369 = vsel %vm367, %v333, 0
      %371 = vmatprep.subr.bf16.mxu0 0
      %372 = vmatpush1.bf16.msra.mxu0 0
      %373 = vmatprep.subr.bf16.mxu0 0
      %374 = vmatpush1.bf16.msra.mxu0 0
      %375 = vmatprep.subr.bf16.mxu0 0
      %376 = vmatpush1.bf16.msra.mxu0 0
      %377 = vmatprep.subr.bf16.mxu0 0
      %378 = vmatpush1.bf16.msra.mxu0 0
      %379 = vmatprep.subr.bf16.mxu0 0
      %380 = vmatpush1.bf16.msra.mxu0 0
      %381 = vmatprep.subr.bf16.mxu0 0
      %382 = vmatpush1.bf16.msra.mxu0 0
      %383 = vmatprep.subr.bf16.mxu0 0
      %384 = vmatpush1.bf16.msra.mxu0 0
      %385 = vmatprep.subr.bf16.mxu0 0
      %386 = vmatpush1.bf16.msra.mxu0 %v369
      %387 = vmatprep.subr.bf16.mxu0 0
      %388 = vmatpush2.bf16.msra.mxu0 0
      %389 = vmatprep.subr.bf16.mxu0 0
      %390 = vmatpush2.bf16.msra.mxu0 0
      %391 = vmatprep.subr.bf16.mxu0 0
      %392 = vmatpush2.bf16.msra.mxu0 0
      %393 = vmatprep.subr.bf16.mxu0 0
      %394 = vmatpush2.bf16.msra.mxu0 0
      %395 = vmatprep.subr.bf16.mxu0 0
      %396 = vmatpush2.bf16.msra.mxu0 0
      %397 = vmatprep.subr.bf16.mxu0 0
      %398 = vmatpush2.bf16.msra.mxu0 0
      %399 = vmatprep.subr.bf16.mxu0 0
      %400 = vmatpush2.bf16.msra.mxu0 0
      %401 = vmatprep.subr.bf16.mxu0 0
      %402 = vmatpush2.bf16.msra.mxu0 0
      %403 = vmatprep.mubr.bf16.mxu0 0
      %404 = vmatmul.mubr.bf16.gmra.mxu0 %v356
      %v405 = vpop.f32.mrf.mxu0
      %v406 = vadd.f32 0.0, %v405
      %v407 = vpop.f32.mrf.mxu0
      %v408 = vpop.f32.mrf.mxu0
      %v409 = vadd.f32 0.0, %v408
      %v410 = vpop.f32.mrf.mxu0
      %411 = vmatprep.mubr.bf16.mxu0 0
      %412 = vmatmul.mubr.bf16.gmra.mxu0 %v359
      %v413 = vpop.f32.mrf.mxu0
      %v414 = vadd.f32 0.0, %v413
      %v415 = vpop.f32.mrf.mxu0
      %v416 = vpop.f32.mrf.mxu0
      %v417 = vadd.f32 0.0, %v416
      %v418 = vpop.f32.mrf.mxu0
      %419 = vmatprep.mubr.bf16.mxu0 0
      %420 = vmatmul.mubr.bf16.gmra.mxu0 %v362
      %v421 = vpop.f32.mrf.mxu0
      %v422 = vadd.f32 0.0, %v421
      %v423 = vpop.f32.mrf.mxu0
      %v424 = vpop.f32.mrf.mxu0
      %v425 = vadd.f32 0.0, %v424
      %v426 = vpop.f32.mrf.mxu0
      %427 = vmatprep.mubr.bf16.mxu0 0
      %428 = vmatmul.mubr.bf16.gmra.mxu0 %v365
      %v429 = vpop.f32.mrf.mxu0
      %v430 = vadd.f32 0.0, %v429
      %v431 = vpop.f32.mrf.mxu0
      %v432 = vpop.f32.mrf.mxu0
      %v433 = vadd.f32 0.0, %v432
      %v434 = vpop.f32.mrf.mxu0
      %435 = vdwg.mxu0
      %v444 = vunpack.c.l.b16 %v280
      %v445 = vunpack.c.l.b16 %v282
      %v446 = vunpack.c.l.b16 %v284
      %v447 = vunpack.c.l.b16 %v286
      %v448 = vunpack.c.l.b16 %v288
      %v449 = vunpack.c.l.b16 %v290
      %v450 = vunpack.c.l.b16 %v292
      %v451 = vunpack.c.l.b16 %v294
      %v452 = vpack.c.b16 %v445, %v444
      %v453 = vpack.c.b16 %v447, %v446
      %v454 = vpack.c.b16 %v449, %v448
      %v455 = vpack.c.b16 %v451, %v450
      %v457 = vsel %vm354, %v452, 0
      %v460 = vsel %vm354, %v453, 0
      %v463 = vsel %vm354, %v454, 0
      %v466 = vsel %vm354, %v455, 0
      %v469 = vsel %vm367, %v331, 0
      %471 = vmatprep.subr.bf16.mxu0 0
      %472 = vmatpush1.bf16.msra.mxu0 0
      %473 = vmatprep.subr.bf16.mxu0 0
      %474 = vmatpush1.bf16.msra.mxu0 0
      %475 = vmatprep.subr.bf16.mxu0 0
      %476 = vmatpush1.bf16.msra.mxu0 0
      %477 = vmatprep.subr.bf16.mxu0 0
      %478 = vmatpush1.bf16.msra.mxu0 0
      %479 = vmatprep.subr.bf16.mxu0 0
      %480 = vmatpush1.bf16.msra.mxu0 0
      %481 = vmatprep.subr.bf16.mxu0 0
      %482 = vmatpush1.bf16.msra.mxu0 0
      %483 = vmatprep.subr.bf16.mxu0 0
      %484 = vmatpush1.bf16.msra.mxu0 0
      %485 = vmatprep.subr.bf16.mxu0 0
      %486 = vmatpush1.bf16.msra.mxu0 %v469
      %487 = vmatprep.subr.bf16.mxu0 0
      %488 = vmatpush2.bf16.msra.mxu0 0
      %489 = vmatprep.subr.bf16.mxu0 0
      %490 = vmatpush2.bf16.msra.mxu0 0
      %491 = vmatprep.subr.bf16.mxu0 0
      %492 = vmatpush2.bf16.msra.mxu0 0
      %493 = vmatprep.subr.bf16.mxu0 0
      %494 = vmatpush2.bf16.msra.mxu0 0
      %495 = vmatprep.subr.bf16.mxu0 0
      %496 = vmatpush2.bf16.msra.mxu0 0
      %497 = vmatprep.subr.bf16.mxu0 0
      %498 = vmatpush2.bf16.msra.mxu0 0
      %499 = vmatprep.subr.bf16.mxu0 0
      %500 = vmatpush2.bf16.msra.mxu0 0
      %501 = vmatprep.subr.bf16.mxu0 0
      %502 = vmatpush2.bf16.msra.mxu0 0
      %503 = vmatprep.mubr.bf16.mxu0 0
      %504 = vmatmul.mubr.bf16.gmra.mxu0 %v457
      %v505 = vpop.f32.mrf.mxu0
      %v506 = vadd.f32 %v406, %v505
      %v507 = vpop.f32.mrf.mxu0
      %v508 = vpop.f32.mrf.mxu0
      %v509 = vadd.f32 %v409, %v508
      %v510 = vpop.f32.mrf.mxu0
      %511 = vmatprep.mubr.bf16.mxu0 0
      %512 = vmatmul.mubr.bf16.gmra.mxu0 %v460
      %v513 = vpop.f32.mrf.mxu0
      %v514 = vadd.f32 %v414, %v513
      %v515 = vpop.f32.mrf.mxu0
      %v516 = vpop.f32.mrf.mxu0
      %v517 = vadd.f32 %v417, %v516
      %v518 = vpop.f32.mrf.mxu0
      %519 = vmatprep.mubr.bf16.mxu0 0
      %520 = vmatmul.mubr.bf16.gmra.mxu0 %v463
      %v521 = vpop.f32.mrf.mxu0
      %v522 = vadd.f32 %v422, %v521
      %v523 = vpop.f32.mrf.mxu0
      %v524 = vpop.f32.mrf.mxu0
      %v525 = vadd.f32 %v425, %v524
      %v526 = vpop.f32.mrf.mxu0
      %527 = vmatprep.mubr.bf16.mxu0 0
      %528 = vmatmul.mubr.bf16.gmra.mxu0 %v466
      %v529 = vpop.f32.mrf.mxu0
      %v530 = vadd.f32 %v430, %v529
      %v531 = vpop.f32.mrf.mxu0
      %v532 = vpop.f32.mrf.mxu0
      %v533 = vadd.f32 %v433, %v532
      %v534 = vpop.f32.mrf.mxu0
      %535 = vdwg.mxu0
      %vm536 = vsmask.f32 3328
      %vm537 = vsmask.f32 7440
      %vm538 = vmor %vm536, %vm537
      %v540 = vshrl.u32 %v280, 16
      %v542 = vrot.slane %v540, 4
      %v543 = vshll.u32 %v280, 16
      %v545 = vrot.slane %v543, 5
      %v546 = vor.u32 %v542, %v545
      %v547 = vrot.slane %v546, 4
      %v549 = vshll.u32 %v281, 16
      %v551 = vrot.slane %v549, 5
      %v552 = vsel %vm538, %v547, %v551
      %v554 = vshrl.u32 %v282, 16
      %v556 = vrot.slane %v554, 4
      %v557 = vshll.u32 %v282, 16
      %v559 = vrot.slane %v557, 5
      %v560 = vor.u32 %v556, %v559
      %v561 = vrot.slane %v560, 4
      %v563 = vshll.u32 %v283, 16
      %v565 = vrot.slane %v563, 5
      %v566 = vsel %vm538, %v561, %v565
      %v568 = vshrl.u32 %v284, 16
      %v570 = vrot.slane %v568, 4
      %v571 = vshll.u32 %v284, 16
      %v573 = vrot.slane %v571, 5
      %v574 = vor.u32 %v570, %v573
      %v575 = vrot.slane %v574, 4
      %v577 = vshll.u32 %v285, 16
      %v579 = vrot.slane %v577, 5
      %v580 = vsel %vm538, %v575, %v579
      %v582 = vshrl.u32 %v286, 16
      %v584 = vrot.slane %v582, 4
      %v585 = vshll.u32 %v286, 16
      %v587 = vrot.slane %v585, 5
      %v588 = vor.u32 %v584, %v587
      %v589 = vrot.slane %v588, 4
      %v591 = vshll.u32 %v287, 16
      %v593 = vrot.slane %v591, 5
      %v594 = vsel %vm538, %v589, %v593
      %v596 = vshrl.u32 %v288, 16
      %v598 = vrot.slane %v596, 4
      %v599 = vshll.u32 %v288, 16
      %v601 = vrot.slane %v599, 5
      %v602 = vor.u32 %v598, %v601
      %v603 = vrot.slane %v602, 4
      %v605 = vshll.u32 %v289, 16
      %v607 = vrot.slane %v605, 5
      %v608 = vsel %vm538, %v603, %v607
      %v610 = vshrl.u32 %v290, 16
      %v612 = vrot.slane %v610, 4
      %v613 = vshll.u32 %v290, 16
      %v615 = vrot.slane %v613, 5
      %v616 = vor.u32 %v612, %v615
      %v617 = vrot.slane %v616, 4
      %v619 = vshll.u32 %v291, 16
      %v621 = vrot.slane %v619, 5
      %v622 = vsel %vm538, %v617, %v621
      %v624 = vshrl.u32 %v292, 16
      %v626 = vrot.slane %v624, 4
      %v627 = vshll.u32 %v292, 16
      %v629 = vrot.slane %v627, 5
      %v630 = vor.u32 %v626, %v629
      %v631 = vrot.slane %v630, 4
      %v633 = vshll.u32 %v293, 16
      %v635 = vrot.slane %v633, 5
      %v636 = vsel %vm538, %v631, %v635
      %v638 = vshrl.u32 %v294, 16
      %v640 = vrot.slane %v638, 4
      %v641 = vshll.u32 %v294, 16
      %v643 = vrot.slane %v641, 5
      %v644 = vor.u32 %v640, %v643
      %v645 = vrot.slane %v644, 4
      %v647 = vshll.u32 %v295, 16
      %v649 = vrot.slane %v647, 5
      %v650 = vsel %vm538, %v645, %v649
      %s651 = scalar_lea.vmem %s1, 8
      %v652 = vld [vmem:[%s651] sm:$0xf]
      %v653 = vunpack.c.l.b16 %v552
      %v654 = vunpack.c.l.b16 %v566
      %v655 = vunpack.c.l.b16 %v580
      %v656 = vunpack.c.l.b16 %v594
      %v657 = vunpack.c.l.b16 %v608
      %v658 = vunpack.c.l.b16 %v622
      %v659 = vunpack.c.l.b16 %v636
      %v660 = vunpack.c.l.b16 %v650
      %v661 = vpack.c.b16 %v654, %v653
      %v662 = vpack.c.b16 %v656, %v655
      %v663 = vpack.c.b16 %v658, %v657
      %v664 = vpack.c.b16 %v660, %v659
      %v666 = vsel %vm354, %v661, 0
      %v669 = vsel %vm354, %v662, 0
      %v672 = vsel %vm354, %v663, 0
      %v675 = vsel %vm354, %v664, 0
      %v678 = vsel %vm367, %v652, 0
      %680 = vmatprep.subr.bf16.mxu0 0
      %681 = vmatpush1.bf16.msra.mxu0 0
      %682 = vmatprep.subr.bf16.mxu0 0
      %683 = vmatpush1.bf16.msra.mxu0 0
      %684 = vmatprep.subr.bf16.mxu0 0
      %685 = vmatpush1.bf16.msra.mxu0 0
      %686 = vmatprep.subr.bf16.mxu0 0
      %687 = vmatpush1.bf16.msra.mxu0 0
      %688 = vmatprep.subr.bf16.mxu0 0
      %689 = vmatpush1.bf16.msra.mxu0 0
      %690 = vmatprep.subr.bf16.mxu0 0
      %691 = vmatpush1.bf16.msra.mxu0 0
      %692 = vmatprep.subr.bf16.mxu0 0
      %693 = vmatpush1.bf16.msra.mxu0 0
      %694 = vmatprep.subr.bf16.mxu0 0
      %695 = vmatpush1.bf16.msra.mxu0 %v678
      %696 = vmatprep.subr.bf16.mxu0 0
      %697 = vmatpush2.bf16.msra.mxu0 0
      %698 = vmatprep.subr.bf16.mxu0 0
      %699 = vmatpush2.bf16.msra.mxu0 0
      %700 = vmatprep.subr.bf16.mxu0 0
      %701 = vmatpush2.bf16.msra.mxu0 0
      %702 = vmatprep.subr.bf16.mxu0 0
      %703 = vmatpush2.bf16.msra.mxu0 0
      %704 = vmatprep.subr.bf16.mxu0 0
      %705 = vmatpush2.bf16.msra.mxu0 0
      %706 = vmatprep.subr.bf16.mxu0 0
      %707 = vmatpush2.bf16.msra.mxu0 0
      %708 = vmatprep.subr.bf16.mxu0 0
      %709 = vmatpush2.bf16.msra.mxu0 0
      %710 = vmatprep.subr.bf16.mxu0 0
      %711 = vmatpush2.bf16.msra.mxu0 0
      %712 = vmatprep.mubr.bf16.mxu0 0
      %713 = vmatmul.mubr.bf16.gmra.mxu0 %v666
      %v714 = vpop.f32.mrf.mxu0
      %v715 = vadd.f32 0.0, %v714
      %v716 = vpop.f32.mrf.mxu0
      %v717 = vpop.f32.mrf.mxu0
      %v718 = vadd.f32 0.0, %v717
      %v719 = vpop.f32.mrf.mxu0
      %720 = vmatprep.mubr.bf16.mxu0 0
      %721 = vmatmul.mubr.bf16.gmra.mxu0 %v669
      %v722 = vpop.f32.mrf.mxu0
      %v723 = vadd.f32 0.0, %v722
      %v724 = vpop.f32.mrf.mxu0
      %v725 = vpop.f32.mrf.mxu0
      %v726 = vadd.f32 0.0, %v725
      %v727 = vpop.f32.mrf.mxu0
      %728 = vmatprep.mubr.bf16.mxu0 0
      %729 = vmatmul.mubr.bf16.gmra.mxu0 %v672
      %v730 = vpop.f32.mrf.mxu0
      %v731 = vadd.f32 0.0, %v730
      %v732 = vpop.f32.mrf.mxu0
      %v733 = vpop.f32.mrf.mxu0
      %v734 = vadd.f32 0.0, %v733
      %v735 = vpop.f32.mrf.mxu0
      %736 = vmatprep.mubr.bf16.mxu0 0
      %737 = vmatmul.mubr.bf16.gmra.mxu0 %v675
      %v738 = vpop.f32.mrf.mxu0
      %v739 = vadd.f32 0.0, %v738
      %v740 = vpop.f32.mrf.mxu0
      %v741 = vpop.f32.mrf.mxu0
      %v742 = vadd.f32 0.0, %v741
      %v743 = vpop.f32.mrf.mxu0
      %744 = vdwg.mxu0
      %v745 = vadd.f32 %v506, %v715
      %v746 = vadd.f32 %v509, %v718
      %v747 = vadd.f32 %v514, %v723
      %v748 = vadd.f32 %v517, %v726
      %v749 = vadd.f32 %v522, %v731
      %v750 = vadd.f32 %v525, %v734
      %v751 = vadd.f32 %v530, %v739
      %v752 = vadd.f32 %v533, %v742
      %s753 = scalar_lea.vmem %s1, 12
      %v754 = vld [vmem:[%s753] sm:$0xf]
      %v763 = vunpack.c.l.b16 %v307
      %v764 = vunpack.c.l.b16 %v309
      %v765 = vunpack.c.l.b16 %v311
      %v766 = vunpack.c.l.b16 %v313
      %v767 = vunpack.c.l.b16 %v315
      %v768 = vunpack.c.l.b16 %v317
      %v769 = vunpack.c.l.b16 %v319
      %v770 = vunpack.c.l.b16 %v321
      %v771 = vpack.c.b16 %v764, %v763
      %v772 = vpack.c.b16 %v766, %v765
      %v773 = vpack.c.b16 %v768, %v767
      %v774 = vpack.c.b16 %v770, %v769
      %v776 = vsel %vm354, %v771, 0
      %v779 = vsel %vm354, %v772, 0
      %v782 = vsel %vm354, %v773, 0
      %v785 = vsel %vm354, %v774, 0
      %v788 = vsel %vm367, %v754, 0
      %790 = vmatprep.subr.bf16.mxu0 0
      %791 = vmatpush1.bf16.msra.mxu0 0
      %792 = vmatprep.subr.bf16.mxu0 0
      %793 = vmatpush1.bf16.msra.mxu0 0
      %794 = vmatprep.subr.bf16.mxu0 0
      %795 = vmatpush1.bf16.msra.mxu0 0
      %796 = vmatprep.subr.bf16.mxu0 0
      %797 = vmatpush1.bf16.msra.mxu0 0
      %798 = vmatprep.subr.bf16.mxu0 0
      %799 = vmatpush1.bf16.msra.mxu0 0
      %800 = vmatprep.subr.bf16.mxu0 0
      %801 = vmatpush1.bf16.msra.mxu0 0
      %802 = vmatprep.subr.bf16.mxu0 0
      %803 = vmatpush1.bf16.msra.mxu0 0
      %804 = vmatprep.subr.bf16.mxu0 0
      %805 = vmatpush1.bf16.msra.mxu0 %v788
      %806 = vmatprep.subr.bf16.mxu0 0
      %807 = vmatpush2.bf16.msra.mxu0 0
      %808 = vmatprep.subr.bf16.mxu0 0
      %809 = vmatpush2.bf16.msra.mxu0 0
      %810 = vmatprep.subr.bf16.mxu0 0
      %811 = vmatpush2.bf16.msra.mxu0 0
      %812 = vmatprep.subr.bf16.mxu0 0
      %813 = vmatpush2.bf16.msra.mxu0 0
      %814 = vmatprep.subr.bf16.mxu0 0
      %815 = vmatpush2.bf16.msra.mxu0 0
      %816 = vmatprep.subr.bf16.mxu0 0
      %817 = vmatpush2.bf16.msra.mxu0 0
      %818 = vmatprep.subr.bf16.mxu0 0
      %819 = vmatpush2.bf16.msra.mxu0 0
      %820 = vmatprep.subr.bf16.mxu0 0
      %821 = vmatpush2.bf16.msra.mxu0 0
      %822 = vmatprep.mubr.bf16.mxu0 0
      %823 = vmatmul.mubr.bf16.gmra.mxu0 %v776
      %v824 = vpop.f32.mrf.mxu0
      %v825 = vadd.f32 0.0, %v824
      %v826 = vpop.f32.mrf.mxu0
      %v827 = vpop.f32.mrf.mxu0
      %v828 = vadd.f32 0.0, %v827
      %v829 = vpop.f32.mrf.mxu0
      %830 = vmatprep.mubr.bf16.mxu0 0
      %831 = vmatmul.mubr.bf16.gmra.mxu0 %v779
      %v832 = vpop.f32.mrf.mxu0
      %v833 = vadd.f32 0.0, %v832
      %v834 = vpop.f32.mrf.mxu0
      %v835 = vpop.f32.mrf.mxu0
      %v836 = vadd.f32 0.0, %v835
      %v837 = vpop.f32.mrf.mxu0
      %838 = vmatprep.mubr.bf16.mxu0 0
      %839 = vmatmul.mubr.bf16.gmra.mxu0 %v782
      %v840 = vpop.f32.mrf.mxu0
      %v841 = vadd.f32 0.0, %v840
      %v842 = vpop.f32.mrf.mxu0
      %v843 = vpop.f32.mrf.mxu0
      %v844 = vadd.f32 0.0, %v843
      %v845 = vpop.f32.mrf.mxu0
      %846 = vmatprep.mubr.bf16.mxu0 0
      %847 = vmatmul.mubr.bf16.gmra.mxu0 %v785
      %v848 = vpop.f32.mrf.mxu0
      %v849 = vadd.f32 0.0, %v848
      %v850 = vpop.f32.mrf.mxu0
      %v851 = vpop.f32.mrf.mxu0
      %v852 = vadd.f32 0.0, %v851
      %v853 = vpop.f32.mrf.mxu0
      %854 = vdwg.mxu0
      %v855 = vadd.f32 %v745, %v825
      %v856 = vadd.f32 %v746, %v828
      %v857 = vadd.f32 %v747, %v833
      %v858 = vadd.f32 %v748, %v836
      %v859 = vadd.f32 %v749, %v841
      %v860 = vadd.f32 %v750, %v844
      %v861 = vadd.f32 %v751, %v849
      %v862 = vadd.f32 %v752, %v852
      %s863 = scalar_lea.vmem %s1, 16
      %v864 = vld [vmem:[%s863] sm:$0xf]
      %v873 = vunpack.c.l.b16 %v323
      %v874 = vunpack.c.l.b16 %v324
      %v875 = vunpack.c.l.b16 %v325
      %v876 = vunpack.c.l.b16 %v326
      %v877 = vunpack.c.l.b16 %v327
      %v878 = vunpack.c.l.b16 %v328
      %v879 = vunpack.c.l.b16 %v329
      %v880 = vunpack.c.l.b16 %v330
      %v881 = vpack.c.b16 %v874, %v873
      %v882 = vpack.c.b16 %v876, %v875
      %v883 = vpack.c.b16 %v878, %v877
      %v884 = vpack.c.b16 %v880, %v879
      %v886 = vsel %vm354, %v881, 0
      %v889 = vsel %vm354, %v882, 0
      %v892 = vsel %vm354, %v883, 0
      %v895 = vsel %vm354, %v884, 0
      %v898 = vsel %vm367, %v864, 0
      %900 = vmatprep.subr.bf16.mxu0 0
      %901 = vmatpush1.bf16.msra.mxu0 0
      %902 = vmatprep.subr.bf16.mxu0 0
      %903 = vmatpush1.bf16.msra.mxu0 0
      %904 = vmatprep.subr.bf16.mxu0 0
      %905 = vmatpush1.bf16.msra.mxu0 0
      %906 = vmatprep.subr.bf16.mxu0 0
      %907 = vmatpush1.bf16.msra.mxu0 0
      %908 = vmatprep.subr.bf16.mxu0 0
      %909 = vmatpush1.bf16.msra.mxu0 0
      %910 = vmatprep.subr.bf16.mxu0 0
      %911 = vmatpush1.bf16.msra.mxu0 0
      %912 = vmatprep.subr.bf16.mxu0 0
      %913 = vmatpush1.bf16.msra.mxu0 0
      %914 = vmatprep.subr.bf16.mxu0 0
      %915 = vmatpush1.bf16.msra.mxu0 %v898
      %916 = vmatprep.subr.bf16.mxu0 0
      %917 = vmatpush2.bf16.msra.mxu0 0
      %918 = vmatprep.subr.bf16.mxu0 0
      %919 = vmatpush2.bf16.msra.mxu0 0
      %920 = vmatprep.subr.bf16.mxu0 0
      %921 = vmatpush2.bf16.msra.mxu0 0
      %922 = vmatprep.subr.bf16.mxu0 0
      %923 = vmatpush2.bf16.msra.mxu0 0
      %924 = vmatprep.subr.bf16.mxu0 0
      %925 = vmatpush2.bf16.msra.mxu0 0
      %926 = vmatprep.subr.bf16.mxu0 0
      %927 = vmatpush2.bf16.msra.mxu0 0
      %928 = vmatprep.subr.bf16.mxu0 0
      %929 = vmatpush2.bf16.msra.mxu0 0
      %930 = vmatprep.subr.bf16.mxu0 0
      %931 = vmatpush2.bf16.msra.mxu0 0
      %932 = vmatprep.mubr.bf16.mxu0 0
      %933 = vmatmul.mubr.bf16.gmra.mxu0 %v886
      %v934 = vpop.f32.mrf.mxu0
      %v935 = vadd.f32 0.0, %v934
      %v936 = vpop.f32.mrf.mxu0
      %v937 = vpop.f32.mrf.mxu0
      %v938 = vadd.f32 0.0, %v937
      %v939 = vpop.f32.mrf.mxu0
      %940 = vmatprep.mubr.bf16.mxu0 0
      %941 = vmatmul.mubr.bf16.gmra.mxu0 %v889
      %v942 = vpop.f32.mrf.mxu0
      %v943 = vadd.f32 0.0, %v942
      %v944 = vpop.f32.mrf.mxu0
      %v945 = vpop.f32.mrf.mxu0
      %v946 = vadd.f32 0.0, %v945
      %v947 = vpop.f32.mrf.mxu0
      %948 = vmatprep.mubr.bf16.mxu0 0
      %949 = vmatmul.mubr.bf16.gmra.mxu0 %v892
      %v950 = vpop.f32.mrf.mxu0
      %v951 = vadd.f32 0.0, %v950
      %v952 = vpop.f32.mrf.mxu0
      %v953 = vpop.f32.mrf.mxu0
      %v954 = vadd.f32 0.0, %v953
      %v955 = vpop.f32.mrf.mxu0
      %956 = vmatprep.mubr.bf16.mxu0 0
      %957 = vmatmul.mubr.bf16.gmra.mxu0 %v895
      %v958 = vpop.f32.mrf.mxu0
      %v959 = vadd.f32 0.0, %v958
      %v960 = vpop.f32.mrf.mxu0
      %v961 = vpop.f32.mrf.mxu0
      %v962 = vadd.f32 0.0, %v961
      %v963 = vpop.f32.mrf.mxu0
      %964 = vdwg.mxu0
      %v965 = vadd.f32 %v855, %v935
      %v966 = vadd.f32 %v856, %v938
      %v967 = vadd.f32 %v857, %v943
      %v968 = vadd.f32 %v858, %v946
      %v969 = vadd.f32 %v859, %v951
      %v970 = vadd.f32 %v860, %v954
      %v971 = vadd.f32 %v861, %v959
      %v972 = vadd.f32 %v862, %v962
      %v974 = vshrl.u32 %v307, 16
      %v976 = vrot.slane %v974, 4
      %v977 = vshll.u32 %v307, 16
      %v979 = vrot.slane %v977, 5
      %v980 = vor.u32 %v976, %v979
      %v981 = vrot.slane %v980, 4
      %v983 = vshll.u32 %v308, 16
      %v985 = vrot.slane %v983, 5
      %v986 = vsel %vm538, %v981, %v985
      %v988 = vshrl.u32 %v309, 16
      %v990 = vrot.slane %v988, 4
      %v991 = vshll.u32 %v309, 16
      %v993 = vrot.slane %v991, 5
      %v994 = vor.u32 %v990, %v993
      %v995 = vrot.slane %v994, 4
      %v997 = vshll.u32 %v310, 16
      %v999 = vrot.slane %v997, 5
      %v1000 = vsel %vm538, %v995, %v999
      %v1002 = vshrl.u32 %v311, 16
      %v1004 = vrot.slane %v1002, 4
      %v1005 = vshll.u32 %v311, 16
      %v1007 = vrot.slane %v1005, 5
      %v1008 = vor.u32 %v1004, %v1007
      %v1009 = vrot.slane %v1008, 4
      %v1011 = vshll.u32 %v312, 16
      %v1013 = vrot.slane %v1011, 5
      %v1014 = vsel %vm538, %v1009, %v1013
      %v1016 = vshrl.u32 %v313, 16
      %v1018 = vrot.slane %v1016, 4
      %v1019 = vshll.u32 %v313, 16
      %v1021 = vrot.slane %v1019, 5
      %v1022 = vor.u32 %v1018, %v1021
      %v1023 = vrot.slane %v1022, 4
      %v1025 = vshll.u32 %v314, 16
      %v1027 = vrot.slane %v1025, 5
      %v1028 = vsel %vm538, %v1023, %v1027
      %v1030 = vshrl.u32 %v315, 16
      %v1032 = vrot.slane %v1030, 4
      %v1033 = vshll.u32 %v315, 16
      %v1035 = vrot.slane %v1033, 5
      %v1036 = vor.u32 %v1032, %v1035
      %v1037 = vrot.slane %v1036, 4
      %v1039 = vshll.u32 %v316, 16
      %v1041 = vrot.slane %v1039, 5
      %v1042 = vsel %vm538, %v1037, %v1041
      %v1044 = vshrl.u32 %v317, 16
      %v1046 = vrot.slane %v1044, 4
      %v1047 = vshll.u32 %v317, 16
      %v1049 = vrot.slane %v1047, 5
      %v1050 = vor.u32 %v1046, %v1049
      %v1051 = vrot.slane %v1050, 4
      %v1053 = vshll.u32 %v318, 16
      %v1055 = vrot.slane %v1053, 5
      %v1056 = vsel %vm538, %v1051, %v1055
      %v1058 = vshrl.u32 %v319, 16
      %v1060 = vrot.slane %v1058, 4
      %v1061 = vshll.u32 %v319, 16
      %v1063 = vrot.slane %v1061, 5
      %v1064 = vor.u32 %v1060, %v1063
      %v1065 = vrot.slane %v1064, 4
      %v1067 = vshll.u32 %v320, 16
      %v1069 = vrot.slane %v1067, 5
      %v1070 = vsel %vm538, %v1065, %v1069
      %v1072 = vshrl.u32 %v321, 16
      %v1074 = vrot.slane %v1072, 4
      %v1075 = vshll.u32 %v321, 16
      %v1077 = vrot.slane %v1075, 5
      %v1078 = vor.u32 %v1074, %v1077
      %v1079 = vrot.slane %v1078, 4
      %v1081 = vshll.u32 %v322, 16
      %v1083 = vrot.slane %v1081, 5
      %v1084 = vsel %vm538, %v1079, %v1083
      %s1085 = scalar_lea.vmem %s1, 20
      %v1086 = vld [vmem:[%s1085] sm:$0xf]
      %v1087 = vunpack.c.l.b16 %v986
      %v1088 = vunpack.c.l.b16 %v1000
      %v1089 = vunpack.c.l.b16 %v1014
      %v1090 = vunpack.c.l.b16 %v1028
      %v1091 = vunpack.c.l.b16 %v1042
      %v1092 = vunpack.c.l.b16 %v1056
      %v1093 = vunpack.c.l.b16 %v1070
      %v1094 = vunpack.c.l.b16 %v1084
      %v1095 = vpack.c.b16 %v1088, %v1087
      %v1096 = vpack.c.b16 %v1090, %v1089
      %v1097 = vpack.c.b16 %v1092, %v1091
      %v1098 = vpack.c.b16 %v1094, %v1093
      %v1100 = vsel %vm354, %v1095, 0
      %v1103 = vsel %vm354, %v1096, 0
      %v1106 = vsel %vm354, %v1097, 0
      %v1109 = vsel %vm354, %v1098, 0
      %v1112 = vsel %vm367, %v1086, 0
      %1114 = vmatprep.subr.bf16.mxu0 0
      %1115 = vmatpush1.bf16.msra.mxu0 0
      %1116 = vmatprep.subr.bf16.mxu0 0
      %1117 = vmatpush1.bf16.msra.mxu0 0
      %1118 = vmatprep.subr.bf16.mxu0 0
      %1119 = vmatpush1.bf16.msra.mxu0 0
      %1120 = vmatprep.subr.bf16.mxu0 0
      %1121 = vmatpush1.bf16.msra.mxu0 0
      %1122 = vmatprep.subr.bf16.mxu0 0
      %1123 = vmatpush1.bf16.msra.mxu0 0
      %1124 = vmatprep.subr.bf16.mxu0 0
      %1125 = vmatpush1.bf16.msra.mxu0 0
      %1126 = vmatprep.subr.bf16.mxu0 0
      %1127 = vmatpush1.bf16.msra.mxu0 0
      %1128 = vmatprep.subr.bf16.mxu0 0
      %1129 = vmatpush1.bf16.msra.mxu0 %v1112
      %1130 = vmatprep.subr.bf16.mxu0 0
      %1131 = vmatpush2.bf16.msra.mxu0 0
      %1132 = vmatprep.subr.bf16.mxu0 0
      %1133 = vmatpush2.bf16.msra.mxu0 0
      %1134 = vmatprep.subr.bf16.mxu0 0
      %1135 = vmatpush2.bf16.msra.mxu0 0
      %1136 = vmatprep.subr.bf16.mxu0 0
      %1137 = vmatpush2.bf16.msra.mxu0 0
      %1138 = vmatprep.subr.bf16.mxu0 0
      %1139 = vmatpush2.bf16.msra.mxu0 0
      %1140 = vmatprep.subr.bf16.mxu0 0
      %1141 = vmatpush2.bf16.msra.mxu0 0
      %1142 = vmatprep.subr.bf16.mxu0 0
      %1143 = vmatpush2.bf16.msra.mxu0 0
      %1144 = vmatprep.subr.bf16.mxu0 0
      %1145 = vmatpush2.bf16.msra.mxu0 0
      %1146 = vmatprep.mubr.bf16.mxu0 0
      %1147 = vmatmul.mubr.bf16.gmra.mxu0 %v1100
      %v1148 = vpop.f32.mrf.mxu0
      %v1149 = vadd.f32 0.0, %v1148
      %v1150 = vpop.f32.mrf.mxu0
      %v1151 = vpop.f32.mrf.mxu0
      %v1152 = vadd.f32 0.0, %v1151
      %v1153 = vpop.f32.mrf.mxu0
      %1154 = vmatprep.mubr.bf16.mxu0 0
      %1155 = vmatmul.mubr.bf16.gmra.mxu0 %v1103
      %v1156 = vpop.f32.mrf.mxu0
      %v1157 = vadd.f32 0.0, %v1156
      %v1158 = vpop.f32.mrf.mxu0
      %v1159 = vpop.f32.mrf.mxu0
      %v1160 = vadd.f32 0.0, %v1159
      %v1161 = vpop.f32.mrf.mxu0
      %1162 = vmatprep.mubr.bf16.mxu0 0
      %1163 = vmatmul.mubr.bf16.gmra.mxu0 %v1106
      %v1164 = vpop.f32.mrf.mxu0
      %v1165 = vadd.f32 0.0, %v1164
      %v1166 = vpop.f32.mrf.mxu0
      %v1167 = vpop.f32.mrf.mxu0
      %v1168 = vadd.f32 0.0, %v1167
      %v1169 = vpop.f32.mrf.mxu0
      %1170 = vmatprep.mubr.bf16.mxu0 0
      %1171 = vmatmul.mubr.bf16.gmra.mxu0 %v1109
      %v1172 = vpop.f32.mrf.mxu0
      %v1173 = vadd.f32 0.0, %v1172
      %v1174 = vpop.f32.mrf.mxu0
      %v1175 = vpop.f32.mrf.mxu0
      %v1176 = vadd.f32 0.0, %v1175
      %v1177 = vpop.f32.mrf.mxu0
      %1178 = vdwg.mxu0
      %v1179 = vadd.f32 %v965, %v1149
      %v1180 = vadd.f32 %v966, %v1152
      %v1181 = vadd.f32 %v967, %v1157
      %v1182 = vadd.f32 %v968, %v1160
      %v1183 = vadd.f32 %v969, %v1165
      %v1184 = vadd.f32 %v970, %v1168
      %v1185 = vadd.f32 %v971, %v1173
      %v1186 = vadd.f32 %v972, %v1176
      %s1187 = scalar_lea.vmem %s1, 24
      %v1188 = vld [vmem:[%s1187] sm:$0xf]
      %v1190 = vunpack.c.l.b16 %v296
      %v1191 = vpack.c.b16 %v446, %v445
      %v1192 = vpack.c.b16 %v448, %v447
      %v1193 = vpack.c.b16 %v450, %v449
      %v1194 = vpack.c.b16 %v1190, %v451
      %v1196 = vsel %vm354, %v1191, 0
      %v1199 = vsel %vm354, %v1192, 0
      %v1202 = vsel %vm354, %v1193, 0
      %v1205 = vsel %vm354, %v1194, 0
      %v1208 = vsel %vm367, %v1188, 0
      %1210 = vmatprep.subr.bf16.mxu0 0
      %1211 = vmatpush1.bf16.msra.mxu0 0
      %1212 = vmatprep.subr.bf16.mxu0 0
      %1213 = vmatpush1.bf16.msra.mxu0 0
      %1214 = vmatprep.subr.bf16.mxu0 0
      %1215 = vmatpush1.bf16.msra.mxu0 0
      %1216 = vmatprep.subr.bf16.mxu0 0
      %1217 = vmatpush1.bf16.msra.mxu0 0
      %1218 = vmatprep.subr.bf16.mxu0 0
      %1219 = vmatpush1.bf16.msra.mxu0 0
      %1220 = vmatprep.subr.bf16.mxu0 0
      %1221 = vmatpush1.bf16.msra.mxu0 0
      %1222 = vmatprep.subr.bf16.mxu0 0
      %1223 = vmatpush1.bf16.msra.mxu0 0
      %1224 = vmatprep.subr.bf16.mxu0 0
      %1225 = vmatpush1.bf16.msra.mxu0 %v1208
      %1226 = vmatprep.subr.bf16.mxu0 0
      %1227 = vmatpush2.bf16.msra.mxu0 0
      %1228 = vmatprep.subr.bf16.mxu0 0
      %1229 = vmatpush2.bf16.msra.mxu0 0
      %1230 = vmatprep.subr.bf16.mxu0 0
      %1231 = vmatpush2.bf16.msra.mxu0 0
      %1232 = vmatprep.subr.bf16.mxu0 0
      %1233 = vmatpush2.bf16.msra.mxu0 0
      %1234 = vmatprep.subr.bf16.mxu0 0
      %1235 = vmatpush2.bf16.msra.mxu0 0
      %1236 = vmatprep.subr.bf16.mxu0 0
      %1237 = vmatpush2.bf16.msra.mxu0 0
      %1238 = vmatprep.subr.bf16.mxu0 0
      %1239 = vmatpush2.bf16.msra.mxu0 0
      %1240 = vmatprep.subr.bf16.mxu0 0
      %1241 = vmatpush2.bf16.msra.mxu0 0
      %1242 = vmatprep.mubr.bf16.mxu0 0
      %1243 = vmatmul.mubr.bf16.gmra.mxu0 %v1196
      %v1244 = vpop.f32.mrf.mxu0
      %v1245 = vadd.f32 0.0, %v1244
      %v1246 = vpop.f32.mrf.mxu0
      %v1247 = vpop.f32.mrf.mxu0
      %v1248 = vadd.f32 0.0, %v1247
      %v1249 = vpop.f32.mrf.mxu0
      %1250 = vmatprep.mubr.bf16.mxu0 0
      %1251 = vmatmul.mubr.bf16.gmra.mxu0 %v1199
      %v1252 = vpop.f32.mrf.mxu0
      %v1253 = vadd.f32 0.0, %v1252
      %v1254 = vpop.f32.mrf.mxu0
      %v1255 = vpop.f32.mrf.mxu0
      %v1256 = vadd.f32 0.0, %v1255
      %v1257 = vpop.f32.mrf.mxu0
      %1258 = vmatprep.mubr.bf16.mxu0 0
      %1259 = vmatmul.mubr.bf16.gmra.mxu0 %v1202
      %v1260 = vpop.f32.mrf.mxu0
      %v1261 = vadd.f32 0.0, %v1260
      %v1262 = vpop.f32.mrf.mxu0
      %v1263 = vpop.f32.mrf.mxu0
      %v1264 = vadd.f32 0.0, %v1263
      %v1265 = vpop.f32.mrf.mxu0
      %1266 = vmatprep.mubr.bf16.mxu0 0
      %1267 = vmatmul.mubr.bf16.gmra.mxu0 %v1205
      %v1268 = vpop.f32.mrf.mxu0
      %v1269 = vadd.f32 0.0, %v1268
      %v1270 = vpop.f32.mrf.mxu0
      %v1271 = vpop.f32.mrf.mxu0
      %v1272 = vadd.f32 0.0, %v1271
      %v1273 = vpop.f32.mrf.mxu0
      %1274 = vdwg.mxu0
      %v1275 = vadd.f32 %v1179, %v1245
      %v1276 = vadd.f32 %v1180, %v1248
      %v1277 = vadd.f32 %v1181, %v1253
      %v1278 = vadd.f32 %v1182, %v1256
      %v1279 = vadd.f32 %v1183, %v1261
      %v1280 = vadd.f32 %v1184, %v1264
      %v1281 = vadd.f32 %v1185, %v1269
      %v1282 = vadd.f32 %v1186, %v1272
      %s1283 = scalar_lea.vmem %s1, 28
      %v1284 = vld [vmem:[%s1283] sm:$0xf]
      %v1286 = vunpack.c.l.b16 %v306
      %v1287 = vpack.c.b16 %v344, %v343
      %v1288 = vpack.c.b16 %v346, %v345
      %v1289 = vpack.c.b16 %v348, %v347
      %v1290 = vpack.c.b16 %v1286, %v349
      %v1292 = vsel %vm354, %v1287, 0
      %v1295 = vsel %vm354, %v1288, 0
      %v1298 = vsel %vm354, %v1289, 0
      %v1301 = vsel %vm354, %v1290, 0
      %v1304 = vsel %vm367, %v1284, 0
      %1306 = vmatprep.subr.bf16.mxu0 0
      %1307 = vmatpush1.bf16.msra.mxu0 0
      %1308 = vmatprep.subr.bf16.mxu0 0
      %1309 = vmatpush1.bf16.msra.mxu0 0
      %1310 = vmatprep.subr.bf16.mxu0 0
      %1311 = vmatpush1.bf16.msra.mxu0 0
      %1312 = vmatprep.subr.bf16.mxu0 0
      %1313 = vmatpush1.bf16.msra.mxu0 0
      %1314 = vmatprep.subr.bf16.mxu0 0
      %1315 = vmatpush1.bf16.msra.mxu0 0
      %1316 = vmatprep.subr.bf16.mxu0 0
      %1317 = vmatpush1.bf16.msra.mxu0 0
      %1318 = vmatprep.subr.bf16.mxu0 0
      %1319 = vmatpush1.bf16.msra.mxu0 0
      %1320 = vmatprep.subr.bf16.mxu0 0
      %1321 = vmatpush1.bf16.msra.mxu0 %v1304
      %1322 = vmatprep.subr.bf16.mxu0 0
      %1323 = vmatpush2.bf16.msra.mxu0 0
      %1324 = vmatprep.subr.bf16.mxu0 0
      %1325 = vmatpush2.bf16.msra.mxu0 0
      %1326 = vmatprep.subr.bf16.mxu0 0
      %1327 = vmatpush2.bf16.msra.mxu0 0
      %1328 = vmatprep.subr.bf16.mxu0 0
      %1329 = vmatpush2.bf16.msra.mxu0 0
      %1330 = vmatprep.subr.bf16.mxu0 0
      %1331 = vmatpush2.bf16.msra.mxu0 0
      %1332 = vmatprep.subr.bf16.mxu0 0
      %1333 = vmatpush2.bf16.msra.mxu0 0
      %1334 = vmatprep.subr.bf16.mxu0 0
      %1335 = vmatpush2.bf16.msra.mxu0 0
      %1336 = vmatprep.subr.bf16.mxu0 0
      %1337 = vmatpush2.bf16.msra.mxu0 0
      %1338 = vmatprep.mubr.bf16.mxu0 0
      %1339 = vmatmul.mubr.bf16.gmra.mxu0 %v1292
      %v1340 = vpop.f32.mrf.mxu0
      %v1341 = vadd.f32 0.0, %v1340
      %v1342 = vpop.f32.mrf.mxu0
      %v1343 = vpop.f32.mrf.mxu0
      %v1344 = vadd.f32 0.0, %v1343
      %v1345 = vpop.f32.mrf.mxu0
      %1346 = vmatprep.mubr.bf16.mxu0 0
      %1347 = vmatmul.mubr.bf16.gmra.mxu0 %v1295
      %v1348 = vpop.f32.mrf.mxu0
      %v1349 = vadd.f32 0.0, %v1348
      %v1350 = vpop.f32.mrf.mxu0
      %v1351 = vpop.f32.mrf.mxu0
      %v1352 = vadd.f32 0.0, %v1351
      %v1353 = vpop.f32.mrf.mxu0
      %1354 = vmatprep.mubr.bf16.mxu0 0
      %1355 = vmatmul.mubr.bf16.gmra.mxu0 %v1298
      %v1356 = vpop.f32.mrf.mxu0
      %v1357 = vadd.f32 0.0, %v1356
      %v1358 = vpop.f32.mrf.mxu0
      %v1359 = vpop.f32.mrf.mxu0
      %v1360 = vadd.f32 0.0, %v1359
      %v1361 = vpop.f32.mrf.mxu0
      %1362 = vmatprep.mubr.bf16.mxu0 0
      %1363 = vmatmul.mubr.bf16.gmra.mxu0 %v1301
      %v1364 = vpop.f32.mrf.mxu0
      %v1365 = vadd.f32 0.0, %v1364
      %v1366 = vpop.f32.mrf.mxu0
      %v1367 = vpop.f32.mrf.mxu0
      %v1368 = vadd.f32 0.0, %v1367
      %v1369 = vpop.f32.mrf.mxu0
      %1370 = vdwg.mxu0
      %v1371 = vadd.f32 %v1275, %v1341
      %v1372 = vadd.f32 %v1276, %v1344
      %v1373 = vadd.f32 %v1277, %v1349
      %v1374 = vadd.f32 %v1278, %v1352
      %v1375 = vadd.f32 %v1279, %v1357
      %v1376 = vadd.f32 %v1280, %v1360
      %v1377 = vadd.f32 %v1281, %v1365
      %v1378 = vadd.f32 %v1282, %v1368
      %v1380 = vshrl.u32 %v296, 16
      %v1382 = vrot.slane %v1380, 4
      %v1383 = vshll.u32 %v296, 16
      %v1385 = vrot.slane %v1383, 5
      %v1386 = vor.u32 %v1382, %v1385
      %v1387 = vrot.slane %v1386, 4
      %v1389 = vshll.u32 %v297, 16
      %v1391 = vrot.slane %v1389, 5
      %v1392 = vsel %vm538, %v1387, %v1391
      %s1393 = scalar_lea.vmem %s1, 32
      %v1394 = vld [vmem:[%s1393] sm:$0xf]
      %v1395 = vunpack.c.l.b16 %v1392
      %v1396 = vpack.c.b16 %v655, %v654
      %v1397 = vpack.c.b16 %v657, %v656
      %v1398 = vpack.c.b16 %v659, %v658
      %v1399 = vpack.c.b16 %v1395, %v660
      %v1401 = vsel %vm354, %v1396, 0
      %v1404 = vsel %vm354, %v1397, 0
      %v1407 = vsel %vm354, %v1398, 0
      %v1410 = vsel %vm354, %v1399, 0
      %v1413 = vsel %vm367, %v1394, 0
      %1415 = vmatprep.subr.bf16.mxu0 0
      %1416 = vmatpush1.bf16.msra.mxu0 0
      %1417 = vmatprep.subr.bf16.mxu0 0
      %1418 = vmatpush1.bf16.msra.mxu0 0
      %1419 = vmatprep.subr.bf16.mxu0 0
      %1420 = vmatpush1.bf16.msra.mxu0 0
      %1421 = vmatprep.subr.bf16.mxu0 0
      %1422 = vmatpush1.bf16.msra.mxu0 0
      %1423 = vmatprep.subr.bf16.mxu0 0
      %1424 = vmatpush1.bf16.msra.mxu0 0
      %1425 = vmatprep.subr.bf16.mxu0 0
      %1426 = vmatpush1.bf16.msra.mxu0 0
      %1427 = vmatprep.subr.bf16.mxu0 0
      %1428 = vmatpush1.bf16.msra.mxu0 0
      %1429 = vmatprep.subr.bf16.mxu0 0
      %1430 = vmatpush1.bf16.msra.mxu0 %v1413
      %1431 = vmatprep.subr.bf16.mxu0 0
      %1432 = vmatpush2.bf16.msra.mxu0 0
      %1433 = vmatprep.subr.bf16.mxu0 0
      %1434 = vmatpush2.bf16.msra.mxu0 0
      %1435 = vmatprep.subr.bf16.mxu0 0
      %1436 = vmatpush2.bf16.msra.mxu0 0
      %1437 = vmatprep.subr.bf16.mxu0 0
      %1438 = vmatpush2.bf16.msra.mxu0 0
      %1439 = vmatprep.subr.bf16.mxu0 0
      %1440 = vmatpush2.bf16.msra.mxu0 0
      %1441 = vmatprep.subr.bf16.mxu0 0
      %1442 = vmatpush2.bf16.msra.mxu0 0
      %1443 = vmatprep.subr.bf16.mxu0 0
      %1444 = vmatpush2.bf16.msra.mxu0 0
      %1445 = vmatprep.subr.bf16.mxu0 0
      %1446 = vmatpush2.bf16.msra.mxu0 0
      %1447 = vmatprep.mubr.bf16.mxu0 0
      %1448 = vmatmul.mubr.bf16.gmra.mxu0 %v1401
      %v1449 = vpop.f32.mrf.mxu0
      %v1450 = vadd.f32 0.0, %v1449
      %v1451 = vpop.f32.mrf.mxu0
      %v1452 = vpop.f32.mrf.mxu0
      %v1453 = vadd.f32 0.0, %v1452
      %v1454 = vpop.f32.mrf.mxu0
      %1455 = vmatprep.mubr.bf16.mxu0 0
      %1456 = vmatmul.mubr.bf16.gmra.mxu0 %v1404
      %v1457 = vpop.f32.mrf.mxu0
      %v1458 = vadd.f32 0.0, %v1457
      %v1459 = vpop.f32.mrf.mxu0
      %v1460 = vpop.f32.mrf.mxu0
      %v1461 = vadd.f32 0.0, %v1460
      %v1462 = vpop.f32.mrf.mxu0
      %1463 = vmatprep.mubr.bf16.mxu0 0
      %1464 = vmatmul.mubr.bf16.gmra.mxu0 %v1407
      %v1465 = vpop.f32.mrf.mxu0
      %v1466 = vadd.f32 0.0, %v1465
      %v1467 = vpop.f32.mrf.mxu0
      %v1468 = vpop.f32.mrf.mxu0
      %v1469 = vadd.f32 0.0, %v1468
      %v1470 = vpop.f32.mrf.mxu0
      %1471 = vmatprep.mubr.bf16.mxu0 0
      %1472 = vmatmul.mubr.bf16.gmra.mxu0 %v1410
      %v1473 = vpop.f32.mrf.mxu0
      %v1474 = vadd.f32 0.0, %v1473
      %v1475 = vpop.f32.mrf.mxu0
      %v1476 = vpop.f32.mrf.mxu0
      %v1477 = vadd.f32 0.0, %v1476
      %v1478 = vpop.f32.mrf.mxu0
      %1479 = vdwg.mxu0
      %v1480 = vadd.f32 %v1371, %v1450
      %v1481 = vadd.f32 %v1372, %v1453
      %v1482 = vadd.f32 %v1373, %v1458
      %v1483 = vadd.f32 %v1374, %v1461
      %v1484 = vadd.f32 %v1375, %v1466
      %v1485 = vadd.f32 %v1376, %v1469
      %v1486 = vadd.f32 %v1377, %v1474
      %v1487 = vadd.f32 %v1378, %v1477
      %v1488 = vld [vmem:[%s2] sm:$0x1]
      %v1490 = vlaneseq
      %v1491 = vshrl.u32 %v1490, 7
      %v1492 = vsub.s32 0, %v1491
      %v1493 = vrot.slane %v1488, %v1492
      %v1495 = vadd.f32 %v1480, %v1493
      %v1496 = vadd.f32 %v1481, %v1493
      %v1497 = vadd.f32 %v1482, %v1493
      %v1498 = vadd.f32 %v1483, %v1493
      %v1499 = vadd.f32 %v1484, %v1493
      %v1500 = vadd.f32 %v1485, %v1493
      %v1501 = vadd.f32 %v1486, %v1493
      %v1502 = vadd.f32 %v1487, %v1493
      %v1503 = vmax.f32 %v1495, 0.0
      %v1504 = vmax.f32 %v1496, 0.0
      %v1505 = vmax.f32 %v1497, 0.0
      %v1506 = vmax.f32 %v1498, 0.0
      %v1507 = vmax.f32 %v1499, 0.0
      %v1508 = vmax.f32 %v1500, 0.0
      %v1509 = vmax.f32 %v1501, 0.0
      %v1510 = vmax.f32 %v1502, 0.0
      %1511 = vst [vmem:[#allocation2] sm:$0xf] 0
      %1512 = vst [vmem:[#allocation2 + $0x4] sm:$0x1] 0
      %1513 = vst [vmem:[#allocation2 + $0x8] sm:$0xf] 0
      %1514 = vst [vmem:[#allocation2 + $0xc] sm:$0x1] 0
      %1515 = vst [vmem:[#allocation2 + $0x10] sm:$0xf] 0
      %1516 = vst [vmem:[#allocation2 + $0x14] sm:$0x1] 0
      %1517 = vst [vmem:[#allocation2 + $0x18] sm:$0xf] 0
      %1518 = vst [vmem:[#allocation2 + $0x1c] sm:$0x1] 0
      %1519 = vst [vmem:[#allocation2 + $0x20] sm:$0xf] 0
      %1520 = vst [vmem:[#allocation2 + $0x24] sm:$0x1] 0
      %1521 = vst [vmem:[#allocation2 + $0x28] sm:$0xf] 0
      %1522 = vst [vmem:[#allocation2 + $0x2c] sm:$0x1] 0
      %1523 = vst [vmem:[#allocation2 + $0x30] sm:$0xf] 0
      %1524 = vst [vmem:[#allocation2 + $0x34] sm:$0x1] 0
      %1525 = vst [vmem:[#allocation2 + $0x38] sm:$0xf] 0
      %1526 = vst [vmem:[#allocation2 + $0x3c] sm:$0x1] 0
      %1527 = vst [vmem:[#allocation2 + $0x40] sm:$0xf] 0
      %1528 = vst [vmem:[#allocation2 + $0x44] sm:$0x1] 0
      %1529 = vst [vmem:[#allocation2 + $0x48] sm:$0xf] 0
      %1530 = vst [vmem:[#allocation2 + $0x4c] sm:$0x1] 0
      %v1531 = vpack.c.bf16 %v1503, %v1503
      %v1532 = vpack.c.bf16 %v1504, %v1504
      %v1533 = vpack.c.bf16 %v1505, %v1505
      %v1534 = vpack.c.bf16 %v1506, %v1506
      %v1535 = vpack.c.bf16 %v1507, %v1507
      %v1536 = vpack.c.bf16 %v1508, %v1508
      %v1537 = vpack.c.bf16 %v1509, %v1509
      %v1538 = vpack.c.bf16 %v1510, %v1510
      %v1547 = vunpack.c.l.b16 %v1531
      %v1548 = vunpack.c.l.b16 %v1532
      %v1549 = vunpack.c.l.b16 %v1533
      %v1550 = vunpack.c.l.b16 %v1534
      %v1551 = vunpack.c.l.b16 %v1535
      %v1552 = vunpack.c.l.b16 %v1536
      %v1553 = vunpack.c.l.b16 %v1537
      %v1554 = vunpack.c.l.b16 %v1538
      %v1555 = vpack.c.b16 %v1547, %v1547
      %v1556 = vpack.c.b16 %v1548, %v1548
      %v1557 = vpack.c.b16 %v1549, %v1549
      %v1558 = vpack.c.b16 %v1550, %v1550
      %v1559 = vpack.c.b16 %v1551, %v1551
      %v1560 = vpack.c.b16 %v1552, %v1552
      %v1561 = vpack.c.b16 %v1553, %v1553
      %v1562 = vpack.c.b16 %v1554, %v1554
      %v1564 = vshrl.u32 %v1555, 16
      %v1566 = vrot.slane %v1564, 7
      %v1567 = vshll.u32 %v1555, 16
      %v1569 = vor.u32 %v1566, %v1567
      %v1570 = vrot.slane %v1566, 4
      %v1572 = vshrl.u32 %v1556, 16
      %v1574 = vrot.slane %v1572, 7
      %v1575 = vshll.u32 %v1556, 16
      %v1577 = vor.u32 %v1574, %v1575
      %v1578 = vrot.slane %v1574, 4
      %v1580 = vshrl.u32 %v1557, 16
      %v1582 = vrot.slane %v1580, 7
      %v1583 = vshll.u32 %v1557, 16
      %v1585 = vor.u32 %v1582, %v1583
      %v1586 = vrot.slane %v1582, 4
      %v1588 = vshrl.u32 %v1558, 16
      %v1590 = vrot.slane %v1588, 7
      %v1591 = vshll.u32 %v1558, 16
      %v1593 = vor.u32 %v1590, %v1591
      %v1594 = vrot.slane %v1590, 4
      %v1596 = vshrl.u32 %v1559, 16
      %v1598 = vrot.slane %v1596, 7
      %v1599 = vshll.u32 %v1559, 16
      %v1601 = vor.u32 %v1598, %v1599
      %v1602 = vrot.slane %v1598, 4
      %v1604 = vshrl.u32 %v1560, 16
      %v1606 = vrot.slane %v1604, 7
      %v1607 = vshll.u32 %v1560, 16
      %v1609 = vor.u32 %v1606, %v1607
      %v1610 = vrot.slane %v1606, 4
      %v1612 = vshrl.u32 %v1561, 16
      %v1614 = vrot.slane %v1612, 7
      %v1615 = vshll.u32 %v1561, 16
      %v1617 = vor.u32 %v1614, %v1615
      %v1618 = vrot.slane %v1614, 4
      %v1620 = vshrl.u32 %v1562, 16
      %v1622 = vrot.slane %v1620, 7
      %v1623 = vshll.u32 %v1562, 16
      %v1625 = vor.u32 %v1622, %v1623
      %v1626 = vrot.slane %v1622, 4
      %s1643 = scalar_lea.vmem [#allocation2], 8
      %vm1644 = vcmask 1043456
      %vm1645 = vsmask.f32 7938
      %vm1646 = vmand %vm1644, %vm1645
      %v1647 = vld [vmem:[%s1643] sm:$0xf]
      %v1648 = vsel %vm1646, %v1569, %v1647
      %1649 = vst [vmem:[%s1643] sm:$0xf] %v1648
      %vm1650 = vcmask 1040384
      %vm1651 = vsmask.f32 256
      %vm1652 = vmand %vm1650, %vm1651
      %v1653 = vld [vmem:[%s1643 + $0x4] sm:$0x1]
      %v1654 = vsel %vm1652, %v1570, %v1653
      %1655 = vst [vmem:[%s1643 + $0x4] sm:$0x1] %v1654
      %v1656 = vld [vmem:[%s1643 + $0x8] sm:$0xf]
      %v1657 = vsel %vm1646, %v1577, %v1656
      %1658 = vst [vmem:[%s1643 + $0x8] sm:$0xf] %v1657
      %v1659 = vld [vmem:[%s1643 + $0xc] sm:$0x1]
      %v1660 = vsel %vm1652, %v1578, %v1659
      %1661 = vst [vmem:[%s1643 + $0xc] sm:$0x1] %v1660
      %v1662 = vld [vmem:[%s1643 + $0x10] sm:$0xf]
      %v1663 = vsel %vm1646, %v1585, %v1662
      %1664 = vst [vmem:[%s1643 + $0x10] sm:$0xf] %v1663
      %v1665 = vld [vmem:[%s1643 + $0x14] sm:$0x1]
      %v1666 = vsel %vm1652, %v1586, %v1665
      %1667 = vst [vmem:[%s1643 + $0x14] sm:$0x1] %v1666
      %v1668 = vld [vmem:[%s1643 + $0x18] sm:$0xf]
      %v1669 = vsel %vm1646, %v1593, %v1668
      %1670 = vst [vmem:[%s1643 + $0x18] sm:$0xf] %v1669
      %v1671 = vld [vmem:[%s1643 + $0x1c] sm:$0x1]
      %v1672 = vsel %vm1652, %v1594, %v1671
      %1673 = vst [vmem:[%s1643 + $0x1c] sm:$0x1] %v1672
      %v1674 = vld [vmem:[%s1643 + $0x20] sm:$0xf]
      %v1675 = vsel %vm1646, %v1601, %v1674
      %1676 = vst [vmem:[%s1643 + $0x20] sm:$0xf] %v1675
      %v1677 = vld [vmem:[%s1643 + $0x24] sm:$0x1]
      %v1678 = vsel %vm1652, %v1602, %v1677
      %1679 = vst [vmem:[%s1643 + $0x24] sm:$0x1] %v1678
      %v1680 = vld [vmem:[%s1643 + $0x28] sm:$0xf]
      %v1681 = vsel %vm1646, %v1609, %v1680
      %1682 = vst [vmem:[%s1643 + $0x28] sm:$0xf] %v1681
      %v1683 = vld [vmem:[%s1643 + $0x2c] sm:$0x1]
      %v1684 = vsel %vm1652, %v1610, %v1683
      %1685 = vst [vmem:[%s1643 + $0x2c] sm:$0x1] %v1684
      %v1686 = vld [vmem:[%s1643 + $0x30] sm:$0xf]
      %v1687 = vsel %vm1646, %v1617, %v1686
      %1688 = vst [vmem:[%s1643 + $0x30] sm:$0xf] %v1687
      %v1689 = vld [vmem:[%s1643 + $0x34] sm:$0x1]
      %v1690 = vsel %vm1652, %v1618, %v1689
      %1691 = vst [vmem:[%s1643 + $0x34] sm:$0x1] %v1690
      %v1692 = vld [vmem:[%s1643 + $0x38] sm:$0xf]
      %v1693 = vsel %vm1646, %v1625, %v1692
      %1694 = vst [vmem:[%s1643 + $0x38] sm:$0xf] %v1693
      %v1695 = vld [vmem:[%s1643 + $0x3c] sm:$0x1]
      %v1696 = vsel %vm1652, %v1626, %v1695
      %1697 = vst [vmem:[%s1643 + $0x3c] sm:$0x1] %v1696
      %v1698 = vld [vmem:[#allocation2] sm:$0xf]
      %v1699 = vld [vmem:[#allocation2 + $0x8] sm:$0xf]
      %v1700 = vld [vmem:[#allocation2 + $0x10] sm:$0xf]
      %v1701 = vld [vmem:[#allocation2 + $0x18] sm:$0xf]
      %v1702 = vld [vmem:[#allocation2 + $0x20] sm:$0xf]
      %v1703 = vld [vmem:[#allocation2 + $0x28] sm:$0xf]
      %v1704 = vld [vmem:[#allocation2 + $0x30] sm:$0xf]
      %v1705 = vld [vmem:[#allocation2 + $0x38] sm:$0xf]
      %v1706 = vld [vmem:[%s3] sm:$0xf]
      %v1707 = vld [vmem:[%s3 + $0x4] sm:$0xf]
      %v1708 = vld [vmem:[%s3 + $0x8] sm:$0xf]
      %v1709 = vld [vmem:[%s3 + $0xc] sm:$0xf]
      %v1710 = vld [vmem:[%s3 + $0x10] sm:$0xf]
      %v1711 = vld [vmem:[%s3 + $0x14] sm:$0xf]
      %v1712 = vld [vmem:[%s3 + $0x18] sm:$0xf]
      %v1713 = vld [vmem:[%s3 + $0x1c] sm:$0xf]
      %v1714 = vld [vmem:[%s3 + $0x20] sm:$0xf]
      %v1715 = vld [vmem:[%s3 + $0x24] sm:$0xf]
      %v1716 = vld [vmem:[%s3 + $0x28] sm:$0xf]
      %v1717 = vld [vmem:[%s3 + $0x2c] sm:$0xf]
      %v1718 = vld [vmem:[%s3 + $0x30] sm:$0xf]
      %v1719 = vld [vmem:[%s3 + $0x34] sm:$0xf]
      %v1720 = vld [vmem:[%s3 + $0x38] sm:$0xf]
      %v1721 = vld [vmem:[%s3 + $0x3c] sm:$0xf]
      %v1722 = vld [vmem:[#allocation2 + $0x4] sm:$0x1]
      %v1723 = vld [vmem:[#allocation2 + $0xc] sm:$0x1]
      %v1724 = vld [vmem:[#allocation2 + $0x14] sm:$0x1]
      %v1725 = vld [vmem:[#allocation2 + $0x1c] sm:$0x1]
      %v1726 = vld [vmem:[#allocation2 + $0x24] sm:$0x1]
      %v1727 = vld [vmem:[#allocation2 + $0x2c] sm:$0x1]
      %v1728 = vld [vmem:[#allocation2 + $0x34] sm:$0x1]
      %v1729 = vld [vmem:[#allocation2 + $0x3c] sm:$0x1]
      %v1731 = vshrl.u32 %v1698, 16
      %v1733 = vrot.slane %v1731, 4
      %v1734 = vshll.u32 %v1698, 16
      %v1736 = vrot.slane %v1734, 5
      %v1737 = vor.u32 %v1733, %v1736
      %v1738 = vrot.slane %v1737, 4
      %v1740 = vshll.u32 %v1722, 16
      %v1742 = vrot.slane %v1740, 5
      %v1743 = vsel %vm538, %v1738, %v1742
      %v1745 = vshrl.u32 %v1699, 16
      %v1747 = vrot.slane %v1745, 4
      %v1748 = vshll.u32 %v1699, 16
      %v1750 = vrot.slane %v1748, 5
      %v1751 = vor.u32 %v1747, %v1750
      %v1752 = vrot.slane %v1751, 4
      %v1754 = vshll.u32 %v1723, 16
      %v1756 = vrot.slane %v1754, 5
      %v1757 = vsel %vm538, %v1752, %v1756
      %v1759 = vshrl.u32 %v1700, 16
      %v1761 = vrot.slane %v1759, 4
      %v1762 = vshll.u32 %v1700, 16
      %v1764 = vrot.slane %v1762, 5
      %v1765 = vor.u32 %v1761, %v1764
      %v1766 = vrot.slane %v1765, 4
      %v1768 = vshll.u32 %v1724, 16
      %v1770 = vrot.slane %v1768, 5
      %v1771 = vsel %vm538, %v1766, %v1770
      %v1773 = vshrl.u32 %v1701, 16
      %v1775 = vrot.slane %v1773, 4
      %v1776 = vshll.u32 %v1701, 16
      %v1778 = vrot.slane %v1776, 5
      %v1779 = vor.u32 %v1775, %v1778
      %v1780 = vrot.slane %v1779, 4
      %v1782 = vshll.u32 %v1725, 16
      %v1784 = vrot.slane %v1782, 5
      %v1785 = vsel %vm538, %v1780, %v1784
      %v1787 = vshrl.u32 %v1702, 16
      %v1789 = vrot.slane %v1787, 4
      %v1790 = vshll.u32 %v1702, 16
      %v1792 = vrot.slane %v1790, 5
      %v1793 = vor.u32 %v1789, %v1792
      %v1794 = vrot.slane %v1793, 4
      %v1796 = vshll.u32 %v1726, 16
      %v1798 = vrot.slane %v1796, 5
      %v1799 = vsel %vm538, %v1794, %v1798
      %v1801 = vshrl.u32 %v1703, 16
      %v1803 = vrot.slane %v1801, 4
      %v1804 = vshll.u32 %v1703, 16
      %v1806 = vrot.slane %v1804, 5
      %v1807 = vor.u32 %v1803, %v1806
      %v1808 = vrot.slane %v1807, 4
      %v1810 = vshll.u32 %v1727, 16
      %v1812 = vrot.slane %v1810, 5
      %v1813 = vsel %vm538, %v1808, %v1812
      %v1815 = vshrl.u32 %v1704, 16
      %v1817 = vrot.slane %v1815, 4
      %v1818 = vshll.u32 %v1704, 16
      %v1820 = vrot.slane %v1818, 5
      %v1821 = vor.u32 %v1817, %v1820
      %v1822 = vrot.slane %v1821, 4
      %v1824 = vshll.u32 %v1728, 16
      %v1826 = vrot.slane %v1824, 5
      %v1827 = vsel %vm538, %v1822, %v1826
      %v1829 = vshrl.u32 %v1705, 16
      %v1831 = vrot.slane %v1829, 4
      %v1832 = vshll.u32 %v1705, 16
      %v1834 = vrot.slane %v1832, 5
      %v1835 = vor.u32 %v1831, %v1834
      %v1836 = vrot.slane %v1835, 4
      %v1838 = vshll.u32 %v1729, 16
      %v1840 = vrot.slane %v1838, 5
      %v1841 = vsel %vm538, %v1836, %v1840
      %s1842 = scalar_lea.vmem %s3, 64
      %v1843 = vld [vmem:[%s1842] sm:$0xf]
      %v1844 = vld [vmem:[%s1842 + $0x4] sm:$0xf]
      %v1845 = vld [vmem:[%s1842 + $0x8] sm:$0xf]
      %v1846 = vld [vmem:[%s1842 + $0xc] sm:$0xf]
      %v1847 = vld [vmem:[%s1842 + $0x10] sm:$0xf]
      %v1848 = vld [vmem:[%s1842 + $0x14] sm:$0xf]
      %v1849 = vld [vmem:[%s1842 + $0x18] sm:$0xf]
      %v1850 = vld [vmem:[%s1842 + $0x1c] sm:$0xf]
      %v1851 = vld [vmem:[%s1842 + $0x20] sm:$0xf]
      %v1852 = vld [vmem:[%s1842 + $0x24] sm:$0xf]
      %v1853 = vld [vmem:[%s1842 + $0x28] sm:$0xf]
      %v1854 = vld [vmem:[%s1842 + $0x2c] sm:$0xf]
      %v1855 = vld [vmem:[%s1842 + $0x30] sm:$0xf]
      %v1856 = vld [vmem:[%s1842 + $0x34] sm:$0xf]
      %v1857 = vld [vmem:[%s1842 + $0x38] sm:$0xf]
      %v1858 = vld [vmem:[%s1842 + $0x3c] sm:$0xf]
      %v1859 = vunpack.c.l.b16 %v1743
      %v1860 = vunpack.c.l.b16 %v1757
      %v1861 = vunpack.c.l.b16 %v1771
      %v1862 = vunpack.c.l.b16 %v1785
      %v1863 = vunpack.c.l.b16 %v1799
      %v1864 = vunpack.c.l.b16 %v1813
      %v1865 = vunpack.c.l.b16 %v1827
      %v1866 = vunpack.c.l.b16 %v1841
      %v1867 = vpack.c.b16 %v1860, %v1859
      %v1868 = vpack.c.b16 %v1862, %v1861
      %v1869 = vpack.c.b16 %v1864, %v1863
      %v1870 = vpack.c.b16 %v1866, %v1865
      %v1891 = vunpack.c.l.b16 %v1843
      %v1892 = vunpack.c.l.b16 %v1844
      %v1893 = vunpack.c.l.b16 %v1845
      %v1894 = vunpack.c.l.b16 %v1846
      %v1895 = vunpack.c.l.b16 %v1847
      %v1896 = vunpack.c.l.b16 %v1848
      %v1897 = vunpack.c.l.b16 %v1849
      %v1898 = vunpack.c.l.b16 %v1850
      %v1899 = vunpack.c.l.b16 %v1851
      %v1900 = vunpack.c.l.b16 %v1852
      %v1901 = vunpack.c.l.b16 %v1853
      %v1902 = vunpack.c.l.b16 %v1854
      %v1903 = vunpack.c.l.b16 %v1855
      %v1904 = vunpack.c.l.b16 %v1856
      %v1905 = vunpack.c.l.b16 %v1857
      %v1906 = vunpack.c.l.b16 %v1858
      %v1907 = vpack.c.b16 %v1892, %v1891
      %v1908 = vpack.c.b16 %v1894, %v1893
      %v1909 = vpack.c.b16 %v1896, %v1895
      %v1910 = vpack.c.b16 %v1898, %v1897
      %v1911 = vpack.c.b16 %v1900, %v1899
      %v1912 = vpack.c.b16 %v1902, %v1901
      %v1913 = vpack.c.b16 %v1904, %v1903
      %v1914 = vpack.c.b16 %v1906, %v1905
      %1923 = vmatprep.subr.bf16.mxu0 0
      %1924 = vmatpush1.bf16.msra.mxu0 %v1914
      %1925 = vmatprep.subr.bf16.mxu0 0
      %1926 = vmatpush1.bf16.msra.mxu0 %v1913
      %1927 = vmatprep.subr.bf16.mxu0 0
      %1928 = vmatpush1.bf16.msra.mxu0 %v1912
      %1929 = vmatprep.subr.bf16.mxu0 0
      %1930 = vmatpush1.bf16.msra.mxu0 %v1911
      %1931 = vmatprep.subr.bf16.mxu0 0
      %1932 = vmatpush1.bf16.msra.mxu0 %v1910
      %1933 = vmatprep.subr.bf16.mxu0 0
      %1934 = vmatpush1.bf16.msra.mxu0 %v1909
      %1935 = vmatprep.subr.bf16.mxu0 0
      %1936 = vmatpush1.bf16.msra.mxu0 %v1908
      %1937 = vmatprep.subr.bf16.mxu0 0
      %1938 = vmatpush1.bf16.msra.mxu0 %v1907
      %1939 = vmatprep.subr.bf16.mxu0 0
      %1940 = vmatpush2.bf16.msra.mxu0 0
      %1941 = vmatprep.subr.bf16.mxu0 0
      %1942 = vmatpush2.bf16.msra.mxu0 0
      %1943 = vmatprep.subr.bf16.mxu0 0
      %1944 = vmatpush2.bf16.msra.mxu0 0
      %1945 = vmatprep.subr.bf16.mxu0 0
      %1946 = vmatpush2.bf16.msra.mxu0 0
      %1947 = vmatprep.subr.bf16.mxu0 0
      %1948 = vmatpush2.bf16.msra.mxu0 0
      %1949 = vmatprep.subr.bf16.mxu0 0
      %1950 = vmatpush2.bf16.msra.mxu0 0
      %1951 = vmatprep.subr.bf16.mxu0 0
      %1952 = vmatpush2.bf16.msra.mxu0 0
      %1953 = vmatprep.subr.bf16.mxu0 0
      %1954 = vmatpush2.bf16.msra.mxu0 0
      %1955 = vmatprep.mubr.bf16.mxu0 0
      %1956 = vmatmul.mubr.bf16.gmra.mxu0 %v1867
      %v1957 = vpop.f32.mrf.mxu0
      %v1958 = vadd.f32 0.0, %v1957
      %v1959 = vpop.f32.mrf.mxu0
      %v1960 = vpop.f32.mrf.mxu0
      %v1961 = vadd.f32 0.0, %v1960
      %v1962 = vpop.f32.mrf.mxu0
      %1963 = vmatprep.mubr.bf16.mxu0 0
      %1964 = vmatmul.mubr.bf16.gmra.mxu0 %v1868
      %v1965 = vpop.f32.mrf.mxu0
      %v1966 = vadd.f32 0.0, %v1965
      %v1967 = vpop.f32.mrf.mxu0
      %v1968 = vpop.f32.mrf.mxu0
      %v1969 = vadd.f32 0.0, %v1968
      %v1970 = vpop.f32.mrf.mxu0
      %1971 = vmatprep.mubr.bf16.mxu0 0
      %1972 = vmatmul.mubr.bf16.gmra.mxu0 %v1869
      %v1973 = vpop.f32.mrf.mxu0
      %v1974 = vadd.f32 0.0, %v1973
      %v1975 = vpop.f32.mrf.mxu0
      %v1976 = vpop.f32.mrf.mxu0
      %v1977 = vadd.f32 0.0, %v1976
      %v1978 = vpop.f32.mrf.mxu0
      %1979 = vmatprep.mubr.bf16.mxu0 0
      %1980 = vmatmul.mubr.bf16.gmra.mxu0 %v1870
      %v1981 = vpop.f32.mrf.mxu0
      %v1982 = vadd.f32 0.0, %v1981
      %v1983 = vpop.f32.mrf.mxu0
      %v1984 = vpop.f32.mrf.mxu0
      %v1985 = vadd.f32 0.0, %v1984
      %v1986 = vpop.f32.mrf.mxu0
      %1987 = vdwg.mxu0
      %v1996 = vunpack.c.l.b16 %v1698
      %v1997 = vunpack.c.l.b16 %v1699
      %v1998 = vunpack.c.l.b16 %v1700
      %v1999 = vunpack.c.l.b16 %v1701
      %v2000 = vunpack.c.l.b16 %v1702
      %v2001 = vunpack.c.l.b16 %v1703
      %v2002 = vunpack.c.l.b16 %v1704
      %v2003 = vunpack.c.l.b16 %v1705
      %v2004 = vpack.c.b16 %v1997, %v1996
      %v2005 = vpack.c.b16 %v1999, %v1998
      %v2006 = vpack.c.b16 %v2001, %v2000
      %v2007 = vpack.c.b16 %v2003, %v2002
      %v2028 = vunpack.c.l.b16 %v1706
      %v2029 = vunpack.c.l.b16 %v1707
      %v2030 = vunpack.c.l.b16 %v1708
      %v2031 = vunpack.c.l.b16 %v1709
      %v2032 = vunpack.c.l.b16 %v1710
      %v2033 = vunpack.c.l.b16 %v1711
      %v2034 = vunpack.c.l.b16 %v1712
      %v2035 = vunpack.c.l.b16 %v1713
      %v2036 = vunpack.c.l.b16 %v1714
      %v2037 = vunpack.c.l.b16 %v1715
      %v2038 = vunpack.c.l.b16 %v1716
      %v2039 = vunpack.c.l.b16 %v1717
      %v2040 = vunpack.c.l.b16 %v1718
      %v2041 = vunpack.c.l.b16 %v1719
      %v2042 = vunpack.c.l.b16 %v1720
      %v2043 = vunpack.c.l.b16 %v1721
      %v2044 = vpack.c.b16 %v2029, %v2028
      %v2045 = vpack.c.b16 %v2031, %v2030
      %v2046 = vpack.c.b16 %v2033, %v2032
      %v2047 = vpack.c.b16 %v2035, %v2034
      %v2048 = vpack.c.b16 %v2037, %v2036
      %v2049 = vpack.c.b16 %v2039, %v2038
      %v2050 = vpack.c.b16 %v2041, %v2040
      %v2051 = vpack.c.b16 %v2043, %v2042
      %2060 = vmatprep.subr.bf16.mxu0 0
      %2061 = vmatpush1.bf16.msra.mxu0 %v2051
      %2062 = vmatprep.subr.bf16.mxu0 0
      %2063 = vmatpush1.bf16.msra.mxu0 %v2050
      %2064 = vmatprep.subr.bf16.mxu0 0
      %2065 = vmatpush1.bf16.msra.mxu0 %v2049
      %2066 = vmatprep.subr.bf16.mxu0 0
      %2067 = vmatpush1.bf16.msra.mxu0 %v2048
      %2068 = vmatprep.subr.bf16.mxu0 0
      %2069 = vmatpush1.bf16.msra.mxu0 %v2047
      %2070 = vmatprep.subr.bf16.mxu0 0
      %2071 = vmatpush1.bf16.msra.mxu0 %v2046
      %2072 = vmatprep.subr.bf16.mxu0 0
      %2073 = vmatpush1.bf16.msra.mxu0 %v2045
      %2074 = vmatprep.subr.bf16.mxu0 0
      %2075 = vmatpush1.bf16.msra.mxu0 %v2044
      %2076 = vmatprep.subr.bf16.mxu0 0
      %2077 = vmatpush2.bf16.msra.mxu0 0
      %2078 = vmatprep.subr.bf16.mxu0 0
      %2079 = vmatpush2.bf16.msra.mxu0 0
      %2080 = vmatprep.subr.bf16.mxu0 0
      %2081 = vmatpush2.bf16.msra.mxu0 0
      %2082 = vmatprep.subr.bf16.mxu0 0
      %2083 = vmatpush2.bf16.msra.mxu0 0
      %2084 = vmatprep.subr.bf16.mxu0 0
      %2085 = vmatpush2.bf16.msra.mxu0 0
      %2086 = vmatprep.subr.bf16.mxu0 0
      %2087 = vmatpush2.bf16.msra.mxu0 0
      %2088 = vmatprep.subr.bf16.mxu0 0
      %2089 = vmatpush2.bf16.msra.mxu0 0
      %2090 = vmatprep.subr.bf16.mxu0 0
      %2091 = vmatpush2.bf16.msra.mxu0 0
      %2092 = vmatprep.mubr.bf16.mxu0 0
      %2093 = vmatmul.mubr.bf16.gmra.mxu0 %v2004
      %v2094 = vpop.f32.mrf.mxu0
      %v2095 = vadd.f32 %v1958, %v2094
      %v2096 = vpop.f32.mrf.mxu0
      %v2097 = vpop.f32.mrf.mxu0
      %v2098 = vadd.f32 %v1961, %v2097
      %v2099 = vpop.f32.mrf.mxu0
      %2100 = vmatprep.mubr.bf16.mxu0 0
      %2101 = vmatmul.mubr.bf16.gmra.mxu0 %v2005
      %v2102 = vpop.f32.mrf.mxu0
      %v2103 = vadd.f32 %v1966, %v2102
      %v2104 = vpop.f32.mrf.mxu0
      %v2105 = vpop.f32.mrf.mxu0
      %v2106 = vadd.f32 %v1969, %v2105
      %v2107 = vpop.f32.mrf.mxu0
      %2108 = vmatprep.mubr.bf16.mxu0 0
      %2109 = vmatmul.mubr.bf16.gmra.mxu0 %v2006
      %v2110 = vpop.f32.mrf.mxu0
      %v2111 = vadd.f32 %v1974, %v2110
      %v2112 = vpop.f32.mrf.mxu0
      %v2113 = vpop.f32.mrf.mxu0
      %v2114 = vadd.f32 %v1977, %v2113
      %v2115 = vpop.f32.mrf.mxu0
      %2116 = vmatprep.mubr.bf16.mxu0 0
      %2117 = vmatmul.mubr.bf16.gmra.mxu0 %v2007
      %v2118 = vpop.f32.mrf.mxu0
      %v2119 = vadd.f32 %v1982, %v2118
      %v2120 = vpop.f32.mrf.mxu0
      %v2121 = vpop.f32.mrf.mxu0
      %v2122 = vadd.f32 %v1985, %v2121
      %v2123 = vpop.f32.mrf.mxu0
      %2124 = vdwg.mxu0
      %v2125 = vld [vmem:[#allocation2] sm:$0xe]
      %v2126 = vld [vmem:[#allocation2 + $0x8] sm:$0xe]
      %v2127 = vld [vmem:[#allocation2 + $0x10] sm:$0xe]
      %v2128 = vld [vmem:[#allocation2 + $0x18] sm:$0xe]
      %v2129 = vld [vmem:[#allocation2 + $0x20] sm:$0xe]
      %v2130 = vld [vmem:[#allocation2 + $0x28] sm:$0xe]
      %v2131 = vld [vmem:[#allocation2 + $0x30] sm:$0xe]
      %v2132 = vld [vmem:[#allocation2 + $0x38] sm:$0xe]
      %vm2149 = vcmask 1042432
      %vm2150 = vcmask 1046532
      %vm2151 = vmor %vm2149, %vm2150
      %v2152 = vrot.slane %v2125, 5
      %v2153 = vrot.slane %v2152, 4
      %v2154 = vrot.slane %v1722, 5
      %v2155 = vsel %vm2151, %v2153, %v2154
      %v2156 = vrot.slane %v2126, 5
      %v2157 = vrot.slane %v2156, 4
      %v2158 = vrot.slane %v1723, 5
      %v2159 = vsel %vm2151, %v2157, %v2158
      %v2160 = vrot.slane %v2127, 5
      %v2161 = vrot.slane %v2160, 4
      %v2162 = vrot.slane %v1724, 5
      %v2163 = vsel %vm2151, %v2161, %v2162
      %v2164 = vrot.slane %v2128, 5
      %v2165 = vrot.slane %v2164, 4
      %v2166 = vrot.slane %v1725, 5
      %v2167 = vsel %vm2151, %v2165, %v2166
      %v2168 = vrot.slane %v2129, 5
      %v2169 = vrot.slane %v2168, 4
      %v2170 = vrot.slane %v1726, 5
      %v2171 = vsel %vm2151, %v2169, %v2170
      %v2172 = vrot.slane %v2130, 5
      %v2173 = vrot.slane %v2172, 4
      %v2174 = vrot.slane %v1727, 5
      %v2175 = vsel %vm2151, %v2173, %v2174
      %v2176 = vrot.slane %v2131, 5
      %v2177 = vrot.slane %v2176, 4
      %v2178 = vrot.slane %v1728, 5
      %v2179 = vsel %vm2151, %v2177, %v2178
      %v2180 = vrot.slane %v2132, 5
      %v2181 = vrot.slane %v2180, 4
      %v2182 = vrot.slane %v1729, 5
      %v2183 = vsel %vm2151, %v2181, %v2182
      %s2184 = scalar_lea.vmem %s3, 128
      %v2185 = vld [vmem:[%s2184] sm:$0xf]
      %v2186 = vld [vmem:[%s2184 + $0x4] sm:$0xf]
      %v2187 = vld [vmem:[%s2184 + $0x8] sm:$0xf]
      %v2188 = vld [vmem:[%s2184 + $0xc] sm:$0xf]
      %v2189 = vld [vmem:[%s2184 + $0x10] sm:$0xf]
      %v2190 = vld [vmem:[%s2184 + $0x14] sm:$0xf]
      %v2191 = vld [vmem:[%s2184 + $0x18] sm:$0xf]
      %v2192 = vld [vmem:[%s2184 + $0x1c] sm:$0xf]
      %v2193 = vld [vmem:[%s2184 + $0x20] sm:$0xf]
      %v2194 = vld [vmem:[%s2184 + $0x24] sm:$0xf]
      %v2195 = vld [vmem:[%s2184 + $0x28] sm:$0xf]
      %v2196 = vld [vmem:[%s2184 + $0x2c] sm:$0xf]
      %v2197 = vld [vmem:[%s2184 + $0x30] sm:$0xf]
      %v2198 = vld [vmem:[%s2184 + $0x34] sm:$0xf]
      %v2199 = vld [vmem:[%s2184 + $0x38] sm:$0xf]
      %v2200 = vld [vmem:[%s2184 + $0x3c] sm:$0xf]
      %v2201 = vunpack.c.l.b16 %v2155
      %v2202 = vunpack.c.l.b16 %v2159
      %v2203 = vunpack.c.l.b16 %v2163
      %v2204 = vunpack.c.l.b16 %v2167
      %v2205 = vunpack.c.l.b16 %v2171
      %v2206 = vunpack.c.l.b16 %v2175
      %v2207 = vunpack.c.l.b16 %v2179
      %v2208 = vunpack.c.l.b16 %v2183
      %v2209 = vpack.c.b16 %v2202, %v2201
      %v2210 = vpack.c.b16 %v2204, %v2203
      %v2211 = vpack.c.b16 %v2206, %v2205
      %v2212 = vpack.c.b16 %v2208, %v2207
      %v2233 = vunpack.c.l.b16 %v2185
      %v2234 = vunpack.c.l.b16 %v2186
      %v2235 = vunpack.c.l.b16 %v2187
      %v2236 = vunpack.c.l.b16 %v2188
      %v2237 = vunpack.c.l.b16 %v2189
      %v2238 = vunpack.c.l.b16 %v2190
      %v2239 = vunpack.c.l.b16 %v2191
      %v2240 = vunpack.c.l.b16 %v2192
      %v2241 = vunpack.c.l.b16 %v2193
      %v2242 = vunpack.c.l.b16 %v2194
      %v2243 = vunpack.c.l.b16 %v2195
      %v2244 = vunpack.c.l.b16 %v2196
      %v2245 = vunpack.c.l.b16 %v2197
      %v2246 = vunpack.c.l.b16 %v2198
      %v2247 = vunpack.c.l.b16 %v2199
      %v2248 = vunpack.c.l.b16 %v2200
      %v2249 = vpack.c.b16 %v2234, %v2233
      %v2250 = vpack.c.b16 %v2236, %v2235
      %v2251 = vpack.c.b16 %v2238, %v2237
      %v2252 = vpack.c.b16 %v2240, %v2239
      %v2253 = vpack.c.b16 %v2242, %v2241
      %v2254 = vpack.c.b16 %v2244, %v2243
      %v2255 = vpack.c.b16 %v2246, %v2245
      %v2256 = vpack.c.b16 %v2248, %v2247
      %2265 = vmatprep.subr.bf16.mxu0 0
      %2266 = vmatpush1.bf16.msra.mxu0 %v2256
      %2267 = vmatprep.subr.bf16.mxu0 0
      %2268 = vmatpush1.bf16.msra.mxu0 %v2255
      %2269 = vmatprep.subr.bf16.mxu0 0
      %2270 = vmatpush1.bf16.msra.mxu0 %v2254
      %2271 = vmatprep.subr.bf16.mxu0 0
      %2272 = vmatpush1.bf16.msra.mxu0 %v2253
      %2273 = vmatprep.subr.bf16.mxu0 0
      %2274 = vmatpush1.bf16.msra.mxu0 %v2252
      %2275 = vmatprep.subr.bf16.mxu0 0
      %2276 = vmatpush1.bf16.msra.mxu0 %v2251
      %2277 = vmatprep.subr.bf16.mxu0 0
      %2278 = vmatpush1.bf16.msra.mxu0 %v2250
      %2279 = vmatprep.subr.bf16.mxu0 0
      %2280 = vmatpush1.bf16.msra.mxu0 %v2249
      %2281 = vmatprep.subr.bf16.mxu0 0
      %2282 = vmatpush2.bf16.msra.mxu0 0
      %2283 = vmatprep.subr.bf16.mxu0 0
      %2284 = vmatpush2.bf16.msra.mxu0 0
      %2285 = vmatprep.subr.bf16.mxu0 0
      %2286 = vmatpush2.bf16.msra.mxu0 0
      %2287 = vmatprep.subr.bf16.mxu0 0
      %2288 = vmatpush2.bf16.msra.mxu0 0
      %2289 = vmatprep.subr.bf16.mxu0 0
      %2290 = vmatpush2.bf16.msra.mxu0 0
      %2291 = vmatprep.subr.bf16.mxu0 0
      %2292 = vmatpush2.bf16.msra.mxu0 0
      %2293 = vmatprep.subr.bf16.mxu0 0
      %2294 = vmatpush2.bf16.msra.mxu0 0
      %2295 = vmatprep.subr.bf16.mxu0 0
      %2296 = vmatpush2.bf16.msra.mxu0 0
      %2297 = vmatprep.mubr.bf16.mxu0 0
      %2298 = vmatmul.mubr.bf16.gmra.mxu0 %v2209
      %v2299 = vpop.f32.mrf.mxu0
      %v2300 = vadd.f32 0.0, %v2299
      %v2301 = vpop.f32.mrf.mxu0
      %v2302 = vpop.f32.mrf.mxu0
      %v2303 = vadd.f32 0.0, %v2302
      %v2304 = vpop.f32.mrf.mxu0
      %2305 = vmatprep.mubr.bf16.mxu0 0
      %2306 = vmatmul.mubr.bf16.gmra.mxu0 %v2210
      %v2307 = vpop.f32.mrf.mxu0
      %v2308 = vadd.f32 0.0, %v2307
      %v2309 = vpop.f32.mrf.mxu0
      %v2310 = vpop.f32.mrf.mxu0
      %v2311 = vadd.f32 0.0, %v2310
      %v2312 = vpop.f32.mrf.mxu0
      %2313 = vmatprep.mubr.bf16.mxu0 0
      %2314 = vmatmul.mubr.bf16.gmra.mxu0 %v2211
      %v2315 = vpop.f32.mrf.mxu0
      %v2316 = vadd.f32 0.0, %v2315
      %v2317 = vpop.f32.mrf.mxu0
      %v2318 = vpop.f32.mrf.mxu0
      %v2319 = vadd.f32 0.0, %v2318
      %v2320 = vpop.f32.mrf.mxu0
      %2321 = vmatprep.mubr.bf16.mxu0 0
      %2322 = vmatmul.mubr.bf16.gmra.mxu0 %v2212
      %v2323 = vpop.f32.mrf.mxu0
      %v2324 = vadd.f32 0.0, %v2323
      %v2325 = vpop.f32.mrf.mxu0
      %v2326 = vpop.f32.mrf.mxu0
      %v2327 = vadd.f32 0.0, %v2326
      %v2328 = vpop.f32.mrf.mxu0
      %2329 = vdwg.mxu0
      %v2330 = vadd.f32 %v2095, %v2300
      %v2331 = vadd.f32 %v2098, %v2303
      %v2332 = vadd.f32 %v2103, %v2308
      %v2333 = vadd.f32 %v2106, %v2311
      %v2334 = vadd.f32 %v2111, %v2316
      %v2335 = vadd.f32 %v2114, %v2319
      %v2336 = vadd.f32 %v2119, %v2324
      %v2337 = vadd.f32 %v2122, %v2327
      %v2338 = vld [vmem:[%s1643] sm:$0xf]
      %v2339 = vld [vmem:[%s1643 + $0x8] sm:$0xf]
      %v2340 = vld [vmem:[%s1643 + $0x10] sm:$0xf]
      %v2341 = vld [vmem:[%s1643 + $0x18] sm:$0xf]
      %v2342 = vld [vmem:[%s1643 + $0x20] sm:$0xf]
      %v2343 = vld [vmem:[%s1643 + $0x28] sm:$0xf]
      %v2344 = vld [vmem:[%s1643 + $0x30] sm:$0xf]
      %v2345 = vld [vmem:[%s1643 + $0x38] sm:$0xf]
      %s2346 = scalar_lea.vmem %s3, 192
      %v2347 = vld [vmem:[%s2346] sm:$0xf]
      %v2348 = vld [vmem:[%s2346 + $0x4] sm:$0xf]
      %v2349 = vld [vmem:[%s2346 + $0x8] sm:$0xf]
      %v2350 = vld [vmem:[%s2346 + $0xc] sm:$0xf]
      %v2351 = vld [vmem:[%s2346 + $0x10] sm:$0xf]
      %v2352 = vld [vmem:[%s2346 + $0x14] sm:$0xf]
      %v2353 = vld [vmem:[%s2346 + $0x18] sm:$0xf]
      %v2354 = vld [vmem:[%s2346 + $0x1c] sm:$0xf]
      %v2355 = vld [vmem:[%s2346 + $0x20] sm:$0xf]
      %v2356 = vld [vmem:[%s2346 + $0x24] sm:$0xf]
      %v2357 = vld [vmem:[%s2346 + $0x28] sm:$0xf]
      %v2358 = vld [vmem:[%s2346 + $0x2c] sm:$0xf]
      %v2359 = vld [vmem:[%s2346 + $0x30] sm:$0xf]
      %v2360 = vld [vmem:[%s2346 + $0x34] sm:$0xf]
      %v2361 = vld [vmem:[%s2346 + $0x38] sm:$0xf]
      %v2362 = vld [vmem:[%s2346 + $0x3c] sm:$0xf]
      %v2371 = vunpack.c.l.b16 %v2338
      %v2372 = vunpack.c.l.b16 %v2339
      %v2373 = vunpack.c.l.b16 %v2340
      %v2374 = vunpack.c.l.b16 %v2341
      %v2375 = vunpack.c.l.b16 %v2342
      %v2376 = vunpack.c.l.b16 %v2343
      %v2377 = vunpack.c.l.b16 %v2344
      %v2378 = vunpack.c.l.b16 %v2345
      %v2379 = vpack.c.b16 %v2372, %v2371
      %v2380 = vpack.c.b16 %v2374, %v2373
      %v2381 = vpack.c.b16 %v2376, %v2375
      %v2382 = vpack.c.b16 %v2378, %v2377
      %v2403 = vunpack.c.l.b16 %v2347
      %v2404 = vunpack.c.l.b16 %v2348
      %v2405 = vunpack.c.l.b16 %v2349
      %v2406 = vunpack.c.l.b16 %v2350
      %v2407 = vunpack.c.l.b16 %v2351
      %v2408 = vunpack.c.l.b16 %v2352
      %v2409 = vunpack.c.l.b16 %v2353
      %v2410 = vunpack.c.l.b16 %v2354
      %v2411 = vunpack.c.l.b16 %v2355
      %v2412 = vunpack.c.l.b16 %v2356
      %v2413 = vunpack.c.l.b16 %v2357
      %v2414 = vunpack.c.l.b16 %v2358
      %v2415 = vunpack.c.l.b16 %v2359
      %v2416 = vunpack.c.l.b16 %v2360
      %v2417 = vunpack.c.l.b16 %v2361
      %v2418 = vunpack.c.l.b16 %v2362
      %v2419 = vpack.c.b16 %v2404, %v2403
      %v2420 = vpack.c.b16 %v2406, %v2405
      %v2421 = vpack.c.b16 %v2408, %v2407
      %v2422 = vpack.c.b16 %v2410, %v2409
      %v2423 = vpack.c.b16 %v2412, %v2411
      %v2424 = vpack.c.b16 %v2414, %v2413
      %v2425 = vpack.c.b16 %v2416, %v2415
      %v2426 = vpack.c.b16 %v2418, %v2417
      %2435 = vmatprep.subr.bf16.mxu0 0
      %2436 = vmatpush1.bf16.msra.mxu0 %v2426
      %2437 = vmatprep.subr.bf16.mxu0 0
      %2438 = vmatpush1.bf16.msra.mxu0 %v2425
      %2439 = vmatprep.subr.bf16.mxu0 0
      %2440 = vmatpush1.bf16.msra.mxu0 %v2424
      %2441 = vmatprep.subr.bf16.mxu0 0
      %2442 = vmatpush1.bf16.msra.mxu0 %v2423
      %2443 = vmatprep.subr.bf16.mxu0 0
      %2444 = vmatpush1.bf16.msra.mxu0 %v2422
      %2445 = vmatprep.subr.bf16.mxu0 0
      %2446 = vmatpush1.bf16.msra.mxu0 %v2421
      %2447 = vmatprep.subr.bf16.mxu0 0
      %2448 = vmatpush1.bf16.msra.mxu0 %v2420
      %2449 = vmatprep.subr.bf16.mxu0 0
      %2450 = vmatpush1.bf16.msra.mxu0 %v2419
      %2451 = vmatprep.subr.bf16.mxu0 0
      %2452 = vmatpush2.bf16.msra.mxu0 0
      %2453 = vmatprep.subr.bf16.mxu0 0
      %2454 = vmatpush2.bf16.msra.mxu0 0
      %2455 = vmatprep.subr.bf16.mxu0 0
      %2456 = vmatpush2.bf16.msra.mxu0 0
      %2457 = vmatprep.subr.bf16.mxu0 0
      %2458 = vmatpush2.bf16.msra.mxu0 0
      %2459 = vmatprep.subr.bf16.mxu0 0
      %2460 = vmatpush2.bf16.msra.mxu0 0
      %2461 = vmatprep.subr.bf16.mxu0 0
      %2462 = vmatpush2.bf16.msra.mxu0 0
      %2463 = vmatprep.subr.bf16.mxu0 0
      %2464 = vmatpush2.bf16.msra.mxu0 0
      %2465 = vmatprep.subr.bf16.mxu0 0
      %2466 = vmatpush2.bf16.msra.mxu0 0
      %2467 = vmatprep.mubr.bf16.mxu0 0
      %2468 = vmatmul.mubr.bf16.gmra.mxu0 %v2379
      %v2469 = vpop.f32.mrf.mxu0
      %v2470 = vadd.f32 0.0, %v2469
      %v2471 = vpop.f32.mrf.mxu0
      %v2472 = vpop.f32.mrf.mxu0
      %v2473 = vadd.f32 0.0, %v2472
      %v2474 = vpop.f32.mrf.mxu0
      %2475 = vmatprep.mubr.bf16.mxu0 0
      %2476 = vmatmul.mubr.bf16.gmra.mxu0 %v2380
      %v2477 = vpop.f32.mrf.mxu0
      %v2478 = vadd.f32 0.0, %v2477
      %v2479 = vpop.f32.mrf.mxu0
      %v2480 = vpop.f32.mrf.mxu0
      %v2481 = vadd.f32 0.0, %v2480
      %v2482 = vpop.f32.mrf.mxu0
      %2483 = vmatprep.mubr.bf16.mxu0 0
      %2484 = vmatmul.mubr.bf16.gmra.mxu0 %v2381
      %v2485 = vpop.f32.mrf.mxu0
      %v2486 = vadd.f32 0.0, %v2485
      %v2487 = vpop.f32.mrf.mxu0
      %v2488 = vpop.f32.mrf.mxu0
      %v2489 = vadd.f32 0.0, %v2488
      %v2490 = vpop.f32.mrf.mxu0
      %2491 = vmatprep.mubr.bf16.mxu0 0
      %2492 = vmatmul.mubr.bf16.gmra.mxu0 %v2382
      %v2493 = vpop.f32.mrf.mxu0
      %v2494 = vadd.f32 0.0, %v2493
      %v2495 = vpop.f32.mrf.mxu0
      %v2496 = vpop.f32.mrf.mxu0
      %v2497 = vadd.f32 0.0, %v2496
      %v2498 = vpop.f32.mrf.mxu0
      %2499 = vdwg.mxu0
      %v2500 = vadd.f32 %v2330, %v2470
      %v2501 = vadd.f32 %v2331, %v2473
      %v2502 = vadd.f32 %v2332, %v2478
      %v2503 = vadd.f32 %v2333, %v2481
      %v2504 = vadd.f32 %v2334, %v2486
      %v2505 = vadd.f32 %v2335, %v2489
      %v2506 = vadd.f32 %v2336, %v2494
      %v2507 = vadd.f32 %v2337, %v2497
      %v2508 = vld [vmem:[%s1643] sm:$0xf]
      %v2509 = vld [vmem:[%s1643 + $0x4] sm:$0x1]
      %v2510 = vld [vmem:[%s1643 + $0x8] sm:$0xf]
      %v2511 = vld [vmem:[%s1643 + $0xc] sm:$0x1]
      %v2512 = vld [vmem:[%s1643 + $0x10] sm:$0xf]
      %v2513 = vld [vmem:[%s1643 + $0x14] sm:$0x1]
      %v2514 = vld [vmem:[%s1643 + $0x18] sm:$0xf]
      %v2515 = vld [vmem:[%s1643 + $0x1c] sm:$0x1]
      %v2516 = vld [vmem:[%s1643 + $0x20] sm:$0xf]
      %v2517 = vld [vmem:[%s1643 + $0x24] sm:$0x1]
      %v2518 = vld [vmem:[%s1643 + $0x28] sm:$0xf]
      %v2519 = vld [vmem:[%s1643 + $0x2c] sm:$0x1]
      %v2520 = vld [vmem:[%s1643 + $0x30] sm:$0xf]
      %v2521 = vld [vmem:[%s1643 + $0x34] sm:$0x1]
      %v2522 = vld [vmem:[%s1643 + $0x38] sm:$0xf]
      %v2523 = vld [vmem:[%s1643 + $0x3c] sm:$0x1]
      %v2525 = vshrl.u32 %v2508, 16
      %v2527 = vrot.slane %v2525, 4
      %v2528 = vshll.u32 %v2508, 16
      %v2530 = vrot.slane %v2528, 5
      %v2531 = vor.u32 %v2527, %v2530
      %v2532 = vrot.slane %v2531, 4
      %v2534 = vshll.u32 %v2509, 16
      %v2536 = vrot.slane %v2534, 5
      %v2537 = vsel %vm538, %v2532, %v2536
      %v2539 = vshrl.u32 %v2510, 16
      %v2541 = vrot.slane %v2539, 4
      %v2542 = vshll.u32 %v2510, 16
      %v2544 = vrot.slane %v2542, 5
      %v2545 = vor.u32 %v2541, %v2544
      %v2546 = vrot.slane %v2545, 4
      %v2548 = vshll.u32 %v2511, 16
      %v2550 = vrot.slane %v2548, 5
      %v2551 = vsel %vm538, %v2546, %v2550
      %v2553 = vshrl.u32 %v2512, 16
      %v2555 = vrot.slane %v2553, 4
      %v2556 = vshll.u32 %v2512, 16
      %v2558 = vrot.slane %v2556, 5
      %v2559 = vor.u32 %v2555, %v2558
      %v2560 = vrot.slane %v2559, 4
      %v2562 = vshll.u32 %v2513, 16
      %v2564 = vrot.slane %v2562, 5
      %v2565 = vsel %vm538, %v2560, %v2564
      %v2567 = vshrl.u32 %v2514, 16
      %v2569 = vrot.slane %v2567, 4
      %v2570 = vshll.u32 %v2514, 16
      %v2572 = vrot.slane %v2570, 5
      %v2573 = vor.u32 %v2569, %v2572
      %v2574 = vrot.slane %v2573, 4
      %v2576 = vshll.u32 %v2515, 16
      %v2578 = vrot.slane %v2576, 5
      %v2579 = vsel %vm538, %v2574, %v2578
      %v2581 = vshrl.u32 %v2516, 16
      %v2583 = vrot.slane %v2581, 4
      %v2584 = vshll.u32 %v2516, 16
      %v2586 = vrot.slane %v2584, 5
      %v2587 = vor.u32 %v2583, %v2586
      %v2588 = vrot.slane %v2587, 4
      %v2590 = vshll.u32 %v2517, 16
      %v2592 = vrot.slane %v2590, 5
      %v2593 = vsel %vm538, %v2588, %v2592
      %v2595 = vshrl.u32 %v2518, 16
      %v2597 = vrot.slane %v2595, 4
      %v2598 = vshll.u32 %v2518, 16
      %v2600 = vrot.slane %v2598, 5
      %v2601 = vor.u32 %v2597, %v2600
      %v2602 = vrot.slane %v2601, 4
      %v2604 = vshll.u32 %v2519, 16
      %v2606 = vrot.slane %v2604, 5
      %v2607 = vsel %vm538, %v2602, %v2606
      %v2609 = vshrl.u32 %v2520, 16
      %v2611 = vrot.slane %v2609, 4
      %v2612 = vshll.u32 %v2520, 16
      %v2614 = vrot.slane %v2612, 5
      %v2615 = vor.u32 %v2611, %v2614
      %v2616 = vrot.slane %v2615, 4
      %v2618 = vshll.u32 %v2521, 16
      %v2620 = vrot.slane %v2618, 5
      %v2621 = vsel %vm538, %v2616, %v2620
      %v2623 = vshrl.u32 %v2522, 16
      %v2625 = vrot.slane %v2623, 4
      %v2626 = vshll.u32 %v2522, 16
      %v2628 = vrot.slane %v2626, 5
      %v2629 = vor.u32 %v2625, %v2628
      %v2630 = vrot.slane %v2629, 4
      %v2632 = vshll.u32 %v2523, 16
      %v2634 = vrot.slane %v2632, 5
      %v2635 = vsel %vm538, %v2630, %v2634
      %s2636 = scalar_lea.vmem %s3, 256
      %v2637 = vld [vmem:[%s2636] sm:$0xf]
      %v2638 = vld [vmem:[%s2636 + $0x4] sm:$0xf]
      %v2639 = vld [vmem:[%s2636 + $0x8] sm:$0xf]
      %v2640 = vld [vmem:[%s2636 + $0xc] sm:$0xf]
      %v2641 = vld [vmem:[%s2636 + $0x10] sm:$0xf]
      %v2642 = vld [vmem:[%s2636 + $0x14] sm:$0xf]
      %v2643 = vld [vmem:[%s2636 + $0x18] sm:$0xf]
      %v2644 = vld [vmem:[%s2636 + $0x1c] sm:$0xf]
      %v2645 = vld [vmem:[%s2636 + $0x20] sm:$0xf]
      %v2646 = vld [vmem:[%s2636 + $0x24] sm:$0xf]
      %v2647 = vld [vmem:[%s2636 + $0x28] sm:$0xf]
      %v2648 = vld [vmem:[%s2636 + $0x2c] sm:$0xf]
      %v2649 = vld [vmem:[%s2636 + $0x30] sm:$0xf]
      %v2650 = vld [vmem:[%s2636 + $0x34] sm:$0xf]
      %v2651 = vld [vmem:[%s2636 + $0x38] sm:$0xf]
      %v2652 = vld [vmem:[%s2636 + $0x3c] sm:$0xf]
      %v2653 = vunpack.c.l.b16 %v2537
      %v2654 = vunpack.c.l.b16 %v2551
      %v2655 = vunpack.c.l.b16 %v2565
      %v2656 = vunpack.c.l.b16 %v2579
      %v2657 = vunpack.c.l.b16 %v2593
      %v2658 = vunpack.c.l.b16 %v2607
      %v2659 = vunpack.c.l.b16 %v2621
      %v2660 = vunpack.c.l.b16 %v2635
      %v2661 = vpack.c.b16 %v2654, %v2653
      %v2662 = vpack.c.b16 %v2656, %v2655
      %v2663 = vpack.c.b16 %v2658, %v2657
      %v2664 = vpack.c.b16 %v2660, %v2659
      %v2685 = vunpack.c.l.b16 %v2637
      %v2686 = vunpack.c.l.b16 %v2638
      %v2687 = vunpack.c.l.b16 %v2639
      %v2688 = vunpack.c.l.b16 %v2640
      %v2689 = vunpack.c.l.b16 %v2641
      %v2690 = vunpack.c.l.b16 %v2642
      %v2691 = vunpack.c.l.b16 %v2643
      %v2692 = vunpack.c.l.b16 %v2644
      %v2693 = vunpack.c.l.b16 %v2645
      %v2694 = vunpack.c.l.b16 %v2646
      %v2695 = vunpack.c.l.b16 %v2647
      %v2696 = vunpack.c.l.b16 %v2648
      %v2697 = vunpack.c.l.b16 %v2649
      %v2698 = vunpack.c.l.b16 %v2650
      %v2699 = vunpack.c.l.b16 %v2651
      %v2700 = vunpack.c.l.b16 %v2652
      %v2701 = vpack.c.b16 %v2686, %v2685
      %v2702 = vpack.c.b16 %v2688, %v2687
      %v2703 = vpack.c.b16 %v2690, %v2689
      %v2704 = vpack.c.b16 %v2692, %v2691
      %v2705 = vpack.c.b16 %v2694, %v2693
      %v2706 = vpack.c.b16 %v2696, %v2695
      %v2707 = vpack.c.b16 %v2698, %v2697
      %v2708 = vpack.c.b16 %v2700, %v2699
      %2717 = vmatprep.subr.bf16.mxu0 0
      %2718 = vmatpush1.bf16.msra.mxu0 %v2708
      %2719 = vmatprep.subr.bf16.mxu0 0
      %2720 = vmatpush1.bf16.msra.mxu0 %v2707
      %2721 = vmatprep.subr.bf16.mxu0 0
      %2722 = vmatpush1.bf16.msra.mxu0 %v2706
      %2723 = vmatprep.subr.bf16.mxu0 0
      %2724 = vmatpush1.bf16.msra.mxu0 %v2705
      %2725 = vmatprep.subr.bf16.mxu0 0
      %2726 = vmatpush1.bf16.msra.mxu0 %v2704
      %2727 = vmatprep.subr.bf16.mxu0 0
      %2728 = vmatpush1.bf16.msra.mxu0 %v2703
      %2729 = vmatprep.subr.bf16.mxu0 0
      %2730 = vmatpush1.bf16.msra.mxu0 %v2702
      %2731 = vmatprep.subr.bf16.mxu0 0
      %2732 = vmatpush1.bf16.msra.mxu0 %v2701
      %2733 = vmatprep.subr.bf16.mxu0 0
      %2734 = vmatpush2.bf16.msra.mxu0 0
      %2735 = vmatprep.subr.bf16.mxu0 0
      %2736 = vmatpush2.bf16.msra.mxu0 0
      %2737 = vmatprep.subr.bf16.mxu0 0
      %2738 = vmatpush2.bf16.msra.mxu0 0
      %2739 = vmatprep.subr.bf16.mxu0 0
      %2740 = vmatpush2.bf16.msra.mxu0 0
      %2741 = vmatprep.subr.bf16.mxu0 0
      %2742 = vmatpush2.bf16.msra.mxu0 0
      %2743 = vmatprep.subr.bf16.mxu0 0
      %2744 = vmatpush2.bf16.msra.mxu0 0
      %2745 = vmatprep.subr.bf16.mxu0 0
      %2746 = vmatpush2.bf16.msra.mxu0 0
      %2747 = vmatprep.subr.bf16.mxu0 0
      %2748 = vmatpush2.bf16.msra.mxu0 0
      %2749 = vmatprep.mubr.bf16.mxu0 0
      %2750 = vmatmul.mubr.bf16.gmra.mxu0 %v2661
      %v2751 = vpop.f32.mrf.mxu0
      %v2752 = vadd.f32 0.0, %v2751
      %v2753 = vpop.f32.mrf.mxu0
      %v2754 = vpop.f32.mrf.mxu0
      %v2755 = vadd.f32 0.0, %v2754
      %v2756 = vpop.f32.mrf.mxu0
      %2757 = vmatprep.mubr.bf16.mxu0 0
      %2758 = vmatmul.mubr.bf16.gmra.mxu0 %v2662
      %v2759 = vpop.f32.mrf.mxu0
      %v2760 = vadd.f32 0.0, %v2759
      %v2761 = vpop.f32.mrf.mxu0
      %v2762 = vpop.f32.mrf.mxu0
      %v2763 = vadd.f32 0.0, %v2762
      %v2764 = vpop.f32.mrf.mxu0
      %2765 = vmatprep.mubr.bf16.mxu0 0
      %2766 = vmatmul.mubr.bf16.gmra.mxu0 %v2663
      %v2767 = vpop.f32.mrf.mxu0
      %v2768 = vadd.f32 0.0, %v2767
      %v2769 = vpop.f32.mrf.mxu0
      %v2770 = vpop.f32.mrf.mxu0
      %v2771 = vadd.f32 0.0, %v2770
      %v2772 = vpop.f32.mrf.mxu0
      %2773 = vmatprep.mubr.bf16.mxu0 0
      %2774 = vmatmul.mubr.bf16.gmra.mxu0 %v2664
      %v2775 = vpop.f32.mrf.mxu0
      %v2776 = vadd.f32 0.0, %v2775
      %v2777 = vpop.f32.mrf.mxu0
      %v2778 = vpop.f32.mrf.mxu0
      %v2779 = vadd.f32 0.0, %v2778
      %v2780 = vpop.f32.mrf.mxu0
      %2781 = vdwg.mxu0
      %v2782 = vadd.f32 %v2500, %v2752
      %v2783 = vadd.f32 %v2501, %v2755
      %v2784 = vadd.f32 %v2502, %v2760
      %v2785 = vadd.f32 %v2503, %v2763
      %v2786 = vadd.f32 %v2504, %v2768
      %v2787 = vadd.f32 %v2505, %v2771
      %v2788 = vadd.f32 %v2506, %v2776
      %v2789 = vadd.f32 %v2507, %v2779
      %v2790 = vld [vmem:[%s1643] sm:$0xe]
      %v2791 = vld [vmem:[%s1643 + $0x8] sm:$0xe]
      %v2792 = vld [vmem:[%s1643 + $0x10] sm:$0xe]
      %v2793 = vld [vmem:[%s1643 + $0x18] sm:$0xe]
      %v2794 = vld [vmem:[%s1643 + $0x20] sm:$0xe]
      %v2795 = vld [vmem:[%s1643 + $0x28] sm:$0xe]
      %v2796 = vld [vmem:[%s1643 + $0x30] sm:$0xe]
      %v2797 = vld [vmem:[%s1643 + $0x38] sm:$0xe]
      %v2814 = vrot.slane %v2790, 5
      %v2815 = vrot.slane %v2814, 4
      %v2816 = vrot.slane %v2509, 5
      %v2817 = vsel %vm2151, %v2815, %v2816
      %v2818 = vrot.slane %v2791, 5
      %v2819 = vrot.slane %v2818, 4
      %v2820 = vrot.slane %v2511, 5
      %v2821 = vsel %vm2151, %v2819, %v2820
      %v2822 = vrot.slane %v2792, 5
      %v2823 = vrot.slane %v2822, 4
      %v2824 = vrot.slane %v2513, 5
      %v2825 = vsel %vm2151, %v2823, %v2824
      %v2826 = vrot.slane %v2793, 5
      %v2827 = vrot.slane %v2826, 4
      %v2828 = vrot.slane %v2515, 5
      %v2829 = vsel %vm2151, %v2827, %v2828
      %v2830 = vrot.slane %v2794, 5
      %v2831 = vrot.slane %v2830, 4
      %v2832 = vrot.slane %v2517, 5
      %v2833 = vsel %vm2151, %v2831, %v2832
      %v2834 = vrot.slane %v2795, 5
      %v2835 = vrot.slane %v2834, 4
      %v2836 = vrot.slane %v2519, 5
      %v2837 = vsel %vm2151, %v2835, %v2836
      %v2838 = vrot.slane %v2796, 5
      %v2839 = vrot.slane %v2838, 4
      %v2840 = vrot.slane %v2521, 5
      %v2841 = vsel %vm2151, %v2839, %v2840
      %v2842 = vrot.slane %v2797, 5
      %v2843 = vrot.slane %v2842, 4
      %v2844 = vrot.slane %v2523, 5
      %v2845 = vsel %vm2151, %v2843, %v2844
      %s2846 = scalar_lea.vmem %s3, 320
      %v2847 = vld [vmem:[%s2846] sm:$0xf]
      %v2848 = vld [vmem:[%s2846 + $0x4] sm:$0xf]
      %v2849 = vld [vmem:[%s2846 + $0x8] sm:$0xf]
      %v2850 = vld [vmem:[%s2846 + $0xc] sm:$0xf]
      %v2851 = vld [vmem:[%s2846 + $0x10] sm:$0xf]
      %v2852 = vld [vmem:[%s2846 + $0x14] sm:$0xf]
      %v2853 = vld [vmem:[%s2846 + $0x18] sm:$0xf]
      %v2854 = vld [vmem:[%s2846 + $0x1c] sm:$0xf]
      %v2855 = vld [vmem:[%s2846 + $0x20] sm:$0xf]
      %v2856 = vld [vmem:[%s2846 + $0x24] sm:$0xf]
      %v2857 = vld [vmem:[%s2846 + $0x28] sm:$0xf]
      %v2858 = vld [vmem:[%s2846 + $0x2c] sm:$0xf]
      %v2859 = vld [vmem:[%s2846 + $0x30] sm:$0xf]
      %v2860 = vld [vmem:[%s2846 + $0x34] sm:$0xf]
      %v2861 = vld [vmem:[%s2846 + $0x38] sm:$0xf]
      %v2862 = vld [vmem:[%s2846 + $0x3c] sm:$0xf]
      %v2863 = vunpack.c.l.b16 %v2817
      %v2864 = vunpack.c.l.b16 %v2821
      %v2865 = vunpack.c.l.b16 %v2825
      %v2866 = vunpack.c.l.b16 %v2829
      %v2867 = vunpack.c.l.b16 %v2833
      %v2868 = vunpack.c.l.b16 %v2837
      %v2869 = vunpack.c.l.b16 %v2841
      %v2870 = vunpack.c.l.b16 %v2845
      %v2871 = vpack.c.b16 %v2864, %v2863
      %v2872 = vpack.c.b16 %v2866, %v2865
      %v2873 = vpack.c.b16 %v2868, %v2867
      %v2874 = vpack.c.b16 %v2870, %v2869
      %v2895 = vunpack.c.l.b16 %v2847
      %v2896 = vunpack.c.l.b16 %v2848
      %v2897 = vunpack.c.l.b16 %v2849
      %v2898 = vunpack.c.l.b16 %v2850
      %v2899 = vunpack.c.l.b16 %v2851
      %v2900 = vunpack.c.l.b16 %v2852
      %v2901 = vunpack.c.l.b16 %v2853
      %v2902 = vunpack.c.l.b16 %v2854
      %v2903 = vunpack.c.l.b16 %v2855
      %v2904 = vunpack.c.l.b16 %v2856
      %v2905 = vunpack.c.l.b16 %v2857
      %v2906 = vunpack.c.l.b16 %v2858
      %v2907 = vunpack.c.l.b16 %v2859
      %v2908 = vunpack.c.l.b16 %v2860
      %v2909 = vunpack.c.l.b16 %v2861
      %v2910 = vunpack.c.l.b16 %v2862
      %v2911 = vpack.c.b16 %v2896, %v2895
      %v2912 = vpack.c.b16 %v2898, %v2897
      %v2913 = vpack.c.b16 %v2900, %v2899
      %v2914 = vpack.c.b16 %v2902, %v2901
      %v2915 = vpack.c.b16 %v2904, %v2903
      %v2916 = vpack.c.b16 %v2906, %v2905
      %v2917 = vpack.c.b16 %v2908, %v2907
      %v2918 = vpack.c.b16 %v2910, %v2909
      %2927 = vmatprep.subr.bf16.mxu0 0
      %2928 = vmatpush1.bf16.msra.mxu0 %v2918
      %2929 = vmatprep.subr.bf16.mxu0 0
      %2930 = vmatpush1.bf16.msra.mxu0 %v2917
      %2931 = vmatprep.subr.bf16.mxu0 0
      %2932 = vmatpush1.bf16.msra.mxu0 %v2916
      %2933 = vmatprep.subr.bf16.mxu0 0
      %2934 = vmatpush1.bf16.msra.mxu0 %v2915
      %2935 = vmatprep.subr.bf16.mxu0 0
      %2936 = vmatpush1.bf16.msra.mxu0 %v2914
      %2937 = vmatprep.subr.bf16.mxu0 0
      %2938 = vmatpush1.bf16.msra.mxu0 %v2913
      %2939 = vmatprep.subr.bf16.mxu0 0
      %2940 = vmatpush1.bf16.msra.mxu0 %v2912
      %2941 = vmatprep.subr.bf16.mxu0 0
      %2942 = vmatpush1.bf16.msra.mxu0 %v2911
      %2943 = vmatprep.subr.bf16.mxu0 0
      %2944 = vmatpush2.bf16.msra.mxu0 0
      %2945 = vmatprep.subr.bf16.mxu0 0
      %2946 = vmatpush2.bf16.msra.mxu0 0
      %2947 = vmatprep.subr.bf16.mxu0 0
      %2948 = vmatpush2.bf16.msra.mxu0 0
      %2949 = vmatprep.subr.bf16.mxu0 0
      %2950 = vmatpush2.bf16.msra.mxu0 0
      %2951 = vmatprep.subr.bf16.mxu0 0
      %2952 = vmatpush2.bf16.msra.mxu0 0
      %2953 = vmatprep.subr.bf16.mxu0 0
      %2954 = vmatpush2.bf16.msra.mxu0 0
      %2955 = vmatprep.subr.bf16.mxu0 0
      %2956 = vmatpush2.bf16.msra.mxu0 0
      %2957 = vmatprep.subr.bf16.mxu0 0
      %2958 = vmatpush2.bf16.msra.mxu0 0
      %2959 = vmatprep.mubr.bf16.mxu0 0
      %2960 = vmatmul.mubr.bf16.gmra.mxu0 %v2871
      %v2961 = vpop.f32.mrf.mxu0
      %v2962 = vadd.f32 0.0, %v2961
      %v2963 = vpop.f32.mrf.mxu0
      %v2964 = vpop.f32.mrf.mxu0
      %v2965 = vadd.f32 0.0, %v2964
      %v2966 = vpop.f32.mrf.mxu0
      %2967 = vmatprep.mubr.bf16.mxu0 0
      %2968 = vmatmul.mubr.bf16.gmra.mxu0 %v2872
      %v2969 = vpop.f32.mrf.mxu0
      %v2970 = vadd.f32 0.0, %v2969
      %v2971 = vpop.f32.mrf.mxu0
      %v2972 = vpop.f32.mrf.mxu0
      %v2973 = vadd.f32 0.0, %v2972
      %v2974 = vpop.f32.mrf.mxu0
      %2975 = vmatprep.mubr.bf16.mxu0 0
      %2976 = vmatmul.mubr.bf16.gmra.mxu0 %v2873
      %v2977 = vpop.f32.mrf.mxu0
      %v2978 = vadd.f32 0.0, %v2977
      %v2979 = vpop.f32.mrf.mxu0
      %v2980 = vpop.f32.mrf.mxu0
      %v2981 = vadd.f32 0.0, %v2980
      %v2982 = vpop.f32.mrf.mxu0
      %2983 = vmatprep.mubr.bf16.mxu0 0
      %2984 = vmatmul.mubr.bf16.gmra.mxu0 %v2874
      %v2985 = vpop.f32.mrf.mxu0
      %v2986 = vadd.f32 0.0, %v2985
      %v2987 = vpop.f32.mrf.mxu0
      %v2988 = vpop.f32.mrf.mxu0
      %v2989 = vadd.f32 0.0, %v2988
      %v2990 = vpop.f32.mrf.mxu0
      %2991 = vdwg.mxu0
      %v2992 = vadd.f32 %v2782, %v2962
      %v2993 = vadd.f32 %v2783, %v2965
      %v2994 = vadd.f32 %v2784, %v2970
      %v2995 = vadd.f32 %v2785, %v2973
      %v2996 = vadd.f32 %v2786, %v2978
      %v2997 = vadd.f32 %v2787, %v2981
      %v2998 = vadd.f32 %v2788, %v2986
      %v2999 = vadd.f32 %v2789, %v2989
      %s3000 = scalar_lea.vmem [#allocation2], 16
      %v3001 = vld [vmem:[%s3000] sm:$0xf]
      %v3002 = vld [vmem:[%s3000 + $0x8] sm:$0xf]
      %v3003 = vld [vmem:[%s3000 + $0x10] sm:$0xf]
      %v3004 = vld [vmem:[%s3000 + $0x18] sm:$0xf]
      %v3005 = vld [vmem:[%s3000 + $0x20] sm:$0xf]
      %v3006 = vld [vmem:[%s3000 + $0x28] sm:$0xf]
      %v3007 = vld [vmem:[%s3000 + $0x30] sm:$0xf]
      %v3008 = vld [vmem:[%s3000 + $0x38] sm:$0xf]
      %s3009 = scalar_lea.vmem %s3, 384
      %v3010 = vld [vmem:[%s3009] sm:$0xf]
      %v3011 = vld [vmem:[%s3009 + $0x4] sm:$0xf]
      %v3012 = vld [vmem:[%s3009 + $0x8] sm:$0xf]
      %v3013 = vld [vmem:[%s3009 + $0xc] sm:$0xf]
      %v3014 = vld [vmem:[%s3009 + $0x10] sm:$0xf]
      %v3015 = vld [vmem:[%s3009 + $0x14] sm:$0xf]
      %v3016 = vld [vmem:[%s3009 + $0x18] sm:$0xf]
      %v3017 = vld [vmem:[%s3009 + $0x1c] sm:$0xf]
      %v3018 = vld [vmem:[%s3009 + $0x20] sm:$0xf]
      %v3019 = vld [vmem:[%s3009 + $0x24] sm:$0xf]
      %v3020 = vld [vmem:[%s3009 + $0x28] sm:$0xf]
      %v3021 = vld [vmem:[%s3009 + $0x2c] sm:$0xf]
      %v3022 = vld [vmem:[%s3009 + $0x30] sm:$0xf]
      %v3023 = vld [vmem:[%s3009 + $0x34] sm:$0xf]
      %v3024 = vld [vmem:[%s3009 + $0x38] sm:$0xf]
      %v3025 = vld [vmem:[%s3009 + $0x3c] sm:$0xf]
      %v3034 = vunpack.c.l.b16 %v3001
      %v3035 = vunpack.c.l.b16 %v3002
      %v3036 = vunpack.c.l.b16 %v3003
      %v3037 = vunpack.c.l.b16 %v3004
      %v3038 = vunpack.c.l.b16 %v3005
      %v3039 = vunpack.c.l.b16 %v3006
      %v3040 = vunpack.c.l.b16 %v3007
      %v3041 = vunpack.c.l.b16 %v3008
      %v3042 = vpack.c.b16 %v3035, %v3034
      %v3043 = vpack.c.b16 %v3037, %v3036
      %v3044 = vpack.c.b16 %v3039, %v3038
      %v3045 = vpack.c.b16 %v3041, %v3040
      %v3066 = vunpack.c.l.b16 %v3010
      %v3067 = vunpack.c.l.b16 %v3011
      %v3068 = vunpack.c.l.b16 %v3012
      %v3069 = vunpack.c.l.b16 %v3013
      %v3070 = vunpack.c.l.b16 %v3014
      %v3071 = vunpack.c.l.b16 %v3015
      %v3072 = vunpack.c.l.b16 %v3016
      %v3073 = vunpack.c.l.b16 %v3017
      %v3074 = vunpack.c.l.b16 %v3018
      %v3075 = vunpack.c.l.b16 %v3019
      %v3076 = vunpack.c.l.b16 %v3020
      %v3077 = vunpack.c.l.b16 %v3021
      %v3078 = vunpack.c.l.b16 %v3022
      %v3079 = vunpack.c.l.b16 %v3023
      %v3080 = vunpack.c.l.b16 %v3024
      %v3081 = vunpack.c.l.b16 %v3025
      %v3082 = vpack.c.b16 %v3067, %v3066
      %v3083 = vpack.c.b16 %v3069, %v3068
      %v3084 = vpack.c.b16 %v3071, %v3070
      %v3085 = vpack.c.b16 %v3073, %v3072
      %v3086 = vpack.c.b16 %v3075, %v3074
      %v3087 = vpack.c.b16 %v3077, %v3076
      %v3088 = vpack.c.b16 %v3079, %v3078
      %v3089 = vpack.c.b16 %v3081, %v3080
      %3098 = vmatprep.subr.bf16.mxu0 0
      %3099 = vmatpush1.bf16.msra.mxu0 %v3089
      %3100 = vmatprep.subr.bf16.mxu0 0
      %3101 = vmatpush1.bf16.msra.mxu0 %v3088
      %3102 = vmatprep.subr.bf16.mxu0 0
      %3103 = vmatpush1.bf16.msra.mxu0 %v3087
      %3104 = vmatprep.subr.bf16.mxu0 0
      %3105 = vmatpush1.bf16.msra.mxu0 %v3086
      %3106 = vmatprep.subr.bf16.mxu0 0
      %3107 = vmatpush1.bf16.msra.mxu0 %v3085
      %3108 = vmatprep.subr.bf16.mxu0 0
      %3109 = vmatpush1.bf16.msra.mxu0 %v3084
      %3110 = vmatprep.subr.bf16.mxu0 0
      %3111 = vmatpush1.bf16.msra.mxu0 %v3083
      %3112 = vmatprep.subr.bf16.mxu0 0
      %3113 = vmatpush1.bf16.msra.mxu0 %v3082
      %3114 = vmatprep.subr.bf16.mxu0 0
      %3115 = vmatpush2.bf16.msra.mxu0 0
      %3116 = vmatprep.subr.bf16.mxu0 0
      %3117 = vmatpush2.bf16.msra.mxu0 0
      %3118 = vmatprep.subr.bf16.mxu0 0
      %3119 = vmatpush2.bf16.msra.mxu0 0
      %3120 = vmatprep.subr.bf16.mxu0 0
      %3121 = vmatpush2.bf16.msra.mxu0 0
      %3122 = vmatprep.subr.bf16.mxu0 0
      %3123 = vmatpush2.bf16.msra.mxu0 0
      %3124 = vmatprep.subr.bf16.mxu0 0
      %3125 = vmatpush2.bf16.msra.mxu0 0
      %3126 = vmatprep.subr.bf16.mxu0 0
      %3127 = vmatpush2.bf16.msra.mxu0 0
      %3128 = vmatprep.subr.bf16.mxu0 0
      %3129 = vmatpush2.bf16.msra.mxu0 0
      %3130 = vmatprep.mubr.bf16.mxu0 0
      %3131 = vmatmul.mubr.bf16.gmra.mxu0 %v3042
      %v3132 = vpop.f32.mrf.mxu0
      %v3133 = vadd.f32 0.0, %v3132
      %v3134 = vpop.f32.mrf.mxu0
      %v3135 = vpop.f32.mrf.mxu0
      %v3136 = vadd.f32 0.0, %v3135
      %v3137 = vpop.f32.mrf.mxu0
      %3138 = vmatprep.mubr.bf16.mxu0 0
      %3139 = vmatmul.mubr.bf16.gmra.mxu0 %v3043
      %v3140 = vpop.f32.mrf.mxu0
      %v3141 = vadd.f32 0.0, %v3140
      %v3142 = vpop.f32.mrf.mxu0
      %v3143 = vpop.f32.mrf.mxu0
      %v3144 = vadd.f32 0.0, %v3143
      %v3145 = vpop.f32.mrf.mxu0
      %3146 = vmatprep.mubr.bf16.mxu0 0
      %3147 = vmatmul.mubr.bf16.gmra.mxu0 %v3044
      %v3148 = vpop.f32.mrf.mxu0
      %v3149 = vadd.f32 0.0, %v3148
      %v3150 = vpop.f32.mrf.mxu0
      %v3151 = vpop.f32.mrf.mxu0
      %v3152 = vadd.f32 0.0, %v3151
      %v3153 = vpop.f32.mrf.mxu0
      %3154 = vmatprep.mubr.bf16.mxu0 0
      %3155 = vmatmul.mubr.bf16.gmra.mxu0 %v3045
      %v3156 = vpop.f32.mrf.mxu0
      %v3157 = vadd.f32 0.0, %v3156
      %v3158 = vpop.f32.mrf.mxu0
      %v3159 = vpop.f32.mrf.mxu0
      %v3160 = vadd.f32 0.0, %v3159
      %v3161 = vpop.f32.mrf.mxu0
      %3162 = vdwg.mxu0
      %v3163 = vadd.f32 %v2992, %v3133
      %v3164 = vadd.f32 %v2993, %v3136
      %v3165 = vadd.f32 %v2994, %v3141
      %v3166 = vadd.f32 %v2995, %v3144
      %v3167 = vadd.f32 %v2996, %v3149
      %v3168 = vadd.f32 %v2997, %v3152
      %v3169 = vadd.f32 %v2998, %v3157
      %v3170 = vadd.f32 %v2999, %v3160
      %v3171 = vld [vmem:[%s3000] sm:$0xf]
      %v3172 = vld [vmem:[%s3000 + $0x4] sm:$0x1]
      %v3173 = vld [vmem:[%s3000 + $0x8] sm:$0xf]
      %v3174 = vld [vmem:[%s3000 + $0xc] sm:$0x1]
      %v3175 = vld [vmem:[%s3000 + $0x10] sm:$0xf]
      %v3176 = vld [vmem:[%s3000 + $0x14] sm:$0x1]
      %v3177 = vld [vmem:[%s3000 + $0x18] sm:$0xf]
      %v3178 = vld [vmem:[%s3000 + $0x1c] sm:$0x1]
      %v3179 = vld [vmem:[%s3000 + $0x20] sm:$0xf]
      %v3180 = vld [vmem:[%s3000 + $0x24] sm:$0x1]
      %v3181 = vld [vmem:[%s3000 + $0x28] sm:$0xf]
      %v3182 = vld [vmem:[%s3000 + $0x2c] sm:$0x1]
      %v3183 = vld [vmem:[%s3000 + $0x30] sm:$0xf]
      %v3184 = vld [vmem:[%s3000 + $0x34] sm:$0x1]
      %v3185 = vld [vmem:[%s3000 + $0x38] sm:$0xf]
      %v3186 = vld [vmem:[%s3000 + $0x3c] sm:$0x1]
      %v3188 = vshrl.u32 %v3171, 16
      %v3190 = vrot.slane %v3188, 4
      %v3191 = vshll.u32 %v3171, 16
      %v3193 = vrot.slane %v3191, 5
      %v3194 = vor.u32 %v3190, %v3193
      %v3195 = vrot.slane %v3194, 4
      %v3197 = vshll.u32 %v3172, 16
      %v3199 = vrot.slane %v3197, 5
      %v3200 = vsel %vm538, %v3195, %v3199
      %v3202 = vshrl.u32 %v3173, 16
      %v3204 = vrot.slane %v3202, 4
      %v3205 = vshll.u32 %v3173, 16
      %v3207 = vrot.slane %v3205, 5
      %v3208 = vor.u32 %v3204, %v3207
      %v3209 = vrot.slane %v3208, 4
      %v3211 = vshll.u32 %v3174, 16
      %v3213 = vrot.slane %v3211, 5
      %v3214 = vsel %vm538, %v3209, %v3213
      %v3216 = vshrl.u32 %v3175, 16
      %v3218 = vrot.slane %v3216, 4
      %v3219 = vshll.u32 %v3175, 16
      %v3221 = vrot.slane %v3219, 5
      %v3222 = vor.u32 %v3218, %v3221
      %v3223 = vrot.slane %v3222, 4
      %v3225 = vshll.u32 %v3176, 16
      %v3227 = vrot.slane %v3225, 5
      %v3228 = vsel %vm538, %v3223, %v3227
      %v3230 = vshrl.u32 %v3177, 16
      %v3232 = vrot.slane %v3230, 4
      %v3233 = vshll.u32 %v3177, 16
      %v3235 = vrot.slane %v3233, 5
      %v3236 = vor.u32 %v3232, %v3235
      %v3237 = vrot.slane %v3236, 4
      %v3239 = vshll.u32 %v3178, 16
      %v3241 = vrot.slane %v3239, 5
      %v3242 = vsel %vm538, %v3237, %v3241
      %v3244 = vshrl.u32 %v3179, 16
      %v3246 = vrot.slane %v3244, 4
      %v3247 = vshll.u32 %v3179, 16
      %v3249 = vrot.slane %v3247, 5
      %v3250 = vor.u32 %v3246, %v3249
      %v3251 = vrot.slane %v3250, 4
      %v3253 = vshll.u32 %v3180, 16
      %v3255 = vrot.slane %v3253, 5
      %v3256 = vsel %vm538, %v3251, %v3255
      %v3258 = vshrl.u32 %v3181, 16
      %v3260 = vrot.slane %v3258, 4
      %v3261 = vshll.u32 %v3181, 16
      %v3263 = vrot.slane %v3261, 5
      %v3264 = vor.u32 %v3260, %v3263
      %v3265 = vrot.slane %v3264, 4
      %v3267 = vshll.u32 %v3182, 16
      %v3269 = vrot.slane %v3267, 5
      %v3270 = vsel %vm538, %v3265, %v3269
      %v3272 = vshrl.u32 %v3183, 16
      %v3274 = vrot.slane %v3272, 4
      %v3275 = vshll.u32 %v3183, 16
      %v3277 = vrot.slane %v3275, 5
      %v3278 = vor.u32 %v3274, %v3277
      %v3279 = vrot.slane %v3278, 4
      %v3281 = vshll.u32 %v3184, 16
      %v3283 = vrot.slane %v3281, 5
      %v3284 = vsel %vm538, %v3279, %v3283
      %v3286 = vshrl.u32 %v3185, 16
      %v3288 = vrot.slane %v3286, 4
      %v3289 = vshll.u32 %v3185, 16
      %v3291 = vrot.slane %v3289, 5
      %v3292 = vor.u32 %v3288, %v3291
      %v3293 = vrot.slane %v3292, 4
      %v3295 = vshll.u32 %v3186, 16
      %v3297 = vrot.slane %v3295, 5
      %v3298 = vsel %vm538, %v3293, %v3297
      %s3299 = scalar_lea.vmem %s3, 448
      %v3300 = vld [vmem:[%s3299] sm:$0xf]
      %v3301 = vld [vmem:[%s3299 + $0x4] sm:$0xf]
      %v3302 = vld [vmem:[%s3299 + $0x8] sm:$0xf]
      %v3303 = vld [vmem:[%s3299 + $0xc] sm:$0xf]
      %v3304 = vld [vmem:[%s3299 + $0x10] sm:$0xf]
      %v3305 = vld [vmem:[%s3299 + $0x14] sm:$0xf]
      %v3306 = vld [vmem:[%s3299 + $0x18] sm:$0xf]
      %v3307 = vld [vmem:[%s3299 + $0x1c] sm:$0xf]
      %v3308 = vld [vmem:[%s3299 + $0x20] sm:$0xf]
      %v3309 = vld [vmem:[%s3299 + $0x24] sm:$0xf]
      %v3310 = vld [vmem:[%s3299 + $0x28] sm:$0xf]
      %v3311 = vld [vmem:[%s3299 + $0x2c] sm:$0xf]
      %v3312 = vld [vmem:[%s3299 + $0x30] sm:$0xf]
      %v3313 = vld [vmem:[%s3299 + $0x34] sm:$0xf]
      %v3314 = vld [vmem:[%s3299 + $0x38] sm:$0xf]
      %v3315 = vld [vmem:[%s3299 + $0x3c] sm:$0xf]
      %v3316 = vunpack.c.l.b16 %v3200
      %v3317 = vunpack.c.l.b16 %v3214
      %v3318 = vunpack.c.l.b16 %v3228
      %v3319 = vunpack.c.l.b16 %v3242
      %v3320 = vunpack.c.l.b16 %v3256
      %v3321 = vunpack.c.l.b16 %v3270
      %v3322 = vunpack.c.l.b16 %v3284
      %v3323 = vunpack.c.l.b16 %v3298
      %v3324 = vpack.c.b16 %v3317, %v3316
      %v3325 = vpack.c.b16 %v3319, %v3318
      %v3326 = vpack.c.b16 %v3321, %v3320
      %v3327 = vpack.c.b16 %v3323, %v3322
      %v3348 = vunpack.c.l.b16 %v3300
      %v3349 = vunpack.c.l.b16 %v3301
      %v3350 = vunpack.c.l.b16 %v3302
      %v3351 = vunpack.c.l.b16 %v3303
      %v3352 = vunpack.c.l.b16 %v3304
      %v3353 = vunpack.c.l.b16 %v3305
      %v3354 = vunpack.c.l.b16 %v3306
      %v3355 = vunpack.c.l.b16 %v3307
      %v3356 = vunpack.c.l.b16 %v3308
      %v3357 = vunpack.c.l.b16 %v3309
      %v3358 = vunpack.c.l.b16 %v3310
      %v3359 = vunpack.c.l.b16 %v3311
      %v3360 = vunpack.c.l.b16 %v3312
      %v3361 = vunpack.c.l.b16 %v3313
      %v3362 = vunpack.c.l.b16 %v3314
      %v3363 = vunpack.c.l.b16 %v3315
      %v3364 = vpack.c.b16 %v3349, %v3348
      %v3365 = vpack.c.b16 %v3351, %v3350
      %v3366 = vpack.c.b16 %v3353, %v3352
      %v3367 = vpack.c.b16 %v3355, %v3354
      %v3368 = vpack.c.b16 %v3357, %v3356
      %v3369 = vpack.c.b16 %v3359, %v3358
      %v3370 = vpack.c.b16 %v3361, %v3360
      %v3371 = vpack.c.b16 %v3363, %v3362
      %3380 = vmatprep.subr.bf16.mxu0 0
      %3381 = vmatpush1.bf16.msra.mxu0 %v3371
      %3382 = vmatprep.subr.bf16.mxu0 0
      %3383 = vmatpush1.bf16.msra.mxu0 %v3370
      %3384 = vmatprep.subr.bf16.mxu0 0
      %3385 = vmatpush1.bf16.msra.mxu0 %v3369
      %3386 = vmatprep.subr.bf16.mxu0 0
      %3387 = vmatpush1.bf16.msra.mxu0 %v3368
      %3388 = vmatprep.subr.bf16.mxu0 0
      %3389 = vmatpush1.bf16.msra.mxu0 %v3367
      %3390 = vmatprep.subr.bf16.mxu0 0
      %3391 = vmatpush1.bf16.msra.mxu0 %v3366
      %3392 = vmatprep.subr.bf16.mxu0 0
      %3393 = vmatpush1.bf16.msra.mxu0 %v3365
      %3394 = vmatprep.subr.bf16.mxu0 0
      %3395 = vmatpush1.bf16.msra.mxu0 %v3364
      %3396 = vmatprep.subr.bf16.mxu0 0
      %3397 = vmatpush2.bf16.msra.mxu0 0
      %3398 = vmatprep.subr.bf16.mxu0 0
      %3399 = vmatpush2.bf16.msra.mxu0 0
      %3400 = vmatprep.subr.bf16.mxu0 0
      %3401 = vmatpush2.bf16.msra.mxu0 0
      %3402 = vmatprep.subr.bf16.mxu0 0
      %3403 = vmatpush2.bf16.msra.mxu0 0
      %3404 = vmatprep.subr.bf16.mxu0 0
      %3405 = vmatpush2.bf16.msra.mxu0 0
      %3406 = vmatprep.subr.bf16.mxu0 0
      %3407 = vmatpush2.bf16.msra.mxu0 0
      %3408 = vmatprep.subr.bf16.mxu0 0
      %3409 = vmatpush2.bf16.msra.mxu0 0
      %3410 = vmatprep.subr.bf16.mxu0 0
      %3411 = vmatpush2.bf16.msra.mxu0 0
      %3412 = vmatprep.mubr.bf16.mxu0 0
      %3413 = vmatmul.mubr.bf16.gmra.mxu0 %v3324
      %v3414 = vpop.f32.mrf.mxu0
      %v3415 = vadd.f32 0.0, %v3414
      %v3416 = vpop.f32.mrf.mxu0
      %v3417 = vpop.f32.mrf.mxu0
      %v3418 = vadd.f32 0.0, %v3417
      %v3419 = vpop.f32.mrf.mxu0
      %3420 = vmatprep.mubr.bf16.mxu0 0
      %3421 = vmatmul.mubr.bf16.gmra.mxu0 %v3325
      %v3422 = vpop.f32.mrf.mxu0
      %v3423 = vadd.f32 0.0, %v3422
      %v3424 = vpop.f32.mrf.mxu0
      %v3425 = vpop.f32.mrf.mxu0
      %v3426 = vadd.f32 0.0, %v3425
      %v3427 = vpop.f32.mrf.mxu0
      %3428 = vmatprep.mubr.bf16.mxu0 0
      %3429 = vmatmul.mubr.bf16.gmra.mxu0 %v3326
      %v3430 = vpop.f32.mrf.mxu0
      %v3431 = vadd.f32 0.0, %v3430
      %v3432 = vpop.f32.mrf.mxu0
      %v3433 = vpop.f32.mrf.mxu0
      %v3434 = vadd.f32 0.0, %v3433
      %v3435 = vpop.f32.mrf.mxu0
      %3436 = vmatprep.mubr.bf16.mxu0 0
      %3437 = vmatmul.mubr.bf16.gmra.mxu0 %v3327
      %v3438 = vpop.f32.mrf.mxu0
      %v3439 = vadd.f32 0.0, %v3438
      %v3440 = vpop.f32.mrf.mxu0
      %v3441 = vpop.f32.mrf.mxu0
      %v3442 = vadd.f32 0.0, %v3441
      %v3443 = vpop.f32.mrf.mxu0
      %3444 = vdwg.mxu0
      %v3445 = vadd.f32 %v3163, %v3415
      %v3446 = vadd.f32 %v3164, %v3418
      %v3447 = vadd.f32 %v3165, %v3423
      %v3448 = vadd.f32 %v3166, %v3426
      %v3449 = vadd.f32 %v3167, %v3431
      %v3450 = vadd.f32 %v3168, %v3434
      %v3451 = vadd.f32 %v3169, %v3439
      %v3452 = vadd.f32 %v3170, %v3442
      %v3453 = vld [vmem:[%s3000] sm:$0xe]
      %v3454 = vld [vmem:[%s3000 + $0x8] sm:$0xe]
      %v3455 = vld [vmem:[%s3000 + $0x10] sm:$0xe]
      %v3456 = vld [vmem:[%s3000 + $0x18] sm:$0xe]
      %v3457 = vld [vmem:[%s3000 + $0x20] sm:$0xe]
      %v3458 = vld [vmem:[%s3000 + $0x28] sm:$0xe]
      %v3459 = vld [vmem:[%s3000 + $0x30] sm:$0xe]
      %v3460 = vld [vmem:[%s3000 + $0x38] sm:$0xe]
      %v3477 = vrot.slane %v3453, 5
      %v3478 = vrot.slane %v3477, 4
      %v3479 = vrot.slane %v3172, 5
      %v3480 = vsel %vm2151, %v3478, %v3479
      %v3481 = vrot.slane %v3454, 5
      %v3482 = vrot.slane %v3481, 4
      %v3483 = vrot.slane %v3174, 5
      %v3484 = vsel %vm2151, %v3482, %v3483
      %v3485 = vrot.slane %v3455, 5
      %v3486 = vrot.slane %v3485, 4
      %v3487 = vrot.slane %v3176, 5
      %v3488 = vsel %vm2151, %v3486, %v3487
      %v3489 = vrot.slane %v3456, 5
      %v3490 = vrot.slane %v3489, 4
      %v3491 = vrot.slane %v3178, 5
      %v3492 = vsel %vm2151, %v3490, %v3491
      %v3493 = vrot.slane %v3457, 5
      %v3494 = vrot.slane %v3493, 4
      %v3495 = vrot.slane %v3180, 5
      %v3496 = vsel %vm2151, %v3494, %v3495
      %v3497 = vrot.slane %v3458, 5
      %v3498 = vrot.slane %v3497, 4
      %v3499 = vrot.slane %v3182, 5
      %v3500 = vsel %vm2151, %v3498, %v3499
      %v3501 = vrot.slane %v3459, 5
      %v3502 = vrot.slane %v3501, 4
      %v3503 = vrot.slane %v3184, 5
      %v3504 = vsel %vm2151, %v3502, %v3503
      %v3505 = vrot.slane %v3460, 5
      %v3506 = vrot.slane %v3505, 4
      %v3507 = vrot.slane %v3186, 5
      %v3508 = vsel %vm2151, %v3506, %v3507
      %s3509 = scalar_lea.vmem %s3, 512
      %v3510 = vld [vmem:[%s3509] sm:$0xf]
      %v3511 = vld [vmem:[%s3509 + $0x4] sm:$0xf]
      %v3512 = vld [vmem:[%s3509 + $0x8] sm:$0xf]
      %v3513 = vld [vmem:[%s3509 + $0xc] sm:$0xf]
      %v3514 = vld [vmem:[%s3509 + $0x10] sm:$0xf]
      %v3515 = vld [vmem:[%s3509 + $0x14] sm:$0xf]
      %v3516 = vld [vmem:[%s3509 + $0x18] sm:$0xf]
      %v3517 = vld [vmem:[%s3509 + $0x1c] sm:$0xf]
      %v3518 = vld [vmem:[%s3509 + $0x20] sm:$0xf]
      %v3519 = vld [vmem:[%s3509 + $0x24] sm:$0xf]
      %v3520 = vld [vmem:[%s3509 + $0x28] sm:$0xf]
      %v3521 = vld [vmem:[%s3509 + $0x2c] sm:$0xf]
      %v3522 = vld [vmem:[%s3509 + $0x30] sm:$0xf]
      %v3523 = vld [vmem:[%s3509 + $0x34] sm:$0xf]
      %v3524 = vld [vmem:[%s3509 + $0x38] sm:$0xf]
      %v3525 = vld [vmem:[%s3509 + $0x3c] sm:$0xf]
      %v3526 = vunpack.c.l.b16 %v3480
      %v3527 = vunpack.c.l.b16 %v3484
      %v3528 = vunpack.c.l.b16 %v3488
      %v3529 = vunpack.c.l.b16 %v3492
      %v3530 = vunpack.c.l.b16 %v3496
      %v3531 = vunpack.c.l.b16 %v3500
      %v3532 = vunpack.c.l.b16 %v3504
      %v3533 = vunpack.c.l.b16 %v3508
      %v3534 = vpack.c.b16 %v3527, %v3526
      %v3535 = vpack.c.b16 %v3529, %v3528
      %v3536 = vpack.c.b16 %v3531, %v3530
      %v3537 = vpack.c.b16 %v3533, %v3532
      %v3558 = vunpack.c.l.b16 %v3510
      %v3559 = vunpack.c.l.b16 %v3511
      %v3560 = vunpack.c.l.b16 %v3512
      %v3561 = vunpack.c.l.b16 %v3513
      %v3562 = vunpack.c.l.b16 %v3514
      %v3563 = vunpack.c.l.b16 %v3515
      %v3564 = vunpack.c.l.b16 %v3516
      %v3565 = vunpack.c.l.b16 %v3517
      %v3566 = vunpack.c.l.b16 %v3518
      %v3567 = vunpack.c.l.b16 %v3519
      %v3568 = vunpack.c.l.b16 %v3520
      %v3569 = vunpack.c.l.b16 %v3521
      %v3570 = vunpack.c.l.b16 %v3522
      %v3571 = vunpack.c.l.b16 %v3523
      %v3572 = vunpack.c.l.b16 %v3524
      %v3573 = vunpack.c.l.b16 %v3525
      %v3574 = vpack.c.b16 %v3559, %v3558
      %v3575 = vpack.c.b16 %v3561, %v3560
      %v3576 = vpack.c.b16 %v3563, %v3562
      %v3577 = vpack.c.b16 %v3565, %v3564
      %v3578 = vpack.c.b16 %v3567, %v3566
      %v3579 = vpack.c.b16 %v3569, %v3568
      %v3580 = vpack.c.b16 %v3571, %v3570
      %v3581 = vpack.c.b16 %v3573, %v3572
      %3590 = vmatprep.subr.bf16.mxu0 0
      %3591 = vmatpush1.bf16.msra.mxu0 %v3581
      %3592 = vmatprep.subr.bf16.mxu0 0
      %3593 = vmatpush1.bf16.msra.mxu0 %v3580
      %3594 = vmatprep.subr.bf16.mxu0 0
      %3595 = vmatpush1.bf16.msra.mxu0 %v3579
      %3596 = vmatprep.subr.bf16.mxu0 0
      %3597 = vmatpush1.bf16.msra.mxu0 %v3578
      %3598 = vmatprep.subr.bf16.mxu0 0
      %3599 = vmatpush1.bf16.msra.mxu0 %v3577
      %3600 = vmatprep.subr.bf16.mxu0 0
      %3601 = vmatpush1.bf16.msra.mxu0 %v3576
      %3602 = vmatprep.subr.bf16.mxu0 0
      %3603 = vmatpush1.bf16.msra.mxu0 %v3575
      %3604 = vmatprep.subr.bf16.mxu0 0
      %3605 = vmatpush1.bf16.msra.mxu0 %v3574
      %3606 = vmatprep.subr.bf16.mxu0 0
      %3607 = vmatpush2.bf16.msra.mxu0 0
      %3608 = vmatprep.subr.bf16.mxu0 0
      %3609 = vmatpush2.bf16.msra.mxu0 0
      %3610 = vmatprep.subr.bf16.mxu0 0
      %3611 = vmatpush2.bf16.msra.mxu0 0
      %3612 = vmatprep.subr.bf16.mxu0 0
      %3613 = vmatpush2.bf16.msra.mxu0 0
      %3614 = vmatprep.subr.bf16.mxu0 0
      %3615 = vmatpush2.bf16.msra.mxu0 0
      %3616 = vmatprep.subr.bf16.mxu0 0
      %3617 = vmatpush2.bf16.msra.mxu0 0
      %3618 = vmatprep.subr.bf16.mxu0 0
      %3619 = vmatpush2.bf16.msra.mxu0 0
      %3620 = vmatprep.subr.bf16.mxu0 0
      %3621 = vmatpush2.bf16.msra.mxu0 0
      %3622 = vmatprep.mubr.bf16.mxu0 0
      %3623 = vmatmul.mubr.bf16.gmra.mxu0 %v3534
      %v3624 = vpop.f32.mrf.mxu0
      %v3625 = vadd.f32 0.0, %v3624
      %v3626 = vpop.f32.mrf.mxu0
      %v3627 = vpop.f32.mrf.mxu0
      %v3628 = vadd.f32 0.0, %v3627
      %v3629 = vpop.f32.mrf.mxu0
      %3630 = vmatprep.mubr.bf16.mxu0 0
      %3631 = vmatmul.mubr.bf16.gmra.mxu0 %v3535
      %v3632 = vpop.f32.mrf.mxu0
      %v3633 = vadd.f32 0.0, %v3632
      %v3634 = vpop.f32.mrf.mxu0
      %v3635 = vpop.f32.mrf.mxu0
      %v3636 = vadd.f32 0.0, %v3635
      %v3637 = vpop.f32.mrf.mxu0
      %3638 = vmatprep.mubr.bf16.mxu0 0
      %3639 = vmatmul.mubr.bf16.gmra.mxu0 %v3536
      %v3640 = vpop.f32.mrf.mxu0
      %v3641 = vadd.f32 0.0, %v3640
      %v3642 = vpop.f32.mrf.mxu0
      %v3643 = vpop.f32.mrf.mxu0
      %v3644 = vadd.f32 0.0, %v3643
      %v3645 = vpop.f32.mrf.mxu0
      %3646 = vmatprep.mubr.bf16.mxu0 0
      %3647 = vmatmul.mubr.bf16.gmra.mxu0 %v3537
      %v3648 = vpop.f32.mrf.mxu0
      %v3649 = vadd.f32 0.0, %v3648
      %v3650 = vpop.f32.mrf.mxu0
      %v3651 = vpop.f32.mrf.mxu0
      %v3652 = vadd.f32 0.0, %v3651
      %v3653 = vpop.f32.mrf.mxu0
      %3654 = vdwg.mxu0
      %v3655 = vadd.f32 %v3445, %v3625
      %v3656 = vadd.f32 %v3446, %v3628
      %v3657 = vadd.f32 %v3447, %v3633
      %v3658 = vadd.f32 %v3448, %v3636
      %v3659 = vadd.f32 %v3449, %v3641
      %v3660 = vadd.f32 %v3450, %v3644
      %v3661 = vadd.f32 %v3451, %v3649
      %v3662 = vadd.f32 %v3452, %v3652
      %v3663 = vld [vmem:[%s4] sm:$0x1]
      %v3665 = vlaneseq
      %v3666 = vshrl.u32 %v3665, 7
      %v3667 = vsub.s32 0, %v3666
      %v3668 = vrot.slane %v3663, %v3667
      %v3670 = vadd.f32 %v3655, %v3668
      %v3671 = vadd.f32 %v3656, %v3668
      %v3672 = vadd.f32 %v3657, %v3668
      %v3673 = vadd.f32 %v3658, %v3668
      %v3674 = vadd.f32 %v3659, %v3668
      %v3675 = vadd.f32 %v3660, %v3668
      %v3676 = vadd.f32 %v3661, %v3668
      %v3677 = vadd.f32 %v3662, %v3668
      %v3678 = vmax.f32 %v3670, 0.0
      %v3679 = vmax.f32 %v3671, 0.0
      %v3680 = vmax.f32 %v3672, 0.0
      %v3681 = vmax.f32 %v3673, 0.0
      %v3682 = vmax.f32 %v3674, 0.0
      %v3683 = vmax.f32 %v3675, 0.0
      %v3684 = vmax.f32 %v3676, 0.0
      %v3685 = vmax.f32 %v3677, 0.0
      %3686 = vst [vmem:[#allocation3] sm:$0xf] 0
      %3687 = vst [vmem:[#allocation3 + $0x4] sm:$0x1] 0
      %3688 = vst [vmem:[#allocation3 + $0x8] sm:$0xf] 0
      %3689 = vst [vmem:[#allocation3 + $0xc] sm:$0x1] 0
      %3690 = vst [vmem:[#allocation3 + $0x10] sm:$0xf] 0
      %3691 = vst [vmem:[#allocation3 + $0x14] sm:$0x1] 0
      %3692 = vst [vmem:[#allocation3 + $0x18] sm:$0xf] 0
      %3693 = vst [vmem:[#allocation3 + $0x1c] sm:$0x1] 0
      %3694 = vst [vmem:[#allocation3 + $0x20] sm:$0xf] 0
      %3695 = vst [vmem:[#allocation3 + $0x24] sm:$0x1] 0
      %3696 = vst [vmem:[#allocation3 + $0x28] sm:$0xf] 0
      %3697 = vst [vmem:[#allocation3 + $0x2c] sm:$0x1] 0
      %3698 = vst [vmem:[#allocation3 + $0x30] sm:$0xf] 0
      %3699 = vst [vmem:[#allocation3 + $0x34] sm:$0x1] 0
      %3700 = vst [vmem:[#allocation3 + $0x38] sm:$0xf] 0
      %3701 = vst [vmem:[#allocation3 + $0x3c] sm:$0x1] 0
      %3702 = vst [vmem:[#allocation3 + $0x40] sm:$0xf] 0
      %3703 = vst [vmem:[#allocation3 + $0x44] sm:$0x1] 0
      %3704 = vst [vmem:[#allocation3 + $0x48] sm:$0xf] 0
      %3705 = vst [vmem:[#allocation3 + $0x4c] sm:$0x1] 0
      %v3706 = vpack.c.bf16 %v3678, %v3678
      %v3707 = vpack.c.bf16 %v3679, %v3679
      %v3708 = vpack.c.bf16 %v3680, %v3680
      %v3709 = vpack.c.bf16 %v3681, %v3681
      %v3710 = vpack.c.bf16 %v3682, %v3682
      %v3711 = vpack.c.bf16 %v3683, %v3683
      %v3712 = vpack.c.bf16 %v3684, %v3684
      %v3713 = vpack.c.bf16 %v3685, %v3685
      %v3722 = vunpack.c.l.b16 %v3706
      %v3723 = vunpack.c.l.b16 %v3707
      %v3724 = vunpack.c.l.b16 %v3708
      %v3725 = vunpack.c.l.b16 %v3709
      %v3726 = vunpack.c.l.b16 %v3710
      %v3727 = vunpack.c.l.b16 %v3711
      %v3728 = vunpack.c.l.b16 %v3712
      %v3729 = vunpack.c.l.b16 %v3713
      %v3730 = vpack.c.b16 %v3722, %v3722
      %v3731 = vpack.c.b16 %v3723, %v3723
      %v3732 = vpack.c.b16 %v3724, %v3724
      %v3733 = vpack.c.b16 %v3725, %v3725
      %v3734 = vpack.c.b16 %v3726, %v3726
      %v3735 = vpack.c.b16 %v3727, %v3727
      %v3736 = vpack.c.b16 %v3728, %v3728
      %v3737 = vpack.c.b16 %v3729, %v3729
      %v3739 = vshrl.u32 %v3730, 16
      %v3741 = vrot.slane %v3739, 7
      %v3742 = vshll.u32 %v3730, 16
      %v3744 = vor.u32 %v3741, %v3742
      %v3745 = vrot.slane %v3741, 4
      %v3747 = vshrl.u32 %v3731, 16
      %v3749 = vrot.slane %v3747, 7
      %v3750 = vshll.u32 %v3731, 16
      %v3752 = vor.u32 %v3749, %v3750
      %v3753 = vrot.slane %v3749, 4
      %v3755 = vshrl.u32 %v3732, 16
      %v3757 = vrot.slane %v3755, 7
      %v3758 = vshll.u32 %v3732, 16
      %v3760 = vor.u32 %v3757, %v3758
      %v3761 = vrot.slane %v3757, 4
      %v3763 = vshrl.u32 %v3733, 16
      %v3765 = vrot.slane %v3763, 7
      %v3766 = vshll.u32 %v3733, 16
      %v3768 = vor.u32 %v3765, %v3766
      %v3769 = vrot.slane %v3765, 4
      %v3771 = vshrl.u32 %v3734, 16
      %v3773 = vrot.slane %v3771, 7
      %v3774 = vshll.u32 %v3734, 16
      %v3776 = vor.u32 %v3773, %v3774
      %v3777 = vrot.slane %v3773, 4
      %v3779 = vshrl.u32 %v3735, 16
      %v3781 = vrot.slane %v3779, 7
      %v3782 = vshll.u32 %v3735, 16
      %v3784 = vor.u32 %v3781, %v3782
      %v3785 = vrot.slane %v3781, 4
      %v3787 = vshrl.u32 %v3736, 16
      %v3789 = vrot.slane %v3787, 7
      %v3790 = vshll.u32 %v3736, 16
      %v3792 = vor.u32 %v3789, %v3790
      %v3793 = vrot.slane %v3789, 4
      %v3795 = vshrl.u32 %v3737, 16
      %v3797 = vrot.slane %v3795, 7
      %v3798 = vshll.u32 %v3737, 16
      %v3800 = vor.u32 %v3797, %v3798
      %v3801 = vrot.slane %v3797, 4
      %s3818 = scalar_lea.vmem [#allocation3], 8
      %v3819 = vld [vmem:[%s3818] sm:$0xf]
      %v3820 = vsel %vm1646, %v3744, %v3819
      %3821 = vst [vmem:[%s3818] sm:$0xf] %v3820
      %v3822 = vld [vmem:[%s3818 + $0x4] sm:$0x1]
      %v3823 = vsel %vm1652, %v3745, %v3822
      %3824 = vst [vmem:[%s3818 + $0x4] sm:$0x1] %v3823
      %v3825 = vld [vmem:[%s3818 + $0x8] sm:$0xf]
      %v3826 = vsel %vm1646, %v3752, %v3825
      %3827 = vst [vmem:[%s3818 + $0x8] sm:$0xf] %v3826
      %v3828 = vld [vmem:[%s3818 + $0xc] sm:$0x1]
      %v3829 = vsel %vm1652, %v3753, %v3828
      %3830 = vst [vmem:[%s3818 + $0xc] sm:$0x1] %v3829
      %v3831 = vld [vmem:[%s3818 + $0x10] sm:$0xf]
      %v3832 = vsel %vm1646, %v3760, %v3831
      %3833 = vst [vmem:[%s3818 + $0x10] sm:$0xf] %v3832
      %v3834 = vld [vmem:[%s3818 + $0x14] sm:$0x1]
      %v3835 = vsel %vm1652, %v3761, %v3834
      %3836 = vst [vmem:[%s3818 + $0x14] sm:$0x1] %v3835
      %v3837 = vld [vmem:[%s3818 + $0x18] sm:$0xf]
      %v3838 = vsel %vm1646, %v3768, %v3837
      %3839 = vst [vmem:[%s3818 + $0x18] sm:$0xf] %v3838
      %v3840 = vld [vmem:[%s3818 + $0x1c] sm:$0x1]
      %v3841 = vsel %vm1652, %v3769, %v3840
      %3842 = vst [vmem:[%s3818 + $0x1c] sm:$0x1] %v3841
      %v3843 = vld [vmem:[%s3818 + $0x20] sm:$0xf]
      %v3844 = vsel %vm1646, %v3776, %v3843
      %3845 = vst [vmem:[%s3818 + $0x20] sm:$0xf] %v3844
      %v3846 = vld [vmem:[%s3818 + $0x24] sm:$0x1]
      %v3847 = vsel %vm1652, %v3777, %v3846
      %3848 = vst [vmem:[%s3818 + $0x24] sm:$0x1] %v3847
      %v3849 = vld [vmem:[%s3818 + $0x28] sm:$0xf]
      %v3850 = vsel %vm1646, %v3784, %v3849
      %3851 = vst [vmem:[%s3818 + $0x28] sm:$0xf] %v3850
      %v3852 = vld [vmem:[%s3818 + $0x2c] sm:$0x1]
      %v3853 = vsel %vm1652, %v3785, %v3852
      %3854 = vst [vmem:[%s3818 + $0x2c] sm:$0x1] %v3853
      %v3855 = vld [vmem:[%s3818 + $0x30] sm:$0xf]
      %v3856 = vsel %vm1646, %v3792, %v3855
      %3857 = vst [vmem:[%s3818 + $0x30] sm:$0xf] %v3856
      %v3858 = vld [vmem:[%s3818 + $0x34] sm:$0x1]
      %v3859 = vsel %vm1652, %v3793, %v3858
      %3860 = vst [vmem:[%s3818 + $0x34] sm:$0x1] %v3859
      %v3861 = vld [vmem:[%s3818 + $0x38] sm:$0xf]
      %v3862 = vsel %vm1646, %v3800, %v3861
      %3863 = vst [vmem:[%s3818 + $0x38] sm:$0xf] %v3862
      %v3864 = vld [vmem:[%s3818 + $0x3c] sm:$0x1]
      %v3865 = vsel %vm1652, %v3801, %v3864
      %3866 = vst [vmem:[%s3818 + $0x3c] sm:$0x1] %v3865
      %v3867 = vld [vmem:[#allocation3] sm:$0xf]
      %v3868 = vld [vmem:[#allocation3 + $0x8] sm:$0xf]
      %v3869 = vld [vmem:[#allocation3 + $0x10] sm:$0xf]
      %v3870 = vld [vmem:[#allocation3 + $0x18] sm:$0xf]
      %v3871 = vld [vmem:[#allocation3 + $0x20] sm:$0xf]
      %v3872 = vld [vmem:[#allocation3 + $0x28] sm:$0xf]
      %v3873 = vld [vmem:[#allocation3 + $0x30] sm:$0xf]
      %v3874 = vld [vmem:[#allocation3 + $0x38] sm:$0xf]
      %v3875 = vld [vmem:[%s5] sm:$0xf]
      %v3876 = vld [vmem:[%s5 + $0x4] sm:$0xf]
      %v3877 = vld [vmem:[%s5 + $0x8] sm:$0xf]
      %v3878 = vld [vmem:[%s5 + $0xc] sm:$0xf]
      %v3879 = vld [vmem:[%s5 + $0x10] sm:$0xf]
      %v3880 = vld [vmem:[%s5 + $0x14] sm:$0xf]
      %v3881 = vld [vmem:[%s5 + $0x18] sm:$0xf]
      %v3882 = vld [vmem:[%s5 + $0x1c] sm:$0xf]
      %v3883 = vld [vmem:[%s5 + $0x20] sm:$0xf]
      %v3884 = vld [vmem:[%s5 + $0x24] sm:$0xf]
      %v3885 = vld [vmem:[%s5 + $0x28] sm:$0xf]
      %v3886 = vld [vmem:[%s5 + $0x2c] sm:$0xf]
      %v3887 = vld [vmem:[%s5 + $0x30] sm:$0xf]
      %v3888 = vld [vmem:[%s5 + $0x34] sm:$0xf]
      %v3889 = vld [vmem:[%s5 + $0x38] sm:$0xf]
      %v3890 = vld [vmem:[%s5 + $0x3c] sm:$0xf]
      %v3891 = vld [vmem:[#allocation3 + $0x4] sm:$0x1]
      %v3892 = vld [vmem:[#allocation3 + $0xc] sm:$0x1]
      %v3893 = vld [vmem:[#allocation3 + $0x14] sm:$0x1]
      %v3894 = vld [vmem:[#allocation3 + $0x1c] sm:$0x1]
      %v3895 = vld [vmem:[#allocation3 + $0x24] sm:$0x1]
      %v3896 = vld [vmem:[#allocation3 + $0x2c] sm:$0x1]
      %v3897 = vld [vmem:[#allocation3 + $0x34] sm:$0x1]
      %v3898 = vld [vmem:[#allocation3 + $0x3c] sm:$0x1]
      %v3900 = vshrl.u32 %v3867, 16
      %v3902 = vrot.slane %v3900, 4
      %v3903 = vshll.u32 %v3867, 16
      %v3905 = vrot.slane %v3903, 5
      %v3906 = vor.u32 %v3902, %v3905
      %v3907 = vrot.slane %v3906, 4
      %v3909 = vshll.u32 %v3891, 16
      %v3911 = vrot.slane %v3909, 5
      %v3912 = vsel %vm538, %v3907, %v3911
      %v3914 = vshrl.u32 %v3868, 16
      %v3916 = vrot.slane %v3914, 4
      %v3917 = vshll.u32 %v3868, 16
      %v3919 = vrot.slane %v3917, 5
      %v3920 = vor.u32 %v3916, %v3919
      %v3921 = vrot.slane %v3920, 4
      %v3923 = vshll.u32 %v3892, 16
      %v3925 = vrot.slane %v3923, 5
      %v3926 = vsel %vm538, %v3921, %v3925
      %v3928 = vshrl.u32 %v3869, 16
      %v3930 = vrot.slane %v3928, 4
      %v3931 = vshll.u32 %v3869, 16
      %v3933 = vrot.slane %v3931, 5
      %v3934 = vor.u32 %v3930, %v3933
      %v3935 = vrot.slane %v3934, 4
      %v3937 = vshll.u32 %v3893, 16
      %v3939 = vrot.slane %v3937, 5
      %v3940 = vsel %vm538, %v3935, %v3939
      %v3942 = vshrl.u32 %v3870, 16
      %v3944 = vrot.slane %v3942, 4
      %v3945 = vshll.u32 %v3870, 16
      %v3947 = vrot.slane %v3945, 5
      %v3948 = vor.u32 %v3944, %v3947
      %v3949 = vrot.slane %v3948, 4
      %v3951 = vshll.u32 %v3894, 16
      %v3953 = vrot.slane %v3951, 5
      %v3954 = vsel %vm538, %v3949, %v3953
      %v3956 = vshrl.u32 %v3871, 16
      %v3958 = vrot.slane %v3956, 4
      %v3959 = vshll.u32 %v3871, 16
      %v3961 = vrot.slane %v3959, 5
      %v3962 = vor.u32 %v3958, %v3961
      %v3963 = vrot.slane %v3962, 4
      %v3965 = vshll.u32 %v3895, 16
      %v3967 = vrot.slane %v3965, 5
      %v3968 = vsel %vm538, %v3963, %v3967
      %v3970 = vshrl.u32 %v3872, 16
      %v3972 = vrot.slane %v3970, 4
      %v3973 = vshll.u32 %v3872, 16
      %v3975 = vrot.slane %v3973, 5
      %v3976 = vor.u32 %v3972, %v3975
      %v3977 = vrot.slane %v3976, 4
      %v3979 = vshll.u32 %v3896, 16
      %v3981 = vrot.slane %v3979, 5
      %v3982 = vsel %vm538, %v3977, %v3981
      %v3984 = vshrl.u32 %v3873, 16
      %v3986 = vrot.slane %v3984, 4
      %v3987 = vshll.u32 %v3873, 16
      %v3989 = vrot.slane %v3987, 5
      %v3990 = vor.u32 %v3986, %v3989
      %v3991 = vrot.slane %v3990, 4
      %v3993 = vshll.u32 %v3897, 16
      %v3995 = vrot.slane %v3993, 5
      %v3996 = vsel %vm538, %v3991, %v3995
      %v3998 = vshrl.u32 %v3874, 16
      %v4000 = vrot.slane %v3998, 4
      %v4001 = vshll.u32 %v3874, 16
      %v4003 = vrot.slane %v4001, 5
      %v4004 = vor.u32 %v4000, %v4003
      %v4005 = vrot.slane %v4004, 4
      %v4007 = vshll.u32 %v3898, 16
      %v4009 = vrot.slane %v4007, 5
      %v4010 = vsel %vm538, %v4005, %v4009
      %s4011 = scalar_lea.vmem %s5, 64
      %v4012 = vld [vmem:[%s4011] sm:$0xf]
      %v4013 = vld [vmem:[%s4011 + $0x4] sm:$0xf]
      %v4014 = vld [vmem:[%s4011 + $0x8] sm:$0xf]
      %v4015 = vld [vmem:[%s4011 + $0xc] sm:$0xf]
      %v4016 = vld [vmem:[%s4011 + $0x10] sm:$0xf]
      %v4017 = vld [vmem:[%s4011 + $0x14] sm:$0xf]
      %v4018 = vld [vmem:[%s4011 + $0x18] sm:$0xf]
      %v4019 = vld [vmem:[%s4011 + $0x1c] sm:$0xf]
      %v4020 = vld [vmem:[%s4011 + $0x20] sm:$0xf]
      %v4021 = vld [vmem:[%s4011 + $0x24] sm:$0xf]
      %v4022 = vld [vmem:[%s4011 + $0x28] sm:$0xf]
      %v4023 = vld [vmem:[%s4011 + $0x2c] sm:$0xf]
      %v4024 = vld [vmem:[%s4011 + $0x30] sm:$0xf]
      %v4025 = vld [vmem:[%s4011 + $0x34] sm:$0xf]
      %v4026 = vld [vmem:[%s4011 + $0x38] sm:$0xf]
      %v4027 = vld [vmem:[%s4011 + $0x3c] sm:$0xf]
      %v4028 = vunpack.c.l.b16 %v3912
      %v4029 = vunpack.c.l.b16 %v3926
      %v4030 = vunpack.c.l.b16 %v3940
      %v4031 = vunpack.c.l.b16 %v3954
      %v4032 = vunpack.c.l.b16 %v3968
      %v4033 = vunpack.c.l.b16 %v3982
      %v4034 = vunpack.c.l.b16 %v3996
      %v4035 = vunpack.c.l.b16 %v4010
      %v4036 = vpack.c.b16 %v4029, %v4028
      %v4037 = vpack.c.b16 %v4031, %v4030
      %v4038 = vpack.c.b16 %v4033, %v4032
      %v4039 = vpack.c.b16 %v4035, %v4034
      %v4060 = vunpack.c.l.b16 %v4012
      %v4061 = vunpack.c.l.b16 %v4013
      %v4062 = vunpack.c.l.b16 %v4014
      %v4063 = vunpack.c.l.b16 %v4015
      %v4064 = vunpack.c.l.b16 %v4016
      %v4065 = vunpack.c.l.b16 %v4017
      %v4066 = vunpack.c.l.b16 %v4018
      %v4067 = vunpack.c.l.b16 %v4019
      %v4068 = vunpack.c.l.b16 %v4020
      %v4069 = vunpack.c.l.b16 %v4021
      %v4070 = vunpack.c.l.b16 %v4022
      %v4071 = vunpack.c.l.b16 %v4023
      %v4072 = vunpack.c.l.b16 %v4024
      %v4073 = vunpack.c.l.b16 %v4025
      %v4074 = vunpack.c.l.b16 %v4026
      %v4075 = vunpack.c.l.b16 %v4027
      %v4076 = vpack.c.b16 %v4061, %v4060
      %v4077 = vpack.c.b16 %v4063, %v4062
      %v4078 = vpack.c.b16 %v4065, %v4064
      %v4079 = vpack.c.b16 %v4067, %v4066
      %v4080 = vpack.c.b16 %v4069, %v4068
      %v4081 = vpack.c.b16 %v4071, %v4070
      %v4082 = vpack.c.b16 %v4073, %v4072
      %v4083 = vpack.c.b16 %v4075, %v4074
      %4092 = vmatprep.subr.bf16.mxu0 0
      %4093 = vmatpush1.bf16.msra.mxu0 %v4083
      %4094 = vmatprep.subr.bf16.mxu0 0
      %4095 = vmatpush1.bf16.msra.mxu0 %v4082
      %4096 = vmatprep.subr.bf16.mxu0 0
      %4097 = vmatpush1.bf16.msra.mxu0 %v4081
      %4098 = vmatprep.subr.bf16.mxu0 0
      %4099 = vmatpush1.bf16.msra.mxu0 %v4080
      %4100 = vmatprep.subr.bf16.mxu0 0
      %4101 = vmatpush1.bf16.msra.mxu0 %v4079
      %4102 = vmatprep.subr.bf16.mxu0 0
      %4103 = vmatpush1.bf16.msra.mxu0 %v4078
      %4104 = vmatprep.subr.bf16.mxu0 0
      %4105 = vmatpush1.bf16.msra.mxu0 %v4077
      %4106 = vmatprep.subr.bf16.mxu0 0
      %4107 = vmatpush1.bf16.msra.mxu0 %v4076
      %4108 = vmatprep.subr.bf16.mxu0 0
      %4109 = vmatpush2.bf16.msra.mxu0 0
      %4110 = vmatprep.subr.bf16.mxu0 0
      %4111 = vmatpush2.bf16.msra.mxu0 0
      %4112 = vmatprep.subr.bf16.mxu0 0
      %4113 = vmatpush2.bf16.msra.mxu0 0
      %4114 = vmatprep.subr.bf16.mxu0 0
      %4115 = vmatpush2.bf16.msra.mxu0 0
      %4116 = vmatprep.subr.bf16.mxu0 0
      %4117 = vmatpush2.bf16.msra.mxu0 0
      %4118 = vmatprep.subr.bf16.mxu0 0
      %4119 = vmatpush2.bf16.msra.mxu0 0
      %4120 = vmatprep.subr.bf16.mxu0 0
      %4121 = vmatpush2.bf16.msra.mxu0 0
      %4122 = vmatprep.subr.bf16.mxu0 0
      %4123 = vmatpush2.bf16.msra.mxu0 0
      %4124 = vmatprep.mubr.bf16.mxu0 0
      %4125 = vmatmul.mubr.bf16.gmra.mxu0 %v4036
      %v4126 = vpop.f32.mrf.mxu0
      %v4127 = vadd.f32 0.0, %v4126
      %v4128 = vpop.f32.mrf.mxu0
      %v4129 = vpop.f32.mrf.mxu0
      %v4130 = vadd.f32 0.0, %v4129
      %v4131 = vpop.f32.mrf.mxu0
      %4132 = vmatprep.mubr.bf16.mxu0 0
      %4133 = vmatmul.mubr.bf16.gmra.mxu0 %v4037
      %v4134 = vpop.f32.mrf.mxu0
      %v4135 = vadd.f32 0.0, %v4134
      %v4136 = vpop.f32.mrf.mxu0
      %v4137 = vpop.f32.mrf.mxu0
      %v4138 = vadd.f32 0.0, %v4137
      %v4139 = vpop.f32.mrf.mxu0
      %4140 = vmatprep.mubr.bf16.mxu0 0
      %4141 = vmatmul.mubr.bf16.gmra.mxu0 %v4038
      %v4142 = vpop.f32.mrf.mxu0
      %v4143 = vadd.f32 0.0, %v4142
      %v4144 = vpop.f32.mrf.mxu0
      %v4145 = vpop.f32.mrf.mxu0
      %v4146 = vadd.f32 0.0, %v4145
      %v4147 = vpop.f32.mrf.mxu0
      %4148 = vmatprep.mubr.bf16.mxu0 0
      %4149 = vmatmul.mubr.bf16.gmra.mxu0 %v4039
      %v4150 = vpop.f32.mrf.mxu0
      %v4151 = vadd.f32 0.0, %v4150
      %v4152 = vpop.f32.mrf.mxu0
      %v4153 = vpop.f32.mrf.mxu0
      %v4154 = vadd.f32 0.0, %v4153
      %v4155 = vpop.f32.mrf.mxu0
      %4156 = vdwg.mxu0
      %v4165 = vunpack.c.l.b16 %v3867
      %v4166 = vunpack.c.l.b16 %v3868
      %v4167 = vunpack.c.l.b16 %v3869
      %v4168 = vunpack.c.l.b16 %v3870
      %v4169 = vunpack.c.l.b16 %v3871
      %v4170 = vunpack.c.l.b16 %v3872
      %v4171 = vunpack.c.l.b16 %v3873
      %v4172 = vunpack.c.l.b16 %v3874
      %v4173 = vpack.c.b16 %v4166, %v4165
      %v4174 = vpack.c.b16 %v4168, %v4167
      %v4175 = vpack.c.b16 %v4170, %v4169
      %v4176 = vpack.c.b16 %v4172, %v4171
      %v4197 = vunpack.c.l.b16 %v3875
      %v4198 = vunpack.c.l.b16 %v3876
      %v4199 = vunpack.c.l.b16 %v3877
      %v4200 = vunpack.c.l.b16 %v3878
      %v4201 = vunpack.c.l.b16 %v3879
      %v4202 = vunpack.c.l.b16 %v3880
      %v4203 = vunpack.c.l.b16 %v3881
      %v4204 = vunpack.c.l.b16 %v3882
      %v4205 = vunpack.c.l.b16 %v3883
      %v4206 = vunpack.c.l.b16 %v3884
      %v4207 = vunpack.c.l.b16 %v3885
      %v4208 = vunpack.c.l.b16 %v3886
      %v4209 = vunpack.c.l.b16 %v3887
      %v4210 = vunpack.c.l.b16 %v3888
      %v4211 = vunpack.c.l.b16 %v3889
      %v4212 = vunpack.c.l.b16 %v3890
      %v4213 = vpack.c.b16 %v4198, %v4197
      %v4214 = vpack.c.b16 %v4200, %v4199
      %v4215 = vpack.c.b16 %v4202, %v4201
      %v4216 = vpack.c.b16 %v4204, %v4203
      %v4217 = vpack.c.b16 %v4206, %v4205
      %v4218 = vpack.c.b16 %v4208, %v4207
      %v4219 = vpack.c.b16 %v4210, %v4209
      %v4220 = vpack.c.b16 %v4212, %v4211
      %4229 = vmatprep.subr.bf16.mxu0 0
      %4230 = vmatpush1.bf16.msra.mxu0 %v4220
      %4231 = vmatprep.subr.bf16.mxu0 0
      %4232 = vmatpush1.bf16.msra.mxu0 %v4219
      %4233 = vmatprep.subr.bf16.mxu0 0
      %4234 = vmatpush1.bf16.msra.mxu0 %v4218
      %4235 = vmatprep.subr.bf16.mxu0 0
      %4236 = vmatpush1.bf16.msra.mxu0 %v4217
      %4237 = vmatprep.subr.bf16.mxu0 0
      %4238 = vmatpush1.bf16.msra.mxu0 %v4216
      %4239 = vmatprep.subr.bf16.mxu0 0
      %4240 = vmatpush1.bf16.msra.mxu0 %v4215
      %4241 = vmatprep.subr.bf16.mxu0 0
      %4242 = vmatpush1.bf16.msra.mxu0 %v4214
      %4243 = vmatprep.subr.bf16.mxu0 0
      %4244 = vmatpush1.bf16.msra.mxu0 %v4213
      %4245 = vmatprep.subr.bf16.mxu0 0
      %4246 = vmatpush2.bf16.msra.mxu0 0
      %4247 = vmatprep.subr.bf16.mxu0 0
      %4248 = vmatpush2.bf16.msra.mxu0 0
      %4249 = vmatprep.subr.bf16.mxu0 0
      %4250 = vmatpush2.bf16.msra.mxu0 0
      %4251 = vmatprep.subr.bf16.mxu0 0
      %4252 = vmatpush2.bf16.msra.mxu0 0
      %4253 = vmatprep.subr.bf16.mxu0 0
      %4254 = vmatpush2.bf16.msra.mxu0 0
      %4255 = vmatprep.subr.bf16.mxu0 0
      %4256 = vmatpush2.bf16.msra.mxu0 0
      %4257 = vmatprep.subr.bf16.mxu0 0
      %4258 = vmatpush2.bf16.msra.mxu0 0
      %4259 = vmatprep.subr.bf16.mxu0 0
      %4260 = vmatpush2.bf16.msra.mxu0 0
      %4261 = vmatprep.mubr.bf16.mxu0 0
      %4262 = vmatmul.mubr.bf16.gmra.mxu0 %v4173
      %v4263 = vpop.f32.mrf.mxu0
      %v4264 = vadd.f32 %v4127, %v4263
      %v4265 = vpop.f32.mrf.mxu0
      %v4266 = vpop.f32.mrf.mxu0
      %v4267 = vadd.f32 %v4130, %v4266
      %v4268 = vpop.f32.mrf.mxu0
      %4269 = vmatprep.mubr.bf16.mxu0 0
      %4270 = vmatmul.mubr.bf16.gmra.mxu0 %v4174
      %v4271 = vpop.f32.mrf.mxu0
      %v4272 = vadd.f32 %v4135, %v4271
      %v4273 = vpop.f32.mrf.mxu0
      %v4274 = vpop.f32.mrf.mxu0
      %v4275 = vadd.f32 %v4138, %v4274
      %v4276 = vpop.f32.mrf.mxu0
      %4277 = vmatprep.mubr.bf16.mxu0 0
      %4278 = vmatmul.mubr.bf16.gmra.mxu0 %v4175
      %v4279 = vpop.f32.mrf.mxu0
      %v4280 = vadd.f32 %v4143, %v4279
      %v4281 = vpop.f32.mrf.mxu0
      %v4282 = vpop.f32.mrf.mxu0
      %v4283 = vadd.f32 %v4146, %v4282
      %v4284 = vpop.f32.mrf.mxu0
      %4285 = vmatprep.mubr.bf16.mxu0 0
      %4286 = vmatmul.mubr.bf16.gmra.mxu0 %v4176
      %v4287 = vpop.f32.mrf.mxu0
      %v4288 = vadd.f32 %v4151, %v4287
      %v4289 = vpop.f32.mrf.mxu0
      %v4290 = vpop.f32.mrf.mxu0
      %v4291 = vadd.f32 %v4154, %v4290
      %v4292 = vpop.f32.mrf.mxu0
      %4293 = vdwg.mxu0
      %v4294 = vld [vmem:[#allocation3] sm:$0xe]
      %v4295 = vld [vmem:[#allocation3 + $0x8] sm:$0xe]
      %v4296 = vld [vmem:[#allocation3 + $0x10] sm:$0xe]
      %v4297 = vld [vmem:[#allocation3 + $0x18] sm:$0xe]
      %v4298 = vld [vmem:[#allocation3 + $0x20] sm:$0xe]
      %v4299 = vld [vmem:[#allocation3 + $0x28] sm:$0xe]
      %v4300 = vld [vmem:[#allocation3 + $0x30] sm:$0xe]
      %v4301 = vld [vmem:[#allocation3 + $0x38] sm:$0xe]
      %v4318 = vrot.slane %v4294, 5
      %v4319 = vrot.slane %v4318, 4
      %v4320 = vrot.slane %v3891, 5
      %v4321 = vsel %vm2151, %v4319, %v4320
      %v4322 = vrot.slane %v4295, 5
      %v4323 = vrot.slane %v4322, 4
      %v4324 = vrot.slane %v3892, 5
      %v4325 = vsel %vm2151, %v4323, %v4324
      %v4326 = vrot.slane %v4296, 5
      %v4327 = vrot.slane %v4326, 4
      %v4328 = vrot.slane %v3893, 5
      %v4329 = vsel %vm2151, %v4327, %v4328
      %v4330 = vrot.slane %v4297, 5
      %v4331 = vrot.slane %v4330, 4
      %v4332 = vrot.slane %v3894, 5
      %v4333 = vsel %vm2151, %v4331, %v4332
      %v4334 = vrot.slane %v4298, 5
      %v4335 = vrot.slane %v4334, 4
      %v4336 = vrot.slane %v3895, 5
      %v4337 = vsel %vm2151, %v4335, %v4336
      %v4338 = vrot.slane %v4299, 5
      %v4339 = vrot.slane %v4338, 4
      %v4340 = vrot.slane %v3896, 5
      %v4341 = vsel %vm2151, %v4339, %v4340
      %v4342 = vrot.slane %v4300, 5
      %v4343 = vrot.slane %v4342, 4
      %v4344 = vrot.slane %v3897, 5
      %v4345 = vsel %vm2151, %v4343, %v4344
      %v4346 = vrot.slane %v4301, 5
      %v4347 = vrot.slane %v4346, 4
      %v4348 = vrot.slane %v3898, 5
      %v4349 = vsel %vm2151, %v4347, %v4348
      %s4350 = scalar_lea.vmem %s5, 128
      %v4351 = vld [vmem:[%s4350] sm:$0xf]
      %v4352 = vld [vmem:[%s4350 + $0x4] sm:$0xf]
      %v4353 = vld [vmem:[%s4350 + $0x8] sm:$0xf]
      %v4354 = vld [vmem:[%s4350 + $0xc] sm:$0xf]
      %v4355 = vld [vmem:[%s4350 + $0x10] sm:$0xf]
      %v4356 = vld [vmem:[%s4350 + $0x14] sm:$0xf]
      %v4357 = vld [vmem:[%s4350 + $0x18] sm:$0xf]
      %v4358 = vld [vmem:[%s4350 + $0x1c] sm:$0xf]
      %v4359 = vld [vmem:[%s4350 + $0x20] sm:$0xf]
      %v4360 = vld [vmem:[%s4350 + $0x24] sm:$0xf]
      %v4361 = vld [vmem:[%s4350 + $0x28] sm:$0xf]
      %v4362 = vld [vmem:[%s4350 + $0x2c] sm:$0xf]
      %v4363 = vld [vmem:[%s4350 + $0x30] sm:$0xf]
      %v4364 = vld [vmem:[%s4350 + $0x34] sm:$0xf]
      %v4365 = vld [vmem:[%s4350 + $0x38] sm:$0xf]
      %v4366 = vld [vmem:[%s4350 + $0x3c] sm:$0xf]
      %v4367 = vunpack.c.l.b16 %v4321
      %v4368 = vunpack.c.l.b16 %v4325
      %v4369 = vunpack.c.l.b16 %v4329
      %v4370 = vunpack.c.l.b16 %v4333
      %v4371 = vunpack.c.l.b16 %v4337
      %v4372 = vunpack.c.l.b16 %v4341
      %v4373 = vunpack.c.l.b16 %v4345
      %v4374 = vunpack.c.l.b16 %v4349
      %v4375 = vpack.c.b16 %v4368, %v4367
      %v4376 = vpack.c.b16 %v4370, %v4369
      %v4377 = vpack.c.b16 %v4372, %v4371
      %v4378 = vpack.c.b16 %v4374, %v4373
      %v4399 = vunpack.c.l.b16 %v4351
      %v4400 = vunpack.c.l.b16 %v4352
      %v4401 = vunpack.c.l.b16 %v4353
      %v4402 = vunpack.c.l.b16 %v4354
      %v4403 = vunpack.c.l.b16 %v4355
      %v4404 = vunpack.c.l.b16 %v4356
      %v4405 = vunpack.c.l.b16 %v4357
      %v4406 = vunpack.c.l.b16 %v4358
      %v4407 = vunpack.c.l.b16 %v4359
      %v4408 = vunpack.c.l.b16 %v4360
      %v4409 = vunpack.c.l.b16 %v4361
      %v4410 = vunpack.c.l.b16 %v4362
      %v4411 = vunpack.c.l.b16 %v4363
      %v4412 = vunpack.c.l.b16 %v4364
      %v4413 = vunpack.c.l.b16 %v4365
      %v4414 = vunpack.c.l.b16 %v4366
      %v4415 = vpack.c.b16 %v4400, %v4399
      %v4416 = vpack.c.b16 %v4402, %v4401
      %v4417 = vpack.c.b16 %v4404, %v4403
      %v4418 = vpack.c.b16 %v4406, %v4405
      %v4419 = vpack.c.b16 %v4408, %v4407
      %v4420 = vpack.c.b16 %v4410, %v4409
      %v4421 = vpack.c.b16 %v4412, %v4411
      %v4422 = vpack.c.b16 %v4414, %v4413
      %4431 = vmatprep.subr.bf16.mxu0 0
      %4432 = vmatpush1.bf16.msra.mxu0 %v4422
      %4433 = vmatprep.subr.bf16.mxu0 0
      %4434 = vmatpush1.bf16.msra.mxu0 %v4421
      %4435 = vmatprep.subr.bf16.mxu0 0
      %4436 = vmatpush1.bf16.msra.mxu0 %v4420
      %4437 = vmatprep.subr.bf16.mxu0 0
      %4438 = vmatpush1.bf16.msra.mxu0 %v4419
      %4439 = vmatprep.subr.bf16.mxu0 0
      %4440 = vmatpush1.bf16.msra.mxu0 %v4418
      %4441 = vmatprep.subr.bf16.mxu0 0
      %4442 = vmatpush1.bf16.msra.mxu0 %v4417
      %4443 = vmatprep.subr.bf16.mxu0 0
      %4444 = vmatpush1.bf16.msra.mxu0 %v4416
      %4445 = vmatprep.subr.bf16.mxu0 0
      %4446 = vmatpush1.bf16.msra.mxu0 %v4415
      %4447 = vmatprep.subr.bf16.mxu0 0
      %4448 = vmatpush2.bf16.msra.mxu0 0
      %4449 = vmatprep.subr.bf16.mxu0 0
      %4450 = vmatpush2.bf16.msra.mxu0 0
      %4451 = vmatprep.subr.bf16.mxu0 0
      %4452 = vmatpush2.bf16.msra.mxu0 0
      %4453 = vmatprep.subr.bf16.mxu0 0
      %4454 = vmatpush2.bf16.msra.mxu0 0
      %4455 = vmatprep.subr.bf16.mxu0 0
      %4456 = vmatpush2.bf16.msra.mxu0 0
      %4457 = vmatprep.subr.bf16.mxu0 0
      %4458 = vmatpush2.bf16.msra.mxu0 0
      %4459 = vmatprep.subr.bf16.mxu0 0
      %4460 = vmatpush2.bf16.msra.mxu0 0
      %4461 = vmatprep.subr.bf16.mxu0 0
      %4462 = vmatpush2.bf16.msra.mxu0 0
      %4463 = vmatprep.mubr.bf16.mxu0 0
      %4464 = vmatmul.mubr.bf16.gmra.mxu0 %v4375
      %v4465 = vpop.f32.mrf.mxu0
      %v4466 = vadd.f32 0.0, %v4465
      %v4467 = vpop.f32.mrf.mxu0
      %v4468 = vpop.f32.mrf.mxu0
      %v4469 = vadd.f32 0.0, %v4468
      %v4470 = vpop.f32.mrf.mxu0
      %4471 = vmatprep.mubr.bf16.mxu0 0
      %4472 = vmatmul.mubr.bf16.gmra.mxu0 %v4376
      %v4473 = vpop.f32.mrf.mxu0
      %v4474 = vadd.f32 0.0, %v4473
      %v4475 = vpop.f32.mrf.mxu0
      %v4476 = vpop.f32.mrf.mxu0
      %v4477 = vadd.f32 0.0, %v4476
      %v4478 = vpop.f32.mrf.mxu0
      %4479 = vmatprep.mubr.bf16.mxu0 0
      %4480 = vmatmul.mubr.bf16.gmra.mxu0 %v4377
      %v4481 = vpop.f32.mrf.mxu0
      %v4482 = vadd.f32 0.0, %v4481
      %v4483 = vpop.f32.mrf.mxu0
      %v4484 = vpop.f32.mrf.mxu0
      %v4485 = vadd.f32 0.0, %v4484
      %v4486 = vpop.f32.mrf.mxu0
      %4487 = vmatprep.mubr.bf16.mxu0 0
      %4488 = vmatmul.mubr.bf16.gmra.mxu0 %v4378
      %v4489 = vpop.f32.mrf.mxu0
      %v4490 = vadd.f32 0.0, %v4489
      %v4491 = vpop.f32.mrf.mxu0
      %v4492 = vpop.f32.mrf.mxu0
      %v4493 = vadd.f32 0.0, %v4492
      %v4494 = vpop.f32.mrf.mxu0
      %4495 = vdwg.mxu0
      %v4496 = vadd.f32 %v4264, %v4466
      %v4497 = vadd.f32 %v4267, %v4469
      %v4498 = vadd.f32 %v4272, %v4474
      %v4499 = vadd.f32 %v4275, %v4477
      %v4500 = vadd.f32 %v4280, %v4482
      %v4501 = vadd.f32 %v4283, %v4485
      %v4502 = vadd.f32 %v4288, %v4490
      %v4503 = vadd.f32 %v4291, %v4493
      %v4504 = vld [vmem:[%s3818] sm:$0xf]
      %v4505 = vld [vmem:[%s3818 + $0x8] sm:$0xf]
      %v4506 = vld [vmem:[%s3818 + $0x10] sm:$0xf]
      %v4507 = vld [vmem:[%s3818 + $0x18] sm:$0xf]
      %v4508 = vld [vmem:[%s3818 + $0x20] sm:$0xf]
      %v4509 = vld [vmem:[%s3818 + $0x28] sm:$0xf]
      %v4510 = vld [vmem:[%s3818 + $0x30] sm:$0xf]
      %v4511 = vld [vmem:[%s3818 + $0x38] sm:$0xf]
      %s4512 = scalar_lea.vmem %s5, 192
      %v4513 = vld [vmem:[%s4512] sm:$0xf]
      %v4514 = vld [vmem:[%s4512 + $0x4] sm:$0xf]
      %v4515 = vld [vmem:[%s4512 + $0x8] sm:$0xf]
      %v4516 = vld [vmem:[%s4512 + $0xc] sm:$0xf]
      %v4517 = vld [vmem:[%s4512 + $0x10] sm:$0xf]
      %v4518 = vld [vmem:[%s4512 + $0x14] sm:$0xf]
      %v4519 = vld [vmem:[%s4512 + $0x18] sm:$0xf]
      %v4520 = vld [vmem:[%s4512 + $0x1c] sm:$0xf]
      %v4521 = vld [vmem:[%s4512 + $0x20] sm:$0xf]
      %v4522 = vld [vmem:[%s4512 + $0x24] sm:$0xf]
      %v4523 = vld [vmem:[%s4512 + $0x28] sm:$0xf]
      %v4524 = vld [vmem:[%s4512 + $0x2c] sm:$0xf]
      %v4525 = vld [vmem:[%s4512 + $0x30] sm:$0xf]
      %v4526 = vld [vmem:[%s4512 + $0x34] sm:$0xf]
      %v4527 = vld [vmem:[%s4512 + $0x38] sm:$0xf]
      %v4528 = vld [vmem:[%s4512 + $0x3c] sm:$0xf]
      %v4537 = vunpack.c.l.b16 %v4504
      %v4538 = vunpack.c.l.b16 %v4505
      %v4539 = vunpack.c.l.b16 %v4506
      %v4540 = vunpack.c.l.b16 %v4507
      %v4541 = vunpack.c.l.b16 %v4508
      %v4542 = vunpack.c.l.b16 %v4509
      %v4543 = vunpack.c.l.b16 %v4510
      %v4544 = vunpack.c.l.b16 %v4511
      %v4545 = vpack.c.b16 %v4538, %v4537
      %v4546 = vpack.c.b16 %v4540, %v4539
      %v4547 = vpack.c.b16 %v4542, %v4541
      %v4548 = vpack.c.b16 %v4544, %v4543
      %v4569 = vunpack.c.l.b16 %v4513
      %v4570 = vunpack.c.l.b16 %v4514
      %v4571 = vunpack.c.l.b16 %v4515
      %v4572 = vunpack.c.l.b16 %v4516
      %v4573 = vunpack.c.l.b16 %v4517
      %v4574 = vunpack.c.l.b16 %v4518
      %v4575 = vunpack.c.l.b16 %v4519
      %v4576 = vunpack.c.l.b16 %v4520
      %v4577 = vunpack.c.l.b16 %v4521
      %v4578 = vunpack.c.l.b16 %v4522
      %v4579 = vunpack.c.l.b16 %v4523
      %v4580 = vunpack.c.l.b16 %v4524
      %v4581 = vunpack.c.l.b16 %v4525
      %v4582 = vunpack.c.l.b16 %v4526
      %v4583 = vunpack.c.l.b16 %v4527
      %v4584 = vunpack.c.l.b16 %v4528
      %v4585 = vpack.c.b16 %v4570, %v4569
      %v4586 = vpack.c.b16 %v4572, %v4571
      %v4587 = vpack.c.b16 %v4574, %v4573
      %v4588 = vpack.c.b16 %v4576, %v4575
      %v4589 = vpack.c.b16 %v4578, %v4577
      %v4590 = vpack.c.b16 %v4580, %v4579
      %v4591 = vpack.c.b16 %v4582, %v4581
      %v4592 = vpack.c.b16 %v4584, %v4583
      %4601 = vmatprep.subr.bf16.mxu0 0
      %4602 = vmatpush1.bf16.msra.mxu0 %v4592
      %4603 = vmatprep.subr.bf16.mxu0 0
      %4604 = vmatpush1.bf16.msra.mxu0 %v4591
      %4605 = vmatprep.subr.bf16.mxu0 0
      %4606 = vmatpush1.bf16.msra.mxu0 %v4590
      %4607 = vmatprep.subr.bf16.mxu0 0
      %4608 = vmatpush1.bf16.msra.mxu0 %v4589
      %4609 = vmatprep.subr.bf16.mxu0 0
      %4610 = vmatpush1.bf16.msra.mxu0 %v4588
      %4611 = vmatprep.subr.bf16.mxu0 0
      %4612 = vmatpush1.bf16.msra.mxu0 %v4587
      %4613 = vmatprep.subr.bf16.mxu0 0
      %4614 = vmatpush1.bf16.msra.mxu0 %v4586
      %4615 = vmatprep.subr.bf16.mxu0 0
      %4616 = vmatpush1.bf16.msra.mxu0 %v4585
      %4617 = vmatprep.subr.bf16.mxu0 0
      %4618 = vmatpush2.bf16.msra.mxu0 0
      %4619 = vmatprep.subr.bf16.mxu0 0
      %4620 = vmatpush2.bf16.msra.mxu0 0
      %4621 = vmatprep.subr.bf16.mxu0 0
      %4622 = vmatpush2.bf16.msra.mxu0 0
      %4623 = vmatprep.subr.bf16.mxu0 0
      %4624 = vmatpush2.bf16.msra.mxu0 0
      %4625 = vmatprep.subr.bf16.mxu0 0
      %4626 = vmatpush2.bf16.msra.mxu0 0
      %4627 = vmatprep.subr.bf16.mxu0 0
      %4628 = vmatpush2.bf16.msra.mxu0 0
      %4629 = vmatprep.subr.bf16.mxu0 0
      %4630 = vmatpush2.bf16.msra.mxu0 0
      %4631 = vmatprep.subr.bf16.mxu0 0
      %4632 = vmatpush2.bf16.msra.mxu0 0
      %4633 = vmatprep.mubr.bf16.mxu0 0
      %4634 = vmatmul.mubr.bf16.gmra.mxu0 %v4545
      %v4635 = vpop.f32.mrf.mxu0
      %v4636 = vadd.f32 0.0, %v4635
      %v4637 = vpop.f32.mrf.mxu0
      %v4638 = vpop.f32.mrf.mxu0
      %v4639 = vadd.f32 0.0, %v4638
      %v4640 = vpop.f32.mrf.mxu0
      %4641 = vmatprep.mubr.bf16.mxu0 0
      %4642 = vmatmul.mubr.bf16.gmra.mxu0 %v4546
      %v4643 = vpop.f32.mrf.mxu0
      %v4644 = vadd.f32 0.0, %v4643
      %v4645 = vpop.f32.mrf.mxu0
      %v4646 = vpop.f32.mrf.mxu0
      %v4647 = vadd.f32 0.0, %v4646
      %v4648 = vpop.f32.mrf.mxu0
      %4649 = vmatprep.mubr.bf16.mxu0 0
      %4650 = vmatmul.mubr.bf16.gmra.mxu0 %v4547
      %v4651 = vpop.f32.mrf.mxu0
      %v4652 = vadd.f32 0.0, %v4651
      %v4653 = vpop.f32.mrf.mxu0
      %v4654 = vpop.f32.mrf.mxu0
      %v4655 = vadd.f32 0.0, %v4654
      %v4656 = vpop.f32.mrf.mxu0
      %4657 = vmatprep.mubr.bf16.mxu0 0
      %4658 = vmatmul.mubr.bf16.gmra.mxu0 %v4548
      %v4659 = vpop.f32.mrf.mxu0
      %v4660 = vadd.f32 0.0, %v4659
      %v4661 = vpop.f32.mrf.mxu0
      %v4662 = vpop.f32.mrf.mxu0
      %v4663 = vadd.f32 0.0, %v4662
      %v4664 = vpop.f32.mrf.mxu0
      %4665 = vdwg.mxu0
      %v4666 = vadd.f32 %v4496, %v4636
      %v4667 = vadd.f32 %v4497, %v4639
      %v4668 = vadd.f32 %v4498, %v4644
      %v4669 = vadd.f32 %v4499, %v4647
      %v4670 = vadd.f32 %v4500, %v4652
      %v4671 = vadd.f32 %v4501, %v4655
      %v4672 = vadd.f32 %v4502, %v4660
      %v4673 = vadd.f32 %v4503, %v4663
      %v4674 = vld [vmem:[%s3818] sm:$0xf]
      %v4675 = vld [vmem:[%s3818 + $0x4] sm:$0x1]
      %v4676 = vld [vmem:[%s3818 + $0x8] sm:$0xf]
      %v4677 = vld [vmem:[%s3818 + $0xc] sm:$0x1]
      %v4678 = vld [vmem:[%s3818 + $0x10] sm:$0xf]
      %v4679 = vld [vmem:[%s3818 + $0x14] sm:$0x1]
      %v4680 = vld [vmem:[%s3818 + $0x18] sm:$0xf]
      %v4681 = vld [vmem:[%s3818 + $0x1c] sm:$0x1]
      %v4682 = vld [vmem:[%s3818 + $0x20] sm:$0xf]
      %v4683 = vld [vmem:[%s3818 + $0x24] sm:$0x1]
      %v4684 = vld [vmem:[%s3818 + $0x28] sm:$0xf]
      %v4685 = vld [vmem:[%s3818 + $0x2c] sm:$0x1]
      %v4686 = vld [vmem:[%s3818 + $0x30] sm:$0xf]
      %v4687 = vld [vmem:[%s3818 + $0x34] sm:$0x1]
      %v4688 = vld [vmem:[%s3818 + $0x38] sm:$0xf]
      %v4689 = vld [vmem:[%s3818 + $0x3c] sm:$0x1]
      %v4691 = vshrl.u32 %v4674, 16
      %v4693 = vrot.slane %v4691, 4
      %v4694 = vshll.u32 %v4674, 16
      %v4696 = vrot.slane %v4694, 5
      %v4697 = vor.u32 %v4693, %v4696
      %v4698 = vrot.slane %v4697, 4
      %v4700 = vshll.u32 %v4675, 16
      %v4702 = vrot.slane %v4700, 5
      %v4703 = vsel %vm538, %v4698, %v4702
      %v4705 = vshrl.u32 %v4676, 16
      %v4707 = vrot.slane %v4705, 4
      %v4708 = vshll.u32 %v4676, 16
      %v4710 = vrot.slane %v4708, 5
      %v4711 = vor.u32 %v4707, %v4710
      %v4712 = vrot.slane %v4711, 4
      %v4714 = vshll.u32 %v4677, 16
      %v4716 = vrot.slane %v4714, 5
      %v4717 = vsel %vm538, %v4712, %v4716
      %v4719 = vshrl.u32 %v4678, 16
      %v4721 = vrot.slane %v4719, 4
      %v4722 = vshll.u32 %v4678, 16
      %v4724 = vrot.slane %v4722, 5
      %v4725 = vor.u32 %v4721, %v4724
      %v4726 = vrot.slane %v4725, 4
      %v4728 = vshll.u32 %v4679, 16
      %v4730 = vrot.slane %v4728, 5
      %v4731 = vsel %vm538, %v4726, %v4730
      %v4733 = vshrl.u32 %v4680, 16
      %v4735 = vrot.slane %v4733, 4
      %v4736 = vshll.u32 %v4680, 16
      %v4738 = vrot.slane %v4736, 5
      %v4739 = vor.u32 %v4735, %v4738
      %v4740 = vrot.slane %v4739, 4
      %v4742 = vshll.u32 %v4681, 16
      %v4744 = vrot.slane %v4742, 5
      %v4745 = vsel %vm538, %v4740, %v4744
      %v4747 = vshrl.u32 %v4682, 16
      %v4749 = vrot.slane %v4747, 4
      %v4750 = vshll.u32 %v4682, 16
      %v4752 = vrot.slane %v4750, 5
      %v4753 = vor.u32 %v4749, %v4752
      %v4754 = vrot.slane %v4753, 4
      %v4756 = vshll.u32 %v4683, 16
      %v4758 = vrot.slane %v4756, 5
      %v4759 = vsel %vm538, %v4754, %v4758
      %v4761 = vshrl.u32 %v4684, 16
      %v4763 = vrot.slane %v4761, 4
      %v4764 = vshll.u32 %v4684, 16
      %v4766 = vrot.slane %v4764, 5
      %v4767 = vor.u32 %v4763, %v4766
      %v4768 = vrot.slane %v4767, 4
      %v4770 = vshll.u32 %v4685, 16
      %v4772 = vrot.slane %v4770, 5
      %v4773 = vsel %vm538, %v4768, %v4772
      %v4775 = vshrl.u32 %v4686, 16
      %v4777 = vrot.slane %v4775, 4
      %v4778 = vshll.u32 %v4686, 16
      %v4780 = vrot.slane %v4778, 5
      %v4781 = vor.u32 %v4777, %v4780
      %v4782 = vrot.slane %v4781, 4
      %v4784 = vshll.u32 %v4687, 16
      %v4786 = vrot.slane %v4784, 5
      %v4787 = vsel %vm538, %v4782, %v4786
      %v4789 = vshrl.u32 %v4688, 16
      %v4791 = vrot.slane %v4789, 4
      %v4792 = vshll.u32 %v4688, 16
      %v4794 = vrot.slane %v4792, 5
      %v4795 = vor.u32 %v4791, %v4794
      %v4796 = vrot.slane %v4795, 4
      %v4798 = vshll.u32 %v4689, 16
      %v4800 = vrot.slane %v4798, 5
      %v4801 = vsel %vm538, %v4796, %v4800
      %s4802 = scalar_lea.vmem %s5, 256
      %v4803 = vld [vmem:[%s4802] sm:$0xf]
      %v4804 = vld [vmem:[%s4802 + $0x4] sm:$0xf]
      %v4805 = vld [vmem:[%s4802 + $0x8] sm:$0xf]
      %v4806 = vld [vmem:[%s4802 + $0xc] sm:$0xf]
      %v4807 = vld [vmem:[%s4802 + $0x10] sm:$0xf]
      %v4808 = vld [vmem:[%s4802 + $0x14] sm:$0xf]
      %v4809 = vld [vmem:[%s4802 + $0x18] sm:$0xf]
      %v4810 = vld [vmem:[%s4802 + $0x1c] sm:$0xf]
      %v4811 = vld [vmem:[%s4802 + $0x20] sm:$0xf]
      %v4812 = vld [vmem:[%s4802 + $0x24] sm:$0xf]
      %v4813 = vld [vmem:[%s4802 + $0x28] sm:$0xf]
      %v4814 = vld [vmem:[%s4802 + $0x2c] sm:$0xf]
      %v4815 = vld [vmem:[%s4802 + $0x30] sm:$0xf]
      %v4816 = vld [vmem:[%s4802 + $0x34] sm:$0xf]
      %v4817 = vld [vmem:[%s4802 + $0x38] sm:$0xf]
      %v4818 = vld [vmem:[%s4802 + $0x3c] sm:$0xf]
      %v4819 = vunpack.c.l.b16 %v4703
      %v4820 = vunpack.c.l.b16 %v4717
      %v4821 = vunpack.c.l.b16 %v4731
      %v4822 = vunpack.c.l.b16 %v4745
      %v4823 = vunpack.c.l.b16 %v4759
      %v4824 = vunpack.c.l.b16 %v4773
      %v4825 = vunpack.c.l.b16 %v4787
      %v4826 = vunpack.c.l.b16 %v4801
      %v4827 = vpack.c.b16 %v4820, %v4819
      %v4828 = vpack.c.b16 %v4822, %v4821
      %v4829 = vpack.c.b16 %v4824, %v4823
      %v4830 = vpack.c.b16 %v4826, %v4825
      %v4851 = vunpack.c.l.b16 %v4803
      %v4852 = vunpack.c.l.b16 %v4804
      %v4853 = vunpack.c.l.b16 %v4805
      %v4854 = vunpack.c.l.b16 %v4806
      %v4855 = vunpack.c.l.b16 %v4807
      %v4856 = vunpack.c.l.b16 %v4808
      %v4857 = vunpack.c.l.b16 %v4809
      %v4858 = vunpack.c.l.b16 %v4810
      %v4859 = vunpack.c.l.b16 %v4811
      %v4860 = vunpack.c.l.b16 %v4812
      %v4861 = vunpack.c.l.b16 %v4813
      %v4862 = vunpack.c.l.b16 %v4814
      %v4863 = vunpack.c.l.b16 %v4815
      %v4864 = vunpack.c.l.b16 %v4816
      %v4865 = vunpack.c.l.b16 %v4817
      %v4866 = vunpack.c.l.b16 %v4818
      %v4867 = vpack.c.b16 %v4852, %v4851
      %v4868 = vpack.c.b16 %v4854, %v4853
      %v4869 = vpack.c.b16 %v4856, %v4855
      %v4870 = vpack.c.b16 %v4858, %v4857
      %v4871 = vpack.c.b16 %v4860, %v4859
      %v4872 = vpack.c.b16 %v4862, %v4861
      %v4873 = vpack.c.b16 %v4864, %v4863
      %v4874 = vpack.c.b16 %v4866, %v4865
      %4883 = vmatprep.subr.bf16.mxu0 0
      %4884 = vmatpush1.bf16.msra.mxu0 %v4874
      %4885 = vmatprep.subr.bf16.mxu0 0
      %4886 = vmatpush1.bf16.msra.mxu0 %v4873
      %4887 = vmatprep.subr.bf16.mxu0 0
      %4888 = vmatpush1.bf16.msra.mxu0 %v4872
      %4889 = vmatprep.subr.bf16.mxu0 0
      %4890 = vmatpush1.bf16.msra.mxu0 %v4871
      %4891 = vmatprep.subr.bf16.mxu0 0
      %4892 = vmatpush1.bf16.msra.mxu0 %v4870
      %4893 = vmatprep.subr.bf16.mxu0 0
      %4894 = vmatpush1.bf16.msra.mxu0 %v4869
      %4895 = vmatprep.subr.bf16.mxu0 0
      %4896 = vmatpush1.bf16.msra.mxu0 %v4868
      %4897 = vmatprep.subr.bf16.mxu0 0
      %4898 = vmatpush1.bf16.msra.mxu0 %v4867
      %4899 = vmatprep.subr.bf16.mxu0 0
      %4900 = vmatpush2.bf16.msra.mxu0 0
      %4901 = vmatprep.subr.bf16.mxu0 0
      %4902 = vmatpush2.bf16.msra.mxu0 0
      %4903 = vmatprep.subr.bf16.mxu0 0
      %4904 = vmatpush2.bf16.msra.mxu0 0
      %4905 = vmatprep.subr.bf16.mxu0 0
      %4906 = vmatpush2.bf16.msra.mxu0 0
      %4907 = vmatprep.subr.bf16.mxu0 0
      %4908 = vmatpush2.bf16.msra.mxu0 0
      %4909 = vmatprep.subr.bf16.mxu0 0
      %4910 = vmatpush2.bf16.msra.mxu0 0
      %4911 = vmatprep.subr.bf16.mxu0 0
      %4912 = vmatpush2.bf16.msra.mxu0 0
      %4913 = vmatprep.subr.bf16.mxu0 0
      %4914 = vmatpush2.bf16.msra.mxu0 0
      %4915 = vmatprep.mubr.bf16.mxu0 0
      %4916 = vmatmul.mubr.bf16.gmra.mxu0 %v4827
      %v4917 = vpop.f32.mrf.mxu0
      %v4918 = vadd.f32 0.0, %v4917
      %v4919 = vpop.f32.mrf.mxu0
      %v4920 = vpop.f32.mrf.mxu0
      %v4921 = vadd.f32 0.0, %v4920
      %v4922 = vpop.f32.mrf.mxu0
      %4923 = vmatprep.mubr.bf16.mxu0 0
      %4924 = vmatmul.mubr.bf16.gmra.mxu0 %v4828
      %v4925 = vpop.f32.mrf.mxu0
      %v4926 = vadd.f32 0.0, %v4925
      %v4927 = vpop.f32.mrf.mxu0
      %v4928 = vpop.f32.mrf.mxu0
      %v4929 = vadd.f32 0.0, %v4928
      %v4930 = vpop.f32.mrf.mxu0
      %4931 = vmatprep.mubr.bf16.mxu0 0
      %4932 = vmatmul.mubr.bf16.gmra.mxu0 %v4829
      %v4933 = vpop.f32.mrf.mxu0
      %v4934 = vadd.f32 0.0, %v4933
      %v4935 = vpop.f32.mrf.mxu0
      %v4936 = vpop.f32.mrf.mxu0
      %v4937 = vadd.f32 0.0, %v4936
      %v4938 = vpop.f32.mrf.mxu0
      %4939 = vmatprep.mubr.bf16.mxu0 0
      %4940 = vmatmul.mubr.bf16.gmra.mxu0 %v4830
      %v4941 = vpop.f32.mrf.mxu0
      %v4942 = vadd.f32 0.0, %v4941
      %v4943 = vpop.f32.mrf.mxu0
      %v4944 = vpop.f32.mrf.mxu0
      %v4945 = vadd.f32 0.0, %v4944
      %v4946 = vpop.f32.mrf.mxu0
      %4947 = vdwg.mxu0
      %v4948 = vadd.f32 %v4666, %v4918
      %v4949 = vadd.f32 %v4667, %v4921
      %v4950 = vadd.f32 %v4668, %v4926
      %v4951 = vadd.f32 %v4669, %v4929
      %v4952 = vadd.f32 %v4670, %v4934
      %v4953 = vadd.f32 %v4671, %v4937
      %v4954 = vadd.f32 %v4672, %v4942
      %v4955 = vadd.f32 %v4673, %v4945
      %v4956 = vld [vmem:[%s3818] sm:$0xe]
      %v4957 = vld [vmem:[%s3818 + $0x8] sm:$0xe]
      %v4958 = vld [vmem:[%s3818 + $0x10] sm:$0xe]
      %v4959 = vld [vmem:[%s3818 + $0x18] sm:$0xe]
      %v4960 = vld [vmem:[%s3818 + $0x20] sm:$0xe]
      %v4961 = vld [vmem:[%s3818 + $0x28] sm:$0xe]
      %v4962 = vld [vmem:[%s3818 + $0x30] sm:$0xe]
      %v4963 = vld [vmem:[%s3818 + $0x38] sm:$0xe]
      %v4980 = vrot.slane %v4956, 5
      %v4981 = vrot.slane %v4980, 4
      %v4982 = vrot.slane %v4675, 5
      %v4983 = vsel %vm2151, %v4981, %v4982
      %v4984 = vrot.slane %v4957, 5
      %v4985 = vrot.slane %v4984, 4
      %v4986 = vrot.slane %v4677, 5
      %v4987 = vsel %vm2151, %v4985, %v4986
      %v4988 = vrot.slane %v4958, 5
      %v4989 = vrot.slane %v4988, 4
      %v4990 = vrot.slane %v4679, 5
      %v4991 = vsel %vm2151, %v4989, %v4990
      %v4992 = vrot.slane %v4959, 5
      %v4993 = vrot.slane %v4992, 4
      %v4994 = vrot.slane %v4681, 5
      %v4995 = vsel %vm2151, %v4993, %v4994
      %v4996 = vrot.slane %v4960, 5
      %v4997 = vrot.slane %v4996, 4
      %v4998 = vrot.slane %v4683, 5
      %v4999 = vsel %vm2151, %v4997, %v4998
      %v5000 = vrot.slane %v4961, 5
      %v5001 = vrot.slane %v5000, 4
      %v5002 = vrot.slane %v4685, 5
      %v5003 = vsel %vm2151, %v5001, %v5002
      %v5004 = vrot.slane %v4962, 5
      %v5005 = vrot.slane %v5004, 4
      %v5006 = vrot.slane %v4687, 5
      %v5007 = vsel %vm2151, %v5005, %v5006
      %v5008 = vrot.slane %v4963, 5
      %v5009 = vrot.slane %v5008, 4
      %v5010 = vrot.slane %v4689, 5
      %v5011 = vsel %vm2151, %v5009, %v5010
      %s5012 = scalar_lea.vmem %s5, 320
      %v5013 = vld [vmem:[%s5012] sm:$0xf]
      %v5014 = vld [vmem:[%s5012 + $0x4] sm:$0xf]
      %v5015 = vld [vmem:[%s5012 + $0x8] sm:$0xf]
      %v5016 = vld [vmem:[%s5012 + $0xc] sm:$0xf]
      %v5017 = vld [vmem:[%s5012 + $0x10] sm:$0xf]
      %v5018 = vld [vmem:[%s5012 + $0x14] sm:$0xf]
      %v5019 = vld [vmem:[%s5012 + $0x18] sm:$0xf]
      %v5020 = vld [vmem:[%s5012 + $0x1c] sm:$0xf]
      %v5021 = vld [vmem:[%s5012 + $0x20] sm:$0xf]
      %v5022 = vld [vmem:[%s5012 + $0x24] sm:$0xf]
      %v5023 = vld [vmem:[%s5012 + $0x28] sm:$0xf]
      %v5024 = vld [vmem:[%s5012 + $0x2c] sm:$0xf]
      %v5025 = vld [vmem:[%s5012 + $0x30] sm:$0xf]
      %v5026 = vld [vmem:[%s5012 + $0x34] sm:$0xf]
      %v5027 = vld [vmem:[%s5012 + $0x38] sm:$0xf]
      %v5028 = vld [vmem:[%s5012 + $0x3c] sm:$0xf]
      %v5029 = vunpack.c.l.b16 %v4983
      %v5030 = vunpack.c.l.b16 %v4987
      %v5031 = vunpack.c.l.b16 %v4991
      %v5032 = vunpack.c.l.b16 %v4995
      %v5033 = vunpack.c.l.b16 %v4999
      %v5034 = vunpack.c.l.b16 %v5003
      %v5035 = vunpack.c.l.b16 %v5007
      %v5036 = vunpack.c.l.b16 %v5011
      %v5037 = vpack.c.b16 %v5030, %v5029
      %v5038 = vpack.c.b16 %v5032, %v5031
      %v5039 = vpack.c.b16 %v5034, %v5033
      %v5040 = vpack.c.b16 %v5036, %v5035
      %v5061 = vunpack.c.l.b16 %v5013
      %v5062 = vunpack.c.l.b16 %v5014
      %v5063 = vunpack.c.l.b16 %v5015
      %v5064 = vunpack.c.l.b16 %v5016
      %v5065 = vunpack.c.l.b16 %v5017
      %v5066 = vunpack.c.l.b16 %v5018
      %v5067 = vunpack.c.l.b16 %v5019
      %v5068 = vunpack.c.l.b16 %v5020
      %v5069 = vunpack.c.l.b16 %v5021
      %v5070 = vunpack.c.l.b16 %v5022
      %v5071 = vunpack.c.l.b16 %v5023
      %v5072 = vunpack.c.l.b16 %v5024
      %v5073 = vunpack.c.l.b16 %v5025
      %v5074 = vunpack.c.l.b16 %v5026
      %v5075 = vunpack.c.l.b16 %v5027
      %v5076 = vunpack.c.l.b16 %v5028
      %v5077 = vpack.c.b16 %v5062, %v5061
      %v5078 = vpack.c.b16 %v5064, %v5063
      %v5079 = vpack.c.b16 %v5066, %v5065
      %v5080 = vpack.c.b16 %v5068, %v5067
      %v5081 = vpack.c.b16 %v5070, %v5069
      %v5082 = vpack.c.b16 %v5072, %v5071
      %v5083 = vpack.c.b16 %v5074, %v5073
      %v5084 = vpack.c.b16 %v5076, %v5075
      %5093 = vmatprep.subr.bf16.mxu0 0
      %5094 = vmatpush1.bf16.msra.mxu0 %v5084
      %5095 = vmatprep.subr.bf16.mxu0 0
      %5096 = vmatpush1.bf16.msra.mxu0 %v5083
      %5097 = vmatprep.subr.bf16.mxu0 0
      %5098 = vmatpush1.bf16.msra.mxu0 %v5082
      %5099 = vmatprep.subr.bf16.mxu0 0
      %5100 = vmatpush1.bf16.msra.mxu0 %v5081
      %5101 = vmatprep.subr.bf16.mxu0 0
      %5102 = vmatpush1.bf16.msra.mxu0 %v5080
      %5103 = vmatprep.subr.bf16.mxu0 0
      %5104 = vmatpush1.bf16.msra.mxu0 %v5079
      %5105 = vmatprep.subr.bf16.mxu0 0
      %5106 = vmatpush1.bf16.msra.mxu0 %v5078
      %5107 = vmatprep.subr.bf16.mxu0 0
      %5108 = vmatpush1.bf16.msra.mxu0 %v5077
      %5109 = vmatprep.subr.bf16.mxu0 0
      %5110 = vmatpush2.bf16.msra.mxu0 0
      %5111 = vmatprep.subr.bf16.mxu0 0
      %5112 = vmatpush2.bf16.msra.mxu0 0
      %5113 = vmatprep.subr.bf16.mxu0 0
      %5114 = vmatpush2.bf16.msra.mxu0 0
      %5115 = vmatprep.subr.bf16.mxu0 0
      %5116 = vmatpush2.bf16.msra.mxu0 0
      %5117 = vmatprep.subr.bf16.mxu0 0
      %5118 = vmatpush2.bf16.msra.mxu0 0
      %5119 = vmatprep.subr.bf16.mxu0 0
      %5120 = vmatpush2.bf16.msra.mxu0 0
      %5121 = vmatprep.subr.bf16.mxu0 0
      %5122 = vmatpush2.bf16.msra.mxu0 0
      %5123 = vmatprep.subr.bf16.mxu0 0
      %5124 = vmatpush2.bf16.msra.mxu0 0
      %5125 = vmatprep.mubr.bf16.mxu0 0
      %5126 = vmatmul.mubr.bf16.gmra.mxu0 %v5037
      %v5127 = vpop.f32.mrf.mxu0
      %v5128 = vadd.f32 0.0, %v5127
      %v5129 = vpop.f32.mrf.mxu0
      %v5130 = vpop.f32.mrf.mxu0
      %v5131 = vadd.f32 0.0, %v5130
      %v5132 = vpop.f32.mrf.mxu0
      %5133 = vmatprep.mubr.bf16.mxu0 0
      %5134 = vmatmul.mubr.bf16.gmra.mxu0 %v5038
      %v5135 = vpop.f32.mrf.mxu0
      %v5136 = vadd.f32 0.0, %v5135
      %v5137 = vpop.f32.mrf.mxu0
      %v5138 = vpop.f32.mrf.mxu0
      %v5139 = vadd.f32 0.0, %v5138
      %v5140 = vpop.f32.mrf.mxu0
      %5141 = vmatprep.mubr.bf16.mxu0 0
      %5142 = vmatmul.mubr.bf16.gmra.mxu0 %v5039
      %v5143 = vpop.f32.mrf.mxu0
      %v5144 = vadd.f32 0.0, %v5143
      %v5145 = vpop.f32.mrf.mxu0
      %v5146 = vpop.f32.mrf.mxu0
      %v5147 = vadd.f32 0.0, %v5146
      %v5148 = vpop.f32.mrf.mxu0
      %5149 = vmatprep.mubr.bf16.mxu0 0
      %5150 = vmatmul.mubr.bf16.gmra.mxu0 %v5040
      %v5151 = vpop.f32.mrf.mxu0
      %v5152 = vadd.f32 0.0, %v5151
      %v5153 = vpop.f32.mrf.mxu0
      %v5154 = vpop.f32.mrf.mxu0
      %v5155 = vadd.f32 0.0, %v5154
      %v5156 = vpop.f32.mrf.mxu0
      %5157 = vdwg.mxu0
      %v5158 = vadd.f32 %v4948, %v5128
      %v5159 = vadd.f32 %v4949, %v5131
      %v5160 = vadd.f32 %v4950, %v5136
      %v5161 = vadd.f32 %v4951, %v5139
      %v5162 = vadd.f32 %v4952, %v5144
      %v5163 = vadd.f32 %v4953, %v5147
      %v5164 = vadd.f32 %v4954, %v5152
      %v5165 = vadd.f32 %v4955, %v5155
      %s5166 = scalar_lea.vmem [#allocation3], 16
      %v5167 = vld [vmem:[%s5166] sm:$0xf]
      %v5168 = vld [vmem:[%s5166 + $0x8] sm:$0xf]
      %v5169 = vld [vmem:[%s5166 + $0x10] sm:$0xf]
      %v5170 = vld [vmem:[%s5166 + $0x18] sm:$0xf]
      %v5171 = vld [vmem:[%s5166 + $0x20] sm:$0xf]
      %v5172 = vld [vmem:[%s5166 + $0x28] sm:$0xf]
      %v5173 = vld [vmem:[%s5166 + $0x30] sm:$0xf]
      %v5174 = vld [vmem:[%s5166 + $0x38] sm:$0xf]
      %s5175 = scalar_lea.vmem %s5, 384
      %v5176 = vld [vmem:[%s5175] sm:$0xf]
      %v5177 = vld [vmem:[%s5175 + $0x4] sm:$0xf]
      %v5178 = vld [vmem:[%s5175 + $0x8] sm:$0xf]
      %v5179 = vld [vmem:[%s5175 + $0xc] sm:$0xf]
      %v5180 = vld [vmem:[%s5175 + $0x10] sm:$0xf]
      %v5181 = vld [vmem:[%s5175 + $0x14] sm:$0xf]
      %v5182 = vld [vmem:[%s5175 + $0x18] sm:$0xf]
      %v5183 = vld [vmem:[%s5175 + $0x1c] sm:$0xf]
      %v5184 = vld [vmem:[%s5175 + $0x20] sm:$0xf]
      %v5185 = vld [vmem:[%s5175 + $0x24] sm:$0xf]
      %v5186 = vld [vmem:[%s5175 + $0x28] sm:$0xf]
      %v5187 = vld [vmem:[%s5175 + $0x2c] sm:$0xf]
      %v5188 = vld [vmem:[%s5175 + $0x30] sm:$0xf]
      %v5189 = vld [vmem:[%s5175 + $0x34] sm:$0xf]
      %v5190 = vld [vmem:[%s5175 + $0x38] sm:$0xf]
      %v5191 = vld [vmem:[%s5175 + $0x3c] sm:$0xf]
      %v5200 = vunpack.c.l.b16 %v5167
      %v5201 = vunpack.c.l.b16 %v5168
      %v5202 = vunpack.c.l.b16 %v5169
      %v5203 = vunpack.c.l.b16 %v5170
      %v5204 = vunpack.c.l.b16 %v5171
      %v5205 = vunpack.c.l.b16 %v5172
      %v5206 = vunpack.c.l.b16 %v5173
      %v5207 = vunpack.c.l.b16 %v5174
      %v5208 = vpack.c.b16 %v5201, %v5200
      %v5209 = vpack.c.b16 %v5203, %v5202
      %v5210 = vpack.c.b16 %v5205, %v5204
      %v5211 = vpack.c.b16 %v5207, %v5206
      %v5232 = vunpack.c.l.b16 %v5176
      %v5233 = vunpack.c.l.b16 %v5177
      %v5234 = vunpack.c.l.b16 %v5178
      %v5235 = vunpack.c.l.b16 %v5179
      %v5236 = vunpack.c.l.b16 %v5180
      %v5237 = vunpack.c.l.b16 %v5181
      %v5238 = vunpack.c.l.b16 %v5182
      %v5239 = vunpack.c.l.b16 %v5183
      %v5240 = vunpack.c.l.b16 %v5184
      %v5241 = vunpack.c.l.b16 %v5185
      %v5242 = vunpack.c.l.b16 %v5186
      %v5243 = vunpack.c.l.b16 %v5187
      %v5244 = vunpack.c.l.b16 %v5188
      %v5245 = vunpack.c.l.b16 %v5189
      %v5246 = vunpack.c.l.b16 %v5190
      %v5247 = vunpack.c.l.b16 %v5191
      %v5248 = vpack.c.b16 %v5233, %v5232
      %v5249 = vpack.c.b16 %v5235, %v5234
      %v5250 = vpack.c.b16 %v5237, %v5236
      %v5251 = vpack.c.b16 %v5239, %v5238
      %v5252 = vpack.c.b16 %v5241, %v5240
      %v5253 = vpack.c.b16 %v5243, %v5242
      %v5254 = vpack.c.b16 %v5245, %v5244
      %v5255 = vpack.c.b16 %v5247, %v5246
      %5264 = vmatprep.subr.bf16.mxu0 0
      %5265 = vmatpush1.bf16.msra.mxu0 %v5255
      %5266 = vmatprep.subr.bf16.mxu0 0
      %5267 = vmatpush1.bf16.msra.mxu0 %v5254
      %5268 = vmatprep.subr.bf16.mxu0 0
      %5269 = vmatpush1.bf16.msra.mxu0 %v5253
      %5270 = vmatprep.subr.bf16.mxu0 0
      %5271 = vmatpush1.bf16.msra.mxu0 %v5252
      %5272 = vmatprep.subr.bf16.mxu0 0
      %5273 = vmatpush1.bf16.msra.mxu0 %v5251
      %5274 = vmatprep.subr.bf16.mxu0 0
      %5275 = vmatpush1.bf16.msra.mxu0 %v5250
      %5276 = vmatprep.subr.bf16.mxu0 0
      %5277 = vmatpush1.bf16.msra.mxu0 %v5249
      %5278 = vmatprep.subr.bf16.mxu0 0
      %5279 = vmatpush1.bf16.msra.mxu0 %v5248
      %5280 = vmatprep.subr.bf16.mxu0 0
      %5281 = vmatpush2.bf16.msra.mxu0 0
      %5282 = vmatprep.subr.bf16.mxu0 0
      %5283 = vmatpush2.bf16.msra.mxu0 0
      %5284 = vmatprep.subr.bf16.mxu0 0
      %5285 = vmatpush2.bf16.msra.mxu0 0
      %5286 = vmatprep.subr.bf16.mxu0 0
      %5287 = vmatpush2.bf16.msra.mxu0 0
      %5288 = vmatprep.subr.bf16.mxu0 0
      %5289 = vmatpush2.bf16.msra.mxu0 0
      %5290 = vmatprep.subr.bf16.mxu0 0
      %5291 = vmatpush2.bf16.msra.mxu0 0
      %5292 = vmatprep.subr.bf16.mxu0 0
      %5293 = vmatpush2.bf16.msra.mxu0 0
      %5294 = vmatprep.subr.bf16.mxu0 0
      %5295 = vmatpush2.bf16.msra.mxu0 0
      %5296 = vmatprep.mubr.bf16.mxu0 0
      %5297 = vmatmul.mubr.bf16.gmra.mxu0 %v5208
      %v5298 = vpop.f32.mrf.mxu0
      %v5299 = vadd.f32 0.0, %v5298
      %v5300 = vpop.f32.mrf.mxu0
      %v5301 = vpop.f32.mrf.mxu0
      %v5302 = vadd.f32 0.0, %v5301
      %v5303 = vpop.f32.mrf.mxu0
      %5304 = vmatprep.mubr.bf16.mxu0 0
      %5305 = vmatmul.mubr.bf16.gmra.mxu0 %v5209
      %v5306 = vpop.f32.mrf.mxu0
      %v5307 = vadd.f32 0.0, %v5306
      %v5308 = vpop.f32.mrf.mxu0
      %v5309 = vpop.f32.mrf.mxu0
      %v5310 = vadd.f32 0.0, %v5309
      %v5311 = vpop.f32.mrf.mxu0
      %5312 = vmatprep.mubr.bf16.mxu0 0
      %5313 = vmatmul.mubr.bf16.gmra.mxu0 %v5210
      %v5314 = vpop.f32.mrf.mxu0
      %v5315 = vadd.f32 0.0, %v5314
      %v5316 = vpop.f32.mrf.mxu0
      %v5317 = vpop.f32.mrf.mxu0
      %v5318 = vadd.f32 0.0, %v5317
      %v5319 = vpop.f32.mrf.mxu0
      %5320 = vmatprep.mubr.bf16.mxu0 0
      %5321 = vmatmul.mubr.bf16.gmra.mxu0 %v5211
      %v5322 = vpop.f32.mrf.mxu0
      %v5323 = vadd.f32 0.0, %v5322
      %v5324 = vpop.f32.mrf.mxu0
      %v5325 = vpop.f32.mrf.mxu0
      %v5326 = vadd.f32 0.0, %v5325
      %v5327 = vpop.f32.mrf.mxu0
      %5328 = vdwg.mxu0
      %v5329 = vadd.f32 %v5158, %v5299
      %v5330 = vadd.f32 %v5159, %v5302
      %v5331 = vadd.f32 %v5160, %v5307
      %v5332 = vadd.f32 %v5161, %v5310
      %v5333 = vadd.f32 %v5162, %v5315
      %v5334 = vadd.f32 %v5163, %v5318
      %v5335 = vadd.f32 %v5164, %v5323
      %v5336 = vadd.f32 %v5165, %v5326
      %v5337 = vld [vmem:[%s5166] sm:$0xf]
      %v5338 = vld [vmem:[%s5166 + $0x4] sm:$0x1]
      %v5339 = vld [vmem:[%s5166 + $0x8] sm:$0xf]
      %v5340 = vld [vmem:[%s5166 + $0xc] sm:$0x1]
      %v5341 = vld [vmem:[%s5166 + $0x10] sm:$0xf]
      %v5342 = vld [vmem:[%s5166 + $0x14] sm:$0x1]
      %v5343 = vld [vmem:[%s5166 + $0x18] sm:$0xf]
      %v5344 = vld [vmem:[%s5166 + $0x1c] sm:$0x1]
      %v5345 = vld [vmem:[%s5166 + $0x20] sm:$0xf]
      %v5346 = vld [vmem:[%s5166 + $0x24] sm:$0x1]
      %v5347 = vld [vmem:[%s5166 + $0x28] sm:$0xf]
      %v5348 = vld [vmem:[%s5166 + $0x2c] sm:$0x1]
      %v5349 = vld [vmem:[%s5166 + $0x30] sm:$0xf]
      %v5350 = vld [vmem:[%s5166 + $0x34] sm:$0x1]
      %v5351 = vld [vmem:[%s5166 + $0x38] sm:$0xf]
      %v5352 = vld [vmem:[%s5166 + $0x3c] sm:$0x1]
      %v5354 = vshrl.u32 %v5337, 16
      %v5356 = vrot.slane %v5354, 4
      %v5357 = vshll.u32 %v5337, 16
      %v5359 = vrot.slane %v5357, 5
      %v5360 = vor.u32 %v5356, %v5359
      %v5361 = vrot.slane %v5360, 4
      %v5363 = vshll.u32 %v5338, 16
      %v5365 = vrot.slane %v5363, 5
      %v5366 = vsel %vm538, %v5361, %v5365
      %v5368 = vshrl.u32 %v5339, 16
      %v5370 = vrot.slane %v5368, 4
      %v5371 = vshll.u32 %v5339, 16
      %v5373 = vrot.slane %v5371, 5
      %v5374 = vor.u32 %v5370, %v5373
      %v5375 = vrot.slane %v5374, 4
      %v5377 = vshll.u32 %v5340, 16
      %v5379 = vrot.slane %v5377, 5
      %v5380 = vsel %vm538, %v5375, %v5379
      %v5382 = vshrl.u32 %v5341, 16
      %v5384 = vrot.slane %v5382, 4
      %v5385 = vshll.u32 %v5341, 16
      %v5387 = vrot.slane %v5385, 5
      %v5388 = vor.u32 %v5384, %v5387
      %v5389 = vrot.slane %v5388, 4
      %v5391 = vshll.u32 %v5342, 16
      %v5393 = vrot.slane %v5391, 5
      %v5394 = vsel %vm538, %v5389, %v5393
      %v5396 = vshrl.u32 %v5343, 16
      %v5398 = vrot.slane %v5396, 4
      %v5399 = vshll.u32 %v5343, 16
      %v5401 = vrot.slane %v5399, 5
      %v5402 = vor.u32 %v5398, %v5401
      %v5403 = vrot.slane %v5402, 4
      %v5405 = vshll.u32 %v5344, 16
      %v5407 = vrot.slane %v5405, 5
      %v5408 = vsel %vm538, %v5403, %v5407
      %v5410 = vshrl.u32 %v5345, 16
      %v5412 = vrot.slane %v5410, 4
      %v5413 = vshll.u32 %v5345, 16
      %v5415 = vrot.slane %v5413, 5
      %v5416 = vor.u32 %v5412, %v5415
      %v5417 = vrot.slane %v5416, 4
      %v5419 = vshll.u32 %v5346, 16
      %v5421 = vrot.slane %v5419, 5
      %v5422 = vsel %vm538, %v5417, %v5421
      %v5424 = vshrl.u32 %v5347, 16
      %v5426 = vrot.slane %v5424, 4
      %v5427 = vshll.u32 %v5347, 16
      %v5429 = vrot.slane %v5427, 5
      %v5430 = vor.u32 %v5426, %v5429
      %v5431 = vrot.slane %v5430, 4
      %v5433 = vshll.u32 %v5348, 16
      %v5435 = vrot.slane %v5433, 5
      %v5436 = vsel %vm538, %v5431, %v5435
      %v5438 = vshrl.u32 %v5349, 16
      %v5440 = vrot.slane %v5438, 4
      %v5441 = vshll.u32 %v5349, 16
      %v5443 = vrot.slane %v5441, 5
      %v5444 = vor.u32 %v5440, %v5443
      %v5445 = vrot.slane %v5444, 4
      %v5447 = vshll.u32 %v5350, 16
      %v5449 = vrot.slane %v5447, 5
      %v5450 = vsel %vm538, %v5445, %v5449
      %v5452 = vshrl.u32 %v5351, 16
      %v5454 = vrot.slane %v5452, 4
      %v5455 = vshll.u32 %v5351, 16
      %v5457 = vrot.slane %v5455, 5
      %v5458 = vor.u32 %v5454, %v5457
      %v5459 = vrot.slane %v5458, 4
      %v5461 = vshll.u32 %v5352, 16
      %v5463 = vrot.slane %v5461, 5
      %v5464 = vsel %vm538, %v5459, %v5463
      %s5465 = scalar_lea.vmem %s5, 448
      %v5466 = vld [vmem:[%s5465] sm:$0xf]
      %v5467 = vld [vmem:[%s5465 + $0x4] sm:$0xf]
      %v5468 = vld [vmem:[%s5465 + $0x8] sm:$0xf]
      %v5469 = vld [vmem:[%s5465 + $0xc] sm:$0xf]
      %v5470 = vld [vmem:[%s5465 + $0x10] sm:$0xf]
      %v5471 = vld [vmem:[%s5465 + $0x14] sm:$0xf]
      %v5472 = vld [vmem:[%s5465 + $0x18] sm:$0xf]
      %v5473 = vld [vmem:[%s5465 + $0x1c] sm:$0xf]
      %v5474 = vld [vmem:[%s5465 + $0x20] sm:$0xf]
      %v5475 = vld [vmem:[%s5465 + $0x24] sm:$0xf]
      %v5476 = vld [vmem:[%s5465 + $0x28] sm:$0xf]
      %v5477 = vld [vmem:[%s5465 + $0x2c] sm:$0xf]
      %v5478 = vld [vmem:[%s5465 + $0x30] sm:$0xf]
      %v5479 = vld [vmem:[%s5465 + $0x34] sm:$0xf]
      %v5480 = vld [vmem:[%s5465 + $0x38] sm:$0xf]
      %v5481 = vld [vmem:[%s5465 + $0x3c] sm:$0xf]
      %v5482 = vunpack.c.l.b16 %v5366
      %v5483 = vunpack.c.l.b16 %v5380
      %v5484 = vunpack.c.l.b16 %v5394
      %v5485 = vunpack.c.l.b16 %v5408
      %v5486 = vunpack.c.l.b16 %v5422
      %v5487 = vunpack.c.l.b16 %v5436
      %v5488 = vunpack.c.l.b16 %v5450
      %v5489 = vunpack.c.l.b16 %v5464
      %v5490 = vpack.c.b16 %v5483, %v5482
      %v5491 = vpack.c.b16 %v5485, %v5484
      %v5492 = vpack.c.b16 %v5487, %v5486
      %v5493 = vpack.c.b16 %v5489, %v5488
      %v5514 = vunpack.c.l.b16 %v5466
      %v5515 = vunpack.c.l.b16 %v5467
      %v5516 = vunpack.c.l.b16 %v5468
      %v5517 = vunpack.c.l.b16 %v5469
      %v5518 = vunpack.c.l.b16 %v5470
      %v5519 = vunpack.c.l.b16 %v5471
      %v5520 = vunpack.c.l.b16 %v5472
      %v5521 = vunpack.c.l.b16 %v5473
      %v5522 = vunpack.c.l.b16 %v5474
      %v5523 = vunpack.c.l.b16 %v5475
      %v5524 = vunpack.c.l.b16 %v5476
      %v5525 = vunpack.c.l.b16 %v5477
      %v5526 = vunpack.c.l.b16 %v5478
      %v5527 = vunpack.c.l.b16 %v5479
      %v5528 = vunpack.c.l.b16 %v5480
      %v5529 = vunpack.c.l.b16 %v5481
      %v5530 = vpack.c.b16 %v5515, %v5514
      %v5531 = vpack.c.b16 %v5517, %v5516
      %v5532 = vpack.c.b16 %v5519, %v5518
      %v5533 = vpack.c.b16 %v5521, %v5520
      %v5534 = vpack.c.b16 %v5523, %v5522
      %v5535 = vpack.c.b16 %v5525, %v5524
      %v5536 = vpack.c.b16 %v5527, %v5526
      %v5537 = vpack.c.b16 %v5529, %v5528
      %5546 = vmatprep.subr.bf16.mxu0 0
      %5547 = vmatpush1.bf16.msra.mxu0 %v5537
      %5548 = vmatprep.subr.bf16.mxu0 0
      %5549 = vmatpush1.bf16.msra.mxu0 %v5536
      %5550 = vmatprep.subr.bf16.mxu0 0
      %5551 = vmatpush1.bf16.msra.mxu0 %v5535
      %5552 = vmatprep.subr.bf16.mxu0 0
      %5553 = vmatpush1.bf16.msra.mxu0 %v5534
      %5554 = vmatprep.subr.bf16.mxu0 0
      %5555 = vmatpush1.bf16.msra.mxu0 %v5533
      %5556 = vmatprep.subr.bf16.mxu0 0
      %5557 = vmatpush1.bf16.msra.mxu0 %v5532
      %5558 = vmatprep.subr.bf16.mxu0 0
      %5559 = vmatpush1.bf16.msra.mxu0 %v5531
      %5560 = vmatprep.subr.bf16.mxu0 0
      %5561 = vmatpush1.bf16.msra.mxu0 %v5530
      %5562 = vmatprep.subr.bf16.mxu0 0
      %5563 = vmatpush2.bf16.msra.mxu0 0
      %5564 = vmatprep.subr.bf16.mxu0 0
      %5565 = vmatpush2.bf16.msra.mxu0 0
      %5566 = vmatprep.subr.bf16.mxu0 0
      %5567 = vmatpush2.bf16.msra.mxu0 0
      %5568 = vmatprep.subr.bf16.mxu0 0
      %5569 = vmatpush2.bf16.msra.mxu0 0
      %5570 = vmatprep.subr.bf16.mxu0 0
      %5571 = vmatpush2.bf16.msra.mxu0 0
      %5572 = vmatprep.subr.bf16.mxu0 0
      %5573 = vmatpush2.bf16.msra.mxu0 0
      %5574 = vmatprep.subr.bf16.mxu0 0
      %5575 = vmatpush2.bf16.msra.mxu0 0
      %5576 = vmatprep.subr.bf16.mxu0 0
      %5577 = vmatpush2.bf16.msra.mxu0 0
      %5578 = vmatprep.mubr.bf16.mxu0 0
      %5579 = vmatmul.mubr.bf16.gmra.mxu0 %v5490
      %v5580 = vpop.f32.mrf.mxu0
      %v5581 = vadd.f32 0.0, %v5580
      %v5582 = vpop.f32.mrf.mxu0
      %v5583 = vpop.f32.mrf.mxu0
      %v5584 = vadd.f32 0.0, %v5583
      %v5585 = vpop.f32.mrf.mxu0
      %5586 = vmatprep.mubr.bf16.mxu0 0
      %5587 = vmatmul.mubr.bf16.gmra.mxu0 %v5491
      %v5588 = vpop.f32.mrf.mxu0
      %v5589 = vadd.f32 0.0, %v5588
      %v5590 = vpop.f32.mrf.mxu0
      %v5591 = vpop.f32.mrf.mxu0
      %v5592 = vadd.f32 0.0, %v5591
      %v5593 = vpop.f32.mrf.mxu0
      %5594 = vmatprep.mubr.bf16.mxu0 0
      %5595 = vmatmul.mubr.bf16.gmra.mxu0 %v5492
      %v5596 = vpop.f32.mrf.mxu0
      %v5597 = vadd.f32 0.0, %v5596
      %v5598 = vpop.f32.mrf.mxu0
      %v5599 = vpop.f32.mrf.mxu0
      %v5600 = vadd.f32 0.0, %v5599
      %v5601 = vpop.f32.mrf.mxu0
      %5602 = vmatprep.mubr.bf16.mxu0 0
      %5603 = vmatmul.mubr.bf16.gmra.mxu0 %v5493
      %v5604 = vpop.f32.mrf.mxu0
      %v5605 = vadd.f32 0.0, %v5604
      %v5606 = vpop.f32.mrf.mxu0
      %v5607 = vpop.f32.mrf.mxu0
      %v5608 = vadd.f32 0.0, %v5607
      %v5609 = vpop.f32.mrf.mxu0
      %5610 = vdwg.mxu0
      %v5611 = vadd.f32 %v5329, %v5581
      %v5612 = vadd.f32 %v5330, %v5584
      %v5613 = vadd.f32 %v5331, %v5589
      %v5614 = vadd.f32 %v5332, %v5592
      %v5615 = vadd.f32 %v5333, %v5597
      %v5616 = vadd.f32 %v5334, %v5600
      %v5617 = vadd.f32 %v5335, %v5605
      %v5618 = vadd.f32 %v5336, %v5608
      %v5619 = vld [vmem:[%s5166] sm:$0xe]
      %v5620 = vld [vmem:[%s5166 + $0x8] sm:$0xe]
      %v5621 = vld [vmem:[%s5166 + $0x10] sm:$0xe]
      %v5622 = vld [vmem:[%s5166 + $0x18] sm:$0xe]
      %v5623 = vld [vmem:[%s5166 + $0x20] sm:$0xe]
      %v5624 = vld [vmem:[%s5166 + $0x28] sm:$0xe]
      %v5625 = vld [vmem:[%s5166 + $0x30] sm:$0xe]
      %v5626 = vld [vmem:[%s5166 + $0x38] sm:$0xe]
      %v5643 = vrot.slane %v5619, 5
      %v5644 = vrot.slane %v5643, 4
      %v5645 = vrot.slane %v5338, 5
      %v5646 = vsel %vm2151, %v5644, %v5645
      %v5647 = vrot.slane %v5620, 5
      %v5648 = vrot.slane %v5647, 4
      %v5649 = vrot.slane %v5340, 5
      %v5650 = vsel %vm2151, %v5648, %v5649
      %v5651 = vrot.slane %v5621, 5
      %v5652 = vrot.slane %v5651, 4
      %v5653 = vrot.slane %v5342, 5
      %v5654 = vsel %vm2151, %v5652, %v5653
      %v5655 = vrot.slane %v5622, 5
      %v5656 = vrot.slane %v5655, 4
      %v5657 = vrot.slane %v5344, 5
      %v5658 = vsel %vm2151, %v5656, %v5657
      %v5659 = vrot.slane %v5623, 5
      %v5660 = vrot.slane %v5659, 4
      %v5661 = vrot.slane %v5346, 5
      %v5662 = vsel %vm2151, %v5660, %v5661
      %v5663 = vrot.slane %v5624, 5
      %v5664 = vrot.slane %v5663, 4
      %v5665 = vrot.slane %v5348, 5
      %v5666 = vsel %vm2151, %v5664, %v5665
      %v5667 = vrot.slane %v5625, 5
      %v5668 = vrot.slane %v5667, 4
      %v5669 = vrot.slane %v5350, 5
      %v5670 = vsel %vm2151, %v5668, %v5669
      %v5671 = vrot.slane %v5626, 5
      %v5672 = vrot.slane %v5671, 4
      %v5673 = vrot.slane %v5352, 5
      %v5674 = vsel %vm2151, %v5672, %v5673
      %s5675 = scalar_lea.vmem %s5, 512
      %v5676 = vld [vmem:[%s5675] sm:$0xf]
      %v5677 = vld [vmem:[%s5675 + $0x4] sm:$0xf]
      %v5678 = vld [vmem:[%s5675 + $0x8] sm:$0xf]
      %v5679 = vld [vmem:[%s5675 + $0xc] sm:$0xf]
      %v5680 = vld [vmem:[%s5675 + $0x10] sm:$0xf]
      %v5681 = vld [vmem:[%s5675 + $0x14] sm:$0xf]
      %v5682 = vld [vmem:[%s5675 + $0x18] sm:$0xf]
      %v5683 = vld [vmem:[%s5675 + $0x1c] sm:$0xf]
      %v5684 = vld [vmem:[%s5675 + $0x20] sm:$0xf]
      %v5685 = vld [vmem:[%s5675 + $0x24] sm:$0xf]
      %v5686 = vld [vmem:[%s5675 + $0x28] sm:$0xf]
      %v5687 = vld [vmem:[%s5675 + $0x2c] sm:$0xf]
      %v5688 = vld [vmem:[%s5675 + $0x30] sm:$0xf]
      %v5689 = vld [vmem:[%s5675 + $0x34] sm:$0xf]
      %v5690 = vld [vmem:[%s5675 + $0x38] sm:$0xf]
      %v5691 = vld [vmem:[%s5675 + $0x3c] sm:$0xf]
      %v5692 = vunpack.c.l.b16 %v5646
      %v5693 = vunpack.c.l.b16 %v5650
      %v5694 = vunpack.c.l.b16 %v5654
      %v5695 = vunpack.c.l.b16 %v5658
      %v5696 = vunpack.c.l.b16 %v5662
      %v5697 = vunpack.c.l.b16 %v5666
      %v5698 = vunpack.c.l.b16 %v5670
      %v5699 = vunpack.c.l.b16 %v5674
      %v5700 = vpack.c.b16 %v5693, %v5692
      %v5701 = vpack.c.b16 %v5695, %v5694
      %v5702 = vpack.c.b16 %v5697, %v5696
      %v5703 = vpack.c.b16 %v5699, %v5698
      %v5724 = vunpack.c.l.b16 %v5676
      %v5725 = vunpack.c.l.b16 %v5677
      %v5726 = vunpack.c.l.b16 %v5678
      %v5727 = vunpack.c.l.b16 %v5679
      %v5728 = vunpack.c.l.b16 %v5680
      %v5729 = vunpack.c.l.b16 %v5681
      %v5730 = vunpack.c.l.b16 %v5682
      %v5731 = vunpack.c.l.b16 %v5683
      %v5732 = vunpack.c.l.b16 %v5684
      %v5733 = vunpack.c.l.b16 %v5685
      %v5734 = vunpack.c.l.b16 %v5686
      %v5735 = vunpack.c.l.b16 %v5687
      %v5736 = vunpack.c.l.b16 %v5688
      %v5737 = vunpack.c.l.b16 %v5689
      %v5738 = vunpack.c.l.b16 %v5690
      %v5739 = vunpack.c.l.b16 %v5691
      %v5740 = vpack.c.b16 %v5725, %v5724
      %v5741 = vpack.c.b16 %v5727, %v5726
      %v5742 = vpack.c.b16 %v5729, %v5728
      %v5743 = vpack.c.b16 %v5731, %v5730
      %v5744 = vpack.c.b16 %v5733, %v5732
      %v5745 = vpack.c.b16 %v5735, %v5734
      %v5746 = vpack.c.b16 %v5737, %v5736
      %v5747 = vpack.c.b16 %v5739, %v5738
      %5756 = vmatprep.subr.bf16.mxu0 0
      %5757 = vmatpush1.bf16.msra.mxu0 %v5747
      %5758 = vmatprep.subr.bf16.mxu0 0
      %5759 = vmatpush1.bf16.msra.mxu0 %v5746
      %5760 = vmatprep.subr.bf16.mxu0 0
      %5761 = vmatpush1.bf16.msra.mxu0 %v5745
      %5762 = vmatprep.subr.bf16.mxu0 0
      %5763 = vmatpush1.bf16.msra.mxu0 %v5744
      %5764 = vmatprep.subr.bf16.mxu0 0
      %5765 = vmatpush1.bf16.msra.mxu0 %v5743
      %5766 = vmatprep.subr.bf16.mxu0 0
      %5767 = vmatpush1.bf16.msra.mxu0 %v5742
      %5768 = vmatprep.subr.bf16.mxu0 0
      %5769 = vmatpush1.bf16.msra.mxu0 %v5741
      %5770 = vmatprep.subr.bf16.mxu0 0
      %5771 = vmatpush1.bf16.msra.mxu0 %v5740
      %5772 = vmatprep.subr.bf16.mxu0 0
      %5773 = vmatpush2.bf16.msra.mxu0 0
      %5774 = vmatprep.subr.bf16.mxu0 0
      %5775 = vmatpush2.bf16.msra.mxu0 0
      %5776 = vmatprep.subr.bf16.mxu0 0
      %5777 = vmatpush2.bf16.msra.mxu0 0
      %5778 = vmatprep.subr.bf16.mxu0 0
      %5779 = vmatpush2.bf16.msra.mxu0 0
      %5780 = vmatprep.subr.bf16.mxu0 0
      %5781 = vmatpush2.bf16.msra.mxu0 0
      %5782 = vmatprep.subr.bf16.mxu0 0
      %5783 = vmatpush2.bf16.msra.mxu0 0
      %5784 = vmatprep.subr.bf16.mxu0 0
      %5785 = vmatpush2.bf16.msra.mxu0 0
      %5786 = vmatprep.subr.bf16.mxu0 0
      %5787 = vmatpush2.bf16.msra.mxu0 0
      %5788 = vmatprep.mubr.bf16.mxu0 0
      %5789 = vmatmul.mubr.bf16.gmra.mxu0 %v5700
      %v5790 = vpop.f32.mrf.mxu0
      %v5791 = vadd.f32 0.0, %v5790
      %v5792 = vpop.f32.mrf.mxu0
      %v5793 = vpop.f32.mrf.mxu0
      %v5794 = vadd.f32 0.0, %v5793
      %v5795 = vpop.f32.mrf.mxu0
      %5796 = vmatprep.mubr.bf16.mxu0 0
      %5797 = vmatmul.mubr.bf16.gmra.mxu0 %v5701
      %v5798 = vpop.f32.mrf.mxu0
      %v5799 = vadd.f32 0.0, %v5798
      %v5800 = vpop.f32.mrf.mxu0
      %v5801 = vpop.f32.mrf.mxu0
      %v5802 = vadd.f32 0.0, %v5801
      %v5803 = vpop.f32.mrf.mxu0
      %5804 = vmatprep.mubr.bf16.mxu0 0
      %5805 = vmatmul.mubr.bf16.gmra.mxu0 %v5702
      %v5806 = vpop.f32.mrf.mxu0
      %v5807 = vadd.f32 0.0, %v5806
      %v5808 = vpop.f32.mrf.mxu0
      %v5809 = vpop.f32.mrf.mxu0
      %v5810 = vadd.f32 0.0, %v5809
      %v5811 = vpop.f32.mrf.mxu0
      %5812 = vmatprep.mubr.bf16.mxu0 0
      %5813 = vmatmul.mubr.bf16.gmra.mxu0 %v5703
      %v5814 = vpop.f32.mrf.mxu0
      %v5815 = vadd.f32 0.0, %v5814
      %v5816 = vpop.f32.mrf.mxu0
      %v5817 = vpop.f32.mrf.mxu0
      %v5818 = vadd.f32 0.0, %v5817
      %v5819 = vpop.f32.mrf.mxu0
      %5820 = vdwg.mxu0
      %v5821 = vadd.f32 %v5611, %v5791
      %v5822 = vadd.f32 %v5612, %v5794
      %v5823 = vadd.f32 %v5613, %v5799
      %v5824 = vadd.f32 %v5614, %v5802
      %v5825 = vadd.f32 %v5615, %v5807
      %v5826 = vadd.f32 %v5616, %v5810
      %v5827 = vadd.f32 %v5617, %v5815
      %v5828 = vadd.f32 %v5618, %v5818
      %v5829 = vld [vmem:[%s6] sm:$0x1]
      %v5831 = vlaneseq
      %v5832 = vshrl.u32 %v5831, 7
      %v5833 = vsub.s32 0, %v5832
      %v5834 = vrot.slane %v5829, %v5833
      %v5836 = vadd.f32 %v5821, %v5834
      %v5837 = vadd.f32 %v5822, %v5834
      %v5838 = vadd.f32 %v5823, %v5834
      %v5839 = vadd.f32 %v5824, %v5834
      %v5840 = vadd.f32 %v5825, %v5834
      %v5841 = vadd.f32 %v5826, %v5834
      %v5842 = vadd.f32 %v5827, %v5834
      %v5843 = vadd.f32 %v5828, %v5834
      %v5844 = vadd.f32 %v5836, %v1503
      %v5845 = vadd.f32 %v5837, %v1504
      %v5846 = vadd.f32 %v5838, %v1505
      %v5847 = vadd.f32 %v5839, %v1506
      %v5848 = vadd.f32 %v5840, %v1507
      %v5849 = vadd.f32 %v5841, %v1508
      %v5850 = vadd.f32 %v5842, %v1509
      %v5851 = vadd.f32 %v5843, %v1510
      %v5852 = vmax.f32 %v5844, 0.0
      %v5853 = vmax.f32 %v5845, 0.0
      %v5854 = vmax.f32 %v5846, 0.0
      %v5855 = vmax.f32 %v5847, 0.0
      %v5856 = vmax.f32 %v5848, 0.0
      %v5857 = vmax.f32 %v5849, 0.0
      %v5858 = vmax.f32 %v5850, 0.0
      %v5859 = vmax.f32 %v5851, 0.0
      %5860 = vst [vmem:[%s278] sm:$0xff] %v5852
      %5861 = vst [vmem:[%s278 + $0x8] sm:$0xff] %v5853
      %5862 = vst [vmem:[%s278 + $0x10] sm:$0xff] %v5854
      %5863 = vst [vmem:[%s278 + $0x18] sm:$0xff] %v5855
      %5864 = vst [vmem:[%s278 + $0x20] sm:$0xff] %v5856
      %5865 = vst [vmem:[%s278 + $0x28] sm:$0xff] %v5857
      %5866 = vst [vmem:[%s278 + $0x30] sm:$0xff] %v5858
      %5867 = vst [vmem:[%s278 + $0x38] sm:$0xff] %v5859
      %p5868 = scmp.lt.s32.totalorder %s18, 1
      %s5869 = scalar_select %p5868, %s18, 1
      %s5870 = smul.addr %s5869, 8
      %s5871 = smul.addr %s5870, 8
      %s5872 = scalar_lea.vmem %s7, %s5871
      // Predicated region
      $region49: #{down_forward.1} parent=47 // pred_check
        %p5873 = pneg %p188
      $region50: #{down_forward.1} parent=47 // pred_check_branch
        %5875 = sbr.rel (%p5873) target = $region52
      $region51: #{down_forward.1} parent=47 // pred_region
        _
      $region52: #{down_forward.1} parent=47 // pred_fallthru
        _
    $region48: #{down_forward.1} parent=5 // pred_fallthru
      _
    %p5876 = scmp.le.s32.totalorder 2, %s13
    // Predicated region
    $region53: #{down_forward.1} parent=5 // pred_check
      %p5877 = pneg %p5876
    $region54: #{down_forward.1} parent=5 // pred_check_branch
      %5879 = sbr.rel (%p5877) target = $region56
    $region55: #{down_forward.1} parent=5 // pred_region
      %s5880 = ssub.s32 %s13, 2
      // Predicated region
      $region57: #{down_forward.1} parent=55 // pred_check
        %p5881 = pneg %p194
      $region58: #{down_forward.1} parent=55 // pred_check_branch
        %5883 = sbr.rel (%p5881) target = $region60
      $region59: #{down_forward.1} parent=55 // pred_region
        %p5884 = scmp.lt.s32.totalorder %s19, 1
        %s5885 = scalar_select %p5884, %s19, 1
        %s5886 = smul.addr %s5885, 8
        %s5887 = smul.addr %s5886, 8
        %s5888 = scalar_lea.vmem %s7, %s5887
      $region60: #{down_forward.1} parent=55 // pred_fallthru
        _
    $region56: #{down_forward.1} parent=5 // pred_fallthru
      _
  $region6: #{down_forward.1} parent=0 // loop_footer
    %s17 = sadd.s32 1, %s13
  $region7: #{down_forward.1} parent=0 // loop_footer_branch
    %12 = sbr.rel target = $region3
  $region8: #{down_forward.1} parent=0 // loop_exit
    _

</llo_original>
